<compile_context>
chip_gen: v6e
topology: v6e:2x2x1
jax: 0.10.0
libtpu: 0.0.40
codegen_flags: <defaults>
</compile_context>

<pallas_src>
import functools

import numpy as np
import jax
import jax.numpy as jnp
from jax.experimental import pallas as pl
from jax.experimental.pallas import tpu as pltpu


# ----------------------------- Pallas kernel -------------------------------- #
def itransformer_kernel(
    x_ref,                        # (B*N_tok, L)            bf16
    wemb_ref, bemb_ref,           # (L, D) bf16, (1, D) f32
    wqkv_ref, bqkv_ref,           # (E, D, 3D) bf16, (E, 1, 3D) f32
    wo_ref, bo_ref,               # (E, D, D)  bf16, (E, 1, D)  f32
    w1_ref, b1_ref,               # (E, D, F)  bf16, (E, 1, F)  f32
    w2_ref, b2_ref,               # (E, F, D)  bf16, (E, 1, D)  f32
    ln1w_ref, ln1b_ref,           # (E, 1, D) f32
    ln2w_ref, ln2b_ref,           # (E, 1, D) f32
    lnfw_ref, lnfb_ref,           # (1, D) f32
    wp_ref, bp_ref,               # (D, P) bf16, (1, P) f32
    o_ref,                        # (B*N_tok, P)            f32
    *, n_heads, batch, n_tok, e_layers,
):
    bf16 = jnp.bfloat16
    f32 = jnp.float32
    B, T, H = batch, n_tok, n_heads
    d_model = wo_ref.shape[-1]
    hd = d_model // H

    def layernorm(v, w, b):
        mu = jnp.mean(v, axis=-1, keepdims=True)
        var = jnp.mean((v - mu) ** 2, axis=-1, keepdims=True)
        return (v - mu) * jax.lax.rsqrt(var + 1e-5) * w + b

    # ---- DataEmbedding_inverted: Linear(L -> D) on all B*N_tok tokens ----
    h = (
        jnp.dot(x_ref[...], wemb_ref[...], preferred_element_type=f32)
        + bemb_ref[...]
    )                                                    # (B*T, D) f32

    # ---- Encoder layers (static unroll, weights indexed by static layer) ----
    for l in range(e_layers):
        hb = h.astype(bf16)

        # Fused Q|K|V projection (scale 1/sqrt(hd) folded into the Q block).
        qkv = (
            jnp.dot(hb, wqkv_ref[l], preferred_element_type=f32)
            + bqkv_ref[l]
        )                                                # (B*T, 3D) f32
        qkv3 = qkv.astype(bf16).reshape(B, T, 3 * d_model)

        # Split heads into a merged (H*B) leading batch axis (cheap leading-
        # axis concatenation of lane slices) -> one batched attention.
        q_h = jnp.concatenate(
            [qkv3[:, :, i * hd:(i + 1) * hd] for i in range(H)], axis=0)
        k_h = jnp.concatenate(
            [qkv3[:, :, d_model + i * hd:d_model + (i + 1) * hd]
             for i in range(H)], axis=0)
        v_h = jnp.concatenate(
            [qkv3[:, :, 2 * d_model + i * hd:2 * d_model + (i + 1) * hd]
             for i in range(H)], axis=0)                 # (H*B, T, hd) bf16

        # One score einsum, one softmax, one context einsum for all heads.
        s = jnp.einsum("bqd,bkd->bqk", q_h, k_h, preferred_element_type=f32)
        s = s - jnp.max(s, axis=-1, keepdims=True)
        p = jnp.exp(s)
        p = p * pl.reciprocal(jnp.sum(p, axis=-1, keepdims=True), approx=True)
        ctx = jnp.einsum("bqk,bkd->bqd", p.astype(bf16), v_h,
                         preferred_element_type=f32)     # (H*B, T, hd) f32

        # Reassemble heads along lanes -> (B*T, D), then ONE wo matmul.
        ctx = jnp.concatenate(
            [ctx[i * B:(i + 1) * B] for i in range(H)], axis=-1)  # (B, T, D)
        ctx2 = ctx.reshape(B * T, d_model).astype(bf16)
        attn = (
            jnp.dot(ctx2, wo_ref[l], preferred_element_type=f32)
            + bo_ref[l]
        )

        # EncoderLayer: residual + LN, FFN (conv1d k=1 == Linear), res + LN.
        h1 = layernorm(h + attn, ln1w_ref[l], ln1b_ref[l])
        y = (
            jnp.dot(h1.astype(bf16), w1_ref[l], preferred_element_type=f32)
            + b1_ref[l]
        )
        y = jnp.maximum(y, 0.0)                          # activation = 'relu'
        y = (
            jnp.dot(y.astype(bf16), w2_ref[l], preferred_element_type=f32)
            + b2_ref[l]
        )
        h = layernorm(h1 + y, ln2w_ref[l], ln2b_ref[l])

    # ---- Final LN + projection, stored as a lane-dense 2-D slab ----
    hf = layernorm(h, lnfw_ref[...], lnfb_ref[...])
    out = (
        jnp.dot(hf.astype(bf16), wp_ref[...], preferred_element_type=f32)
        + bp_ref[...]
    )                                                    # (B*T, P)
    o_ref[...] = out.astype(o_ref.dtype)


# ------------------------------- wrapper ------------------------------------ #
def itransformer_forecast(x_enc, x_mark_enc, params, *, pred_len, n_heads, e_layers):
    B, L, N = x_enc.shape
    f32 = jnp.float32
    bf16 = jnp.bfloat16

    # inverted tokens: variate channels then time-mark channels, each length L
    x_inv = jnp.concatenate(
        [jnp.transpose(x_enc, (0, 2, 1)), jnp.transpose(x_mark_enc, (0, 2, 1))],
        axis=1,
    )                                                    # (B, N_tok, L)
    n_tok = x_inv.shape[1]
    x2d = x_inv.reshape(B * n_tok, L).astype(bf16)       # matmul operand only

    d_model = params["wemb"].shape[1]
    d_ff = params["w1"].shape[2]
    head_dim = d_model // n_heads
    scale = 1.0 / np.sqrt(float(head_dim))

    # Big matmul weights in bf16 (f32 accumulation in-kernel); biases / LN f32.
    # Attention scale folded into the Q block of the fused QKV projection.
    wemb = params["wemb"].astype(bf16)
    bemb = params["bemb"].astype(f32)
    wqkv = jnp.concatenate(
        [params["wq"] * scale, params["wk"], params["wv"]], axis=-1
    ).astype(bf16)                                       # (E, D, 3D)
    bqkv = jnp.concatenate(
        [params["bq"] * scale, params["bk"], params["bv"]], axis=-1
    ).astype(f32).reshape(e_layers, 1, 3 * d_model)
    wo = params["wo"].astype(bf16)
    bo = params["bo"].astype(f32).reshape(e_layers, 1, d_model)
    w1 = params["w1"].astype(bf16)
    b1 = params["b1"].astype(f32).reshape(e_layers, 1, d_ff)
    w2 = params["w2"].astype(bf16)
    b2 = params["b2"].astype(f32).reshape(e_layers, 1, d_model)
    ln1w = params["ln1w"].astype(f32).reshape(e_layers, 1, d_model)
    ln1b = params["ln1b"].astype(f32).reshape(e_layers, 1, d_model)
    ln2w = params["ln2w"].astype(f32).reshape(e_layers, 1, d_model)
    ln2b = params["ln2b"].astype(f32).reshape(e_layers, 1, d_model)
    lnfw = params["lnfw"].astype(f32)
    lnfb = params["lnfb"].astype(f32)
    wp = params["wp"].astype(bf16)
    bp = params["bp"].astype(f32)

    kernel = functools.partial(
        itransformer_kernel,
        n_heads=n_heads, batch=B, n_tok=n_tok, e_layers=e_layers,
    )

    # Single grid step: everything (weights + activations) is resident in VMEM
    # for these model sizes, so no per-step pipeline overhead and no masked
    # partial stores.  For large d_model/d_ff (esp. v7x, 64 MiB VMEM) switch to
    # a grid=(e_layers,) with layer-indexed BlockSpecs to stream weights.
    out2d = pl.pallas_call(
        kernel,
        out_shape=jax.ShapeDtypeStruct((B * n_tok, pred_len), f32),
    )(x2d, wemb, bemb, wqkv, bqkv, wo, bo,
      w1, b1, w2, b2, ln1w, ln1b, ln2w, ln2b, lnfw, lnfb, wp, bp)

    # Epilogue glue in JAX: variate-token slice, transpose, + mean over time.
    out3 = out2d.reshape(B, n_tok, pred_len)[:, :N, :]   # (B, N, P)
    dec = jnp.transpose(out3, (0, 2, 1)) + jnp.mean(x_enc, axis=1, keepdims=True)
    return dec                                           # (B, pred_len, N)


# ------------------------- pure-JAX reference (check) ----------------------- #
def reference_forecast(x_enc, x_mark_enc, p, *, pred_len, n_heads, e_layers):
    B, L, N = x_enc.shape
    x_inv = jnp.concatenate(
        [jnp.transpose(x_enc, (0, 2, 1)), jnp.transpose(x_mark_enc, (0, 2, 1))], axis=1
    )
    h = x_inv @ p["wemb"] + p["bemb"]
    d_model = h.shape[-1]
    hd = d_model // n_heads
    scale = 1.0 / np.sqrt(float(hd))

    def ln(v, w, b):
        mu = jnp.mean(v, -1, keepdims=True)
        var = jnp.mean((v - mu) ** 2, -1, keepdims=True)
        return (v - mu) / jnp.sqrt(var + 1e-5) * w + b

    for l in range(e_layers):
        q = h @ p["wq"][l] + p["bq"][l]
        k = h @ p["wk"][l] + p["bk"][l]
        v = h @ p["wv"][l] + p["bv"][l]
        qh = q.reshape(B, -1, n_heads, hd)
        kh = k.reshape(B, -1, n_heads, hd)
        vh = v.reshape(B, -1, n_heads, hd)
        s = jnp.einsum("blhe,bshe->bhls", qh, kh) * scale
        a = jax.nn.softmax(s, axis=-1)
        o = jnp.einsum("bhls,bshd->blhd", a, vh).reshape(B, -1, d_model)
        o = o @ p["wo"][l] + p["bo"][l]
        h = ln(h + o, p["ln1w"][l], p["ln1b"][l])
        y = jnp.maximum(h @ p["w1"][l] + p["b1"][l], 0.0)
        y = y @ p["w2"][l] + p["b2"][l]
        h = ln(h + y, p["ln2w"][l], p["ln2b"][l])
    h = ln(h, p["lnfw"], p["lnfb"])
    enc_proj = h @ p["wp"] + p["bp"]
    dec_out = jnp.transpose(enc_proj, (0, 2, 1))[:, :, :N]
    dec_out = dec_out + jnp.mean(x_enc, axis=1, keepdims=True)
    return dec_out[:, -pred_len:, :]


# --------------------------------- main -------------------------------------- #
if __name__ == "__main__":
    # synthetic config
    B, seq_len, enc_in, mark_dim = 2, 16, 4, 4
    d_model, n_heads, d_ff, e_layers, pred_len = 32, 4, 64, 2, 8

    key = jax.random.PRNGKey(0)
    ks = jax.random.split(key, 32)
    f32 = jnp.float32

    def w(k, shape, s=0.05):
        return (jax.random.normal(k, shape, dtype=f32) * s).astype(f32)

    params = {
        "wemb": w(ks[0], (seq_len, d_model)),
        "bemb": w(ks[1], (1, d_model)),
        "wq": w(ks[2], (e_layers, d_model, d_model)),
        "bq": w(ks[3], (e_layers, d_model)),
        "wk": w(ks[4], (e_layers, d_model, d_model)),
        "bk": w(ks[5], (e_layers, d_model)),
        "wv": w(ks[6], (e_layers, d_model, d_model)),
        "bv": w(ks[7], (e_layers, d_model)),
        "wo": w(ks[8], (e_layers, d_model, d_model)),
        "bo": w(ks[9], (e_layers, d_model)),
        "w1": w(ks[10], (e_layers, d_model, d_ff)),
        "b1": w(ks[11], (e_layers, d_ff)),
        "w2": w(ks[12], (e_layers, d_ff, d_model)),
        "b2": w(ks[13], (e_layers, d_model)),
        # LayerNorm params: torch default init (ones / zeros)
        "ln1w": jnp.ones((e_layers, d_model), f32),
        "ln1b": jnp.zeros((e_layers, d_model), f32),
        "ln2w": jnp.ones((e_layers, d_model), f32),
        "ln2b": jnp.zeros((e_layers, d_model), f32),
        "lnfw": jnp.ones((1, d_model), f32),
        "lnfb": jnp.zeros((1, d_model), f32),
        "wp": w(ks[14], (d_model, pred_len)),
        "bp": w(ks[15], (1, pred_len)),
    }

    x_enc = jax.random.normal(ks[20], (B, seq_len, enc_in), dtype=f32)
    x_mark_enc = jax.random.normal(ks[21], (B, seq_len, mark_dim), dtype=f32)
    # x_dec / x_mark_dec are unused by the forecast path of the reference module.

    out = itransformer_forecast(
        x_enc, x_mark_enc, params,
        pred_len=pred_len, n_heads=n_heads, e_layers=e_layers,
    )
    out = jax.block_until_ready(out)

    ref = reference_forecast(
        x_enc, x_mark_enc, params,
        pred_len=pred_len, n_heads=n_heads, e_layers=e_layers,
    )
    # tolerance accounts for bf16 matmul operands (f32 accumulation) vs the
    # all-f32 reference, plus the approx softmax reciprocal.
    np.testing.assert_allclose(np.asarray(out), np.asarray(ref), rtol=3e-2, atol=3e-2)

    print("KERNEL_OK")
</pallas_src>

<mosaic_0001>
module attributes {stable_mosaic.version = 11 : i64} {
  func.func @itransformer_kernel(%arg0: memref<16x16xbf16, #tpu.memory_space<vmem>>, %arg1: memref<16x32xbf16, #tpu.memory_space<vmem>>, %arg2: memref<1x32xf32, #tpu.memory_space<vmem>>, %arg3: memref<2x32x96xbf16, #tpu.memory_space<vmem>>, %arg4: memref<2x1x96xf32, #tpu.memory_space<vmem>>, %arg5: memref<2x32x32xbf16, #tpu.memory_space<vmem>>, %arg6: memref<2x1x32xf32, #tpu.memory_space<vmem>>, %arg7: memref<2x32x64xbf16, #tpu.memory_space<vmem>>, %arg8: memref<2x1x64xf32, #tpu.memory_space<vmem>>, %arg9: memref<2x64x32xbf16, #tpu.memory_space<vmem>>, %arg10: memref<2x1x32xf32, #tpu.memory_space<vmem>>, %arg11: memref<2x1x32xf32, #tpu.memory_space<vmem>>, %arg12: memref<2x1x32xf32, #tpu.memory_space<vmem>>, %arg13: memref<2x1x32xf32, #tpu.memory_space<vmem>>, %arg14: memref<2x1x32xf32, #tpu.memory_space<vmem>>, %arg15: memref<1x32xf32, #tpu.memory_space<vmem>>, %arg16: memref<1x32xf32, #tpu.memory_space<vmem>>, %arg17: memref<32x8xbf16, #tpu.memory_space<vmem>>, %arg18: memref<1x8xf32, #tpu.memory_space<vmem>>, %arg19: memref<16x8xf32, #tpu.memory_space<vmem>>) attributes {dimension_semantics = [], scalar_prefetch = 0 : i64, scratch_operands = 0 : i64, tpu.core_type = #tpu.core_type<tc>} {
    %c0 = arith.constant 0 : index
    %c0_0 = arith.constant 0 : index
    %0 = vector.load %arg0[%c0, %c0_0] : memref<16x16xbf16, #tpu.memory_space<vmem>>, vector<16x16xbf16>
    %c0_1 = arith.constant 0 : index
    %c0_2 = arith.constant 0 : index
    %1 = vector.load %arg1[%c0_1, %c0_2] : memref<16x32xbf16, #tpu.memory_space<vmem>>, vector<16x32xbf16>
    %cst = arith.constant dense<0.000000e+00> : vector<16x32xf32>
    %2 = tpu.matmul %0, %1, %cst {dimension_numbers = #tpu.dot_dimension_numbers<[1], [0], [0], [1], [0, 0, 1, 1], [], []>} : vector<16x16xbf16>, vector<16x32xbf16>, vector<16x32xf32> -> vector<16x32xf32>
    %c0_3 = arith.constant 0 : index
    %c0_4 = arith.constant 0 : index
    %3 = vector.load %arg2[%c0_3, %c0_4] : memref<1x32xf32, #tpu.memory_space<vmem>>, vector<1x32xf32>
    %4 = vector.broadcast %3 : vector<1x32xf32> to vector<16x32xf32>
    %5 = arith.addf %2, %4 : vector<16x32xf32>
    %6 = arith.truncf %5 : vector<16x32xf32> to vector<16x32xbf16>
    %c0_5 = arith.constant 0 : index
    %c0_6 = arith.constant 0 : index
    %c0_7 = arith.constant 0 : index
    %7 = vector.load %arg3[%c0_5, %c0_6, %c0_7] : memref<2x32x96xbf16, #tpu.memory_space<vmem>>, vector<1x32x96xbf16>
    %8 = vector.shape_cast %7 : vector<1x32x96xbf16> to vector<32x96xbf16>
    %cst_8 = arith.constant dense<0.000000e+00> : vector<16x96xf32>
    %9 = tpu.matmul %6, %8, %cst_8 {dimension_numbers = #tpu.dot_dimension_numbers<[1], [0], [0], [1], [0, 0, 1, 1], [], []>} : vector<16x32xbf16>, vector<32x96xbf16>, vector<16x96xf32> -> vector<16x96xf32>
    %c0_9 = arith.constant 0 : index
    %c0_10 = arith.constant 0 : index
    %c0_11 = arith.constant 0 : index
    %10 = vector.load %arg4[%c0_9, %c0_10, %c0_11] : memref<2x1x96xf32, #tpu.memory_space<vmem>>, vector<1x1x96xf32>
    %11 = vector.shape_cast %10 : vector<1x1x96xf32> to vector<1x96xf32>
    %12 = vector.broadcast %11 : vector<1x96xf32> to vector<16x96xf32>
    %13 = arith.addf %9, %12 : vector<16x96xf32>
    %14 = arith.truncf %13 : vector<16x96xf32> to vector<16x96xbf16>
    %15 = vector.shape_cast %14 : vector<16x96xbf16> to vector<2x8x96xbf16>
    %16 = vector.extract_strided_slice %15 {offsets = [0, 0, 0], sizes = [2, 8, 8], strides = [1, 1, 1]} : vector<2x8x96xbf16> to vector<2x8x8xbf16>
    %17 = vector.extract_strided_slice %15 {offsets = [0, 0, 8], sizes = [2, 8, 8], strides = [1, 1, 1]} : vector<2x8x96xbf16> to vector<2x8x8xbf16>
    %18 = vector.extract_strided_slice %15 {offsets = [0, 0, 16], sizes = [2, 8, 8], strides = [1, 1, 1]} : vector<2x8x96xbf16> to vector<2x8x8xbf16>
    %19 = vector.extract_strided_slice %15 {offsets = [0, 0, 24], sizes = [2, 8, 8], strides = [1, 1, 1]} : vector<2x8x96xbf16> to vector<2x8x8xbf16>
    %20 = tpu.concatenate %16, %17, %18, %19 in 0 : vector<2x8x8xbf16>, vector<2x8x8xbf16>, vector<2x8x8xbf16>, vector<2x8x8xbf16> -> vector<8x8x8xbf16>
    %21 = vector.extract_strided_slice %15 {offsets = [0, 0, 32], sizes = [2, 8, 8], strides = [1, 1, 1]} : vector<2x8x96xbf16> to vector<2x8x8xbf16>
    %22 = vector.extract_strided_slice %15 {offsets = [0, 0, 40], sizes = [2, 8, 8], strides = [1, 1, 1]} : vector<2x8x96xbf16> to vector<2x8x8xbf16>
    %23 = vector.extract_strided_slice %15 {offsets = [0, 0, 48], sizes = [2, 8, 8], strides = [1, 1, 1]} : vector<2x8x96xbf16> to vector<2x8x8xbf16>
    %24 = vector.extract_strided_slice %15 {offsets = [0, 0, 56], sizes = [2, 8, 8], strides = [1, 1, 1]} : vector<2x8x96xbf16> to vector<2x8x8xbf16>
    %25 = tpu.concatenate %21, %22, %23, %24 in 0 : vector<2x8x8xbf16>, vector<2x8x8xbf16>, vector<2x8x8xbf16>, vector<2x8x8xbf16> -> vector<8x8x8xbf16>
    %26 = vector.extract_strided_slice %15 {offsets = [0, 0, 64], sizes = [2, 8, 8], strides = [1, 1, 1]} : vector<2x8x96xbf16> to vector<2x8x8xbf16>
    %27 = vector.extract_strided_slice %15 {offsets = [0, 0, 72], sizes = [2, 8, 8], strides = [1, 1, 1]} : vector<2x8x96xbf16> to vector<2x8x8xbf16>
    %28 = vector.extract_strided_slice %15 {offsets = [0, 0, 80], sizes = [2, 8, 8], strides = [1, 1, 1]} : vector<2x8x96xbf16> to vector<2x8x8xbf16>
    %29 = vector.extract_strided_slice %15 {offsets = [0, 0, 88], sizes = [2, 8, 8], strides = [1, 1, 1]} : vector<2x8x96xbf16> to vector<2x8x8xbf16>
    %30 = tpu.concatenate %26, %27, %28, %29 in 0 : vector<2x8x8xbf16>, vector<2x8x8xbf16>, vector<2x8x8xbf16>, vector<2x8x8xbf16> -> vector<8x8x8xbf16>
    "tpu.trace_start"() <{level = 10 : i32, message = "bqd,bkd->bqk"}> : () -> ()
    %cst_12 = arith.constant dense<0.000000e+00> : vector<8x8x8xf32>
    %31 = tpu.matmul %20, %25, %cst_12 {dimension_numbers = #tpu.dot_dimension_numbers<[2], [2], [1], [1], [0, 0, 0, 1, 1, 1], [0], [0]>} : vector<8x8x8xbf16>, vector<8x8x8xbf16>, vector<8x8x8xf32> -> vector<8x8x8xf32>
    "tpu.trace_stop"() : () -> ()
    %cst_13 = arith.constant dense<0xFF800000> : vector<8x8xf32>
    %32 = vector.multi_reduction <maximumf>, %31, %cst_13 [2] : vector<8x8x8xf32> to vector<8x8xf32>
    %33 = vector.shape_cast %32 : vector<8x8xf32> to vector<8x8x1xf32>
    %34 = vector.broadcast %33 : vector<8x8x1xf32> to vector<8x8x8xf32>
    %35 = arith.subf %31, %34 : vector<8x8x8xf32>
    %36 = math.exp %35 : vector<8x8x8xf32>
    %cst_14 = arith.constant dense<0.000000e+00> : vector<8x8xf32>
    %37 = vector.multi_reduction <add>, %36, %cst_14 [2] : vector<8x8x8xf32> to vector<8x8xf32>
    %38 = vector.shape_cast %37 : vector<8x8xf32> to vector<8x8x1xf32>
    %39 = tpu.reciprocal %38 {approx = true} : vector<8x8x1xf32> -> vector<8x8x1xf32>
    %40 = vector.broadcast %39 : vector<8x8x1xf32> to vector<8x8x8xf32>
    %41 = arith.mulf %36, %40 : vector<8x8x8xf32>
    %42 = arith.truncf %41 : vector<8x8x8xf32> to vector<8x8x8xbf16>
    "tpu.trace_start"() <{level = 10 : i32, message = "bqk,bkd->bqd"}> : () -> ()
    %cst_15 = arith.constant dense<0.000000e+00> : vector<8x8x8xf32>
    %43 = tpu.matmul %42, %30, %cst_15 {dimension_numbers = #tpu.dot_dimension_numbers<[2], [1], [1], [2], [0, 0, 0, 1, 1, 2], [0], [0]>} : vector<8x8x8xbf16>, vector<8x8x8xbf16>, vector<8x8x8xf32> -> vector<8x8x8xf32>
    "tpu.trace_stop"() : () -> ()
    %44 = vector.extract_strided_slice %43 {offsets = [0, 0, 0], sizes = [2, 8, 8], strides = [1, 1, 1]} : vector<8x8x8xf32> to vector<2x8x8xf32>
    %45 = vector.extract_strided_slice %43 {offsets = [2, 0, 0], sizes = [2, 8, 8], strides = [1, 1, 1]} : vector<8x8x8xf32> to vector<2x8x8xf32>
    %46 = vector.extract_strided_slice %43 {offsets = [4, 0, 0], sizes = [2, 8, 8], strides = [1, 1, 1]} : vector<8x8x8xf32> to vector<2x8x8xf32>
    %47 = vector.extract_strided_slice %43 {offsets = [6, 0, 0], sizes = [2, 8, 8], strides = [1, 1, 1]} : vector<8x8x8xf32> to vector<2x8x8xf32>
    %48 = tpu.concatenate %44, %45, %46, %47 in 2 : vector<2x8x8xf32>, vector<2x8x8xf32>, vector<2x8x8xf32>, vector<2x8x8xf32> -> vector<2x8x32xf32>
    %49 = vector.shape_cast %48 : vector<2x8x32xf32> to vector<16x32xf32>
    %50 = arith.truncf %49 : vector<16x32xf32> to vector<16x32xbf16>
    %c0_16 = arith.constant 0 : index
    %c0_17 = arith.constant 0 : index
    %c0_18 = arith.constant 0 : index
    %51 = vector.load %arg5[%c0_16, %c0_17, %c0_18] : memref<2x32x32xbf16, #tpu.memory_space<vmem>>, vector<1x32x32xbf16>
    %52 = vector.shape_cast %51 : vector<1x32x32xbf16> to vector<32x32xbf16>
    %cst_19 = arith.constant dense<0.000000e+00> : vector<16x32xf32>
    %53 = tpu.matmul %50, %52, %cst_19 {dimension_numbers = #tpu.dot_dimension_numbers<[1], [0], [0], [1], [0, 0, 1, 1], [], []>} : vector<16x32xbf16>, vector<32x32xbf16>, vector<16x32xf32> -> vector<16x32xf32>
    %c0_20 = arith.constant 0 : index
    %c0_21 = arith.constant 0 : index
    %c0_22 = arith.constant 0 : index
    %54 = vector.load %arg6[%c0_20, %c0_21, %c0_22] : memref<2x1x32xf32, #tpu.memory_space<vmem>>, vector<1x1x32xf32>
    %55 = vector.shape_cast %54 : vector<1x1x32xf32> to vector<1x32xf32>
    %56 = vector.broadcast %55 : vector<1x32xf32> to vector<16x32xf32>
    %57 = arith.addf %53, %56 : vector<16x32xf32>
    %58 = arith.addf %5, %57 : vector<16x32xf32>
    %c0_23 = arith.constant 0 : index
    %c0_24 = arith.constant 0 : index
    %c0_25 = arith.constant 0 : index
    %59 = vector.load %arg11[%c0_23, %c0_24, %c0_25] : memref<2x1x32xf32, #tpu.memory_space<vmem>>, vector<1x1x32xf32>
    %60 = vector.shape_cast %59 : vector<1x1x32xf32> to vector<1x32xf32>
    %c0_26 = arith.constant 0 : index
    %c0_27 = arith.constant 0 : index
    %c0_28 = arith.constant 0 : index
    %61 = vector.load %arg12[%c0_26, %c0_27, %c0_28] : memref<2x1x32xf32, #tpu.memory_space<vmem>>, vector<1x1x32xf32>
    %62 = vector.shape_cast %61 : vector<1x1x32xf32> to vector<1x32xf32>
    %cst_29 = arith.constant dense<0.000000e+00> : vector<16xf32>
    %63 = vector.multi_reduction <add>, %58, %cst_29 [1] : vector<16x32xf32> to vector<16xf32>
    %64 = vector.shape_cast %63 : vector<16xf32> to vector<16x1xf32>
    %cst_30 = arith.constant 3.200000e+01 : f32
    %65 = vector.broadcast %cst_30 : f32 to vector<16x1xf32>
    %66 = arith.divf %64, %65 : vector<16x1xf32>
    %67 = vector.broadcast %66 : vector<16x1xf32> to vector<16x32xf32>
    %68 = arith.subf %58, %67 : vector<16x32xf32>
    %69 = arith.mulf %68, %68 : vector<16x32xf32>
    %cst_31 = arith.constant dense<0.000000e+00> : vector<16xf32>
    %70 = vector.multi_reduction <add>, %69, %cst_31 [1] : vector<16x32xf32> to vector<16xf32>
    %71 = vector.shape_cast %70 : vector<16xf32> to vector<16x1xf32>
    %cst_32 = arith.constant 3.200000e+01 : f32
    %72 = vector.broadcast %cst_32 : f32 to vector<16x1xf32>
    %73 = arith.divf %71, %72 : vector<16x1xf32>
    %74 = vector.broadcast %66 : vector<16x1xf32> to vector<16x32xf32>
    %75 = arith.subf %58, %74 : vector<16x32xf32>
    %cst_33 = arith.constant 9.99999974E-6 : f32
    %76 = vector.broadcast %cst_33 : f32 to vector<16x1xf32>
    %77 = arith.addf %73, %76 : vector<16x1xf32>
    %78 = math.rsqrt %77 : vector<16x1xf32>
    %79 = vector.broadcast %78 : vector<16x1xf32> to vector<16x32xf32>
    %80 = arith.mulf %75, %79 : vector<16x32xf32>
    %81 = vector.broadcast %60 : vector<1x32xf32> to vector<16x32xf32>
    %82 = arith.mulf %80, %81 : vector<16x32xf32>
    %83 = vector.broadcast %62 : vector<1x32xf32> to vector<16x32xf32>
    %84 = arith.addf %82, %83 : vector<16x32xf32>
    %85 = arith.truncf %84 : vector<16x32xf32> to vector<16x32xbf16>
    %c0_34 = arith.constant 0 : index
    %c0_35 = arith.constant 0 : index
    %c0_36 = arith.constant 0 : index
    %86 = vector.load %arg7[%c0_34, %c0_35, %c0_36] : memref<2x32x64xbf16, #tpu.memory_space<vmem>>, vector<1x32x64xbf16>
    %87 = vector.shape_cast %86 : vector<1x32x64xbf16> to vector<32x64xbf16>
    %cst_37 = arith.constant dense<0.000000e+00> : vector<16x64xf32>
    %88 = tpu.matmul %85, %87, %cst_37 {dimension_numbers = #tpu.dot_dimension_numbers<[1], [0], [0], [1], [0, 0, 1, 1], [], []>} : vector<16x32xbf16>, vector<32x64xbf16>, vector<16x64xf32> -> vector<16x64xf32>
    %c0_38 = arith.constant 0 : index
    %c0_39 = arith.constant 0 : index
    %c0_40 = arith.constant 0 : index
    %89 = vector.load %arg8[%c0_38, %c0_39, %c0_40] : memref<2x1x64xf32, #tpu.memory_space<vmem>>, vector<1x1x64xf32>
    %90 = vector.shape_cast %89 : vector<1x1x64xf32> to vector<1x64xf32>
    %91 = vector.broadcast %90 : vector<1x64xf32> to vector<16x64xf32>
    %92 = arith.addf %88, %91 : vector<16x64xf32>
    %cst_41 = arith.constant 0.000000e+00 : f32
    %93 = vector.broadcast %cst_41 : f32 to vector<16x64xf32>
    %94 = arith.maximumf %92, %93 : vector<16x64xf32>
    %95 = arith.truncf %94 : vector<16x64xf32> to vector<16x64xbf16>
    %c0_42 = arith.constant 0 : index
    %c0_43 = arith.constant 0 : index
    %c0_44 = arith.constant 0 : index
    %96 = vector.load %arg9[%c0_42, %c0_43, %c0_44] : memref<2x64x32xbf16, #tpu.memory_space<vmem>>, vector<1x64x32xbf16>
    %97 = vector.shape_cast %96 : vector<1x64x32xbf16> to vector<64x32xbf16>
    %cst_45 = arith.constant dense<0.000000e+00> : vector<16x32xf32>
    %98 = tpu.matmul %95, %97, %cst_45 {dimension_numbers = #tpu.dot_dimension_numbers<[1], [0], [0], [1], [0, 0, 1, 1], [], []>} : vector<16x64xbf16>, vector<64x32xbf16>, vector<16x32xf32> -> vector<16x32xf32>
    %c0_46 = arith.constant 0 : index
    %c0_47 = arith.constant 0 : index
    %c0_48 = arith.constant 0 : index
    %99 = vector.load %arg10[%c0_46, %c0_47, %c0_48] : memref<2x1x32xf32, #tpu.memory_space<vmem>>, vector<1x1x32xf32>
    %100 = vector.shape_cast %99 : vector<1x1x32xf32> to vector<1x32xf32>
    %101 = vector.broadcast %100 : vector<1x32xf32> to vector<16x32xf32>
    %102 = arith.addf %98, %101 : vector<16x32xf32>
    %103 = arith.addf %84, %102 : vector<16x32xf32>
    %c0_49 = arith.constant 0 : index
    %c0_50 = arith.constant 0 : index
    %c0_51 = arith.constant 0 : index
    %104 = vector.load %arg13[%c0_49, %c0_50, %c0_51] : memref<2x1x32xf32, #tpu.memory_space<vmem>>, vector<1x1x32xf32>
    %105 = vector.shape_cast %104 : vector<1x1x32xf32> to vector<1x32xf32>
    %c0_52 = arith.constant 0 : index
    %c0_53 = arith.constant 0 : index
    %c0_54 = arith.constant 0 : index
    %106 = vector.load %arg14[%c0_52, %c0_53, %c0_54] : memref<2x1x32xf32, #tpu.memory_space<vmem>>, vector<1x1x32xf32>
    %107 = vector.shape_cast %106 : vector<1x1x32xf32> to vector<1x32xf32>
    %cst_55 = arith.constant dense<0.000000e+00> : vector<16xf32>
    %108 = vector.multi_reduction <add>, %103, %cst_55 [1] : vector<16x32xf32> to vector<16xf32>
    %109 = vector.shape_cast %108 : vector<16xf32> to vector<16x1xf32>
    %cst_56 = arith.constant 3.200000e+01 : f32
    %110 = vector.broadcast %cst_56 : f32 to vector<16x1xf32>
    %111 = arith.divf %109, %110 : vector<16x1xf32>
    %112 = vector.broadcast %111 : vector<16x1xf32> to vector<16x32xf32>
    %113 = arith.subf %103, %112 : vector<16x32xf32>
    %114 = arith.mulf %113, %113 : vector<16x32xf32>
    %cst_57 = arith.constant dense<0.000000e+00> : vector<16xf32>
    %115 = vector.multi_reduction <add>, %114, %cst_57 [1] : vector<16x32xf32> to vector<16xf32>
    %116 = vector.shape_cast %115 : vector<16xf32> to vector<16x1xf32>
    %cst_58 = arith.constant 3.200000e+01 : f32
    %117 = vector.broadcast %cst_58 : f32 to vector<16x1xf32>
    %118 = arith.divf %116, %117 : vector<16x1xf32>
    %119 = vector.broadcast %111 : vector<16x1xf32> to vector<16x32xf32>
    %120 = arith.subf %103, %119 : vector<16x32xf32>
    %cst_59 = arith.constant 9.99999974E-6 : f32
    %121 = vector.broadcast %cst_59 : f32 to vector<16x1xf32>
    %122 = arith.addf %118, %121 : vector<16x1xf32>
    %123 = math.rsqrt %122 : vector<16x1xf32>
    %124 = vector.broadcast %123 : vector<16x1xf32> to vector<16x32xf32>
    %125 = arith.mulf %120, %124 : vector<16x32xf32>
    %126 = vector.broadcast %105 : vector<1x32xf32> to vector<16x32xf32>
    %127 = arith.mulf %125, %126 : vector<16x32xf32>
    %128 = vector.broadcast %107 : vector<1x32xf32> to vector<16x32xf32>
    %129 = arith.addf %127, %128 : vector<16x32xf32>
    %130 = arith.truncf %129 : vector<16x32xf32> to vector<16x32xbf16>
    %c1 = arith.constant 1 : index
    %c0_60 = arith.constant 0 : index
    %c0_61 = arith.constant 0 : index
    %131 = vector.load %arg3[%c1, %c0_60, %c0_61] : memref<2x32x96xbf16, #tpu.memory_space<vmem>>, vector<1x32x96xbf16>
    %132 = vector.shape_cast %131 : vector<1x32x96xbf16> to vector<32x96xbf16>
    %cst_62 = arith.constant dense<0.000000e+00> : vector<16x96xf32>
    %133 = tpu.matmul %130, %132, %cst_62 {dimension_numbers = #tpu.dot_dimension_numbers<[1], [0], [0], [1], [0, 0, 1, 1], [], []>} : vector<16x32xbf16>, vector<32x96xbf16>, vector<16x96xf32> -> vector<16x96xf32>
    %c1_63 = arith.constant 1 : index
    %c0_64 = arith.constant 0 : index
    %c0_65 = arith.constant 0 : index
    %134 = vector.load %arg4[%c1_63, %c0_64, %c0_65] : memref<2x1x96xf32, #tpu.memory_space<vmem>>, vector<1x1x96xf32>
    %135 = vector.shape_cast %134 : vector<1x1x96xf32> to vector<1x96xf32>
    %136 = vector.broadcast %135 : vector<1x96xf32> to vector<16x96xf32>
    %137 = arith.addf %133, %136 : vector<16x96xf32>
    %138 = arith.truncf %137 : vector<16x96xf32> to vector<16x96xbf16>
    %139 = vector.shape_cast %138 : vector<16x96xbf16> to vector<2x8x96xbf16>
    %140 = vector.extract_strided_slice %139 {offsets = [0, 0, 0], sizes = [2, 8, 8], strides = [1, 1, 1]} : vector<2x8x96xbf16> to vector<2x8x8xbf16>
    %141 = vector.extract_strided_slice %139 {offsets = [0, 0, 8], sizes = [2, 8, 8], strides = [1, 1, 1]} : vector<2x8x96xbf16> to vector<2x8x8xbf16>
    %142 = vector.extract_strided_slice %139 {offsets = [0, 0, 16], sizes = [2, 8, 8], strides = [1, 1, 1]} : vector<2x8x96xbf16> to vector<2x8x8xbf16>
    %143 = vector.extract_strided_slice %139 {offsets = [0, 0, 24], sizes = [2, 8, 8], strides = [1, 1, 1]} : vector<2x8x96xbf16> to vector<2x8x8xbf16>
    %144 = tpu.concatenate %140, %141, %142, %143 in 0 : vector<2x8x8xbf16>, vector<2x8x8xbf16>, vector<2x8x8xbf16>, vector<2x8x8xbf16> -> vector<8x8x8xbf16>
    %145 = vector.extract_strided_slice %139 {offsets = [0, 0, 32], sizes = [2, 8, 8], strides = [1, 1, 1]} : vector<2x8x96xbf16> to vector<2x8x8xbf16>
    %146 = vector.extract_strided_slice %139 {offsets = [0, 0, 40], sizes = [2, 8, 8], strides = [1, 1, 1]} : vector<2x8x96xbf16> to vector<2x8x8xbf16>
    %147 = vector.extract_strided_slice %139 {offsets = [0, 0, 48], sizes = [2, 8, 8], strides = [1, 1, 1]} : vector<2x8x96xbf16> to vector<2x8x8xbf16>
    %148 = vector.extract_strided_slice %139 {offsets = [0, 0, 56], sizes = [2, 8, 8], strides = [1, 1, 1]} : vector<2x8x96xbf16> to vector<2x8x8xbf16>
    %149 = tpu.concatenate %145, %146, %147, %148 in 0 : vector<2x8x8xbf16>, vector<2x8x8xbf16>, vector<2x8x8xbf16>, vector<2x8x8xbf16> -> vector<8x8x8xbf16>
    %150 = vector.extract_strided_slice %139 {offsets = [0, 0, 64], sizes = [2, 8, 8], strides = [1, 1, 1]} : vector<2x8x96xbf16> to vector<2x8x8xbf16>
    %151 = vector.extract_strided_slice %139 {offsets = [0, 0, 72], sizes = [2, 8, 8], strides = [1, 1, 1]} : vector<2x8x96xbf16> to vector<2x8x8xbf16>
    %152 = vector.extract_strided_slice %139 {offsets = [0, 0, 80], sizes = [2, 8, 8], strides = [1, 1, 1]} : vector<2x8x96xbf16> to vector<2x8x8xbf16>
    %153 = vector.extract_strided_slice %139 {offsets = [0, 0, 88], sizes = [2, 8, 8], strides = [1, 1, 1]} : vector<2x8x96xbf16> to vector<2x8x8xbf16>
    %154 = tpu.concatenate %150, %151, %152, %153 in 0 : vector<2x8x8xbf16>, vector<2x8x8xbf16>, vector<2x8x8xbf16>, vector<2x8x8xbf16> -> vector<8x8x8xbf16>
    "tpu.trace_start"() <{level = 10 : i32, message = "bqd,bkd->bqk"}> : () -> ()
    %cst_66 = arith.constant dense<0.000000e+00> : vector<8x8x8xf32>
    %155 = tpu.matmul %144, %149, %cst_66 {dimension_numbers = #tpu.dot_dimension_numbers<[2], [2], [1], [1], [0, 0, 0, 1, 1, 1], [0], [0]>} : vector<8x8x8xbf16>, vector<8x8x8xbf16>, vector<8x8x8xf32> -> vector<8x8x8xf32>
    "tpu.trace_stop"() : () -> ()
    %cst_67 = arith.constant dense<0xFF800000> : vector<8x8xf32>
    %156 = vector.multi_reduction <maximumf>, %155, %cst_67 [2] : vector<8x8x8xf32> to vector<8x8xf32>
    %157 = vector.shape_cast %156 : vector<8x8xf32> to vector<8x8x1xf32>
    %158 = vector.broadcast %157 : vector<8x8x1xf32> to vector<8x8x8xf32>
    %159 = arith.subf %155, %158 : vector<8x8x8xf32>
    %160 = math.exp %159 : vector<8x8x8xf32>
    %cst_68 = arith.constant dense<0.000000e+00> : vector<8x8xf32>
    %161 = vector.multi_reduction <add>, %160, %cst_68 [2] : vector<8x8x8xf32> to vector<8x8xf32>
    %162 = vector.shape_cast %161 : vector<8x8xf32> to vector<8x8x1xf32>
    %163 = tpu.reciprocal %162 {approx = true} : vector<8x8x1xf32> -> vector<8x8x1xf32>
    %164 = vector.broadcast %163 : vector<8x8x1xf32> to vector<8x8x8xf32>
    %165 = arith.mulf %160, %164 : vector<8x8x8xf32>
    %166 = arith.truncf %165 : vector<8x8x8xf32> to vector<8x8x8xbf16>
    "tpu.trace_start"() <{level = 10 : i32, message = "bqk,bkd->bqd"}> : () -> ()
    %cst_69 = arith.constant dense<0.000000e+00> : vector<8x8x8xf32>
    %167 = tpu.matmul %166, %154, %cst_69 {dimension_numbers = #tpu.dot_dimension_numbers<[2], [1], [1], [2], [0, 0, 0, 1, 1, 2], [0], [0]>} : vector<8x8x8xbf16>, vector<8x8x8xbf16>, vector<8x8x8xf32> -> vector<8x8x8xf32>
    "tpu.trace_stop"() : () -> ()
    %168 = vector.extract_strided_slice %167 {offsets = [0, 0, 0], sizes = [2, 8, 8], strides = [1, 1, 1]} : vector<8x8x8xf32> to vector<2x8x8xf32>
    %169 = vector.extract_strided_slice %167 {offsets = [2, 0, 0], sizes = [2, 8, 8], strides = [1, 1, 1]} : vector<8x8x8xf32> to vector<2x8x8xf32>
    %170 = vector.extract_strided_slice %167 {offsets = [4, 0, 0], sizes = [2, 8, 8], strides = [1, 1, 1]} : vector<8x8x8xf32> to vector<2x8x8xf32>
    %171 = vector.extract_strided_slice %167 {offsets = [6, 0, 0], sizes = [2, 8, 8], strides = [1, 1, 1]} : vector<8x8x8xf32> to vector<2x8x8xf32>
    %172 = tpu.concatenate %168, %169, %170, %171 in 2 : vector<2x8x8xf32>, vector<2x8x8xf32>, vector<2x8x8xf32>, vector<2x8x8xf32> -> vector<2x8x32xf32>
    %173 = vector.shape_cast %172 : vector<2x8x32xf32> to vector<16x32xf32>
    %174 = arith.truncf %173 : vector<16x32xf32> to vector<16x32xbf16>
    %c1_70 = arith.constant 1 : index
    %c0_71 = arith.constant 0 : index
    %c0_72 = arith.constant 0 : index
    %175 = vector.load %arg5[%c1_70, %c0_71, %c0_72] : memref<2x32x32xbf16, #tpu.memory_space<vmem>>, vector<1x32x32xbf16>
    %176 = vector.shape_cast %175 : vector<1x32x32xbf16> to vector<32x32xbf16>
    %cst_73 = arith.constant dense<0.000000e+00> : vector<16x32xf32>
    %177 = tpu.matmul %174, %176, %cst_73 {dimension_numbers = #tpu.dot_dimension_numbers<[1], [0], [0], [1], [0, 0, 1, 1], [], []>} : vector<16x32xbf16>, vector<32x32xbf16>, vector<16x32xf32> -> vector<16x32xf32>
    %c1_74 = arith.constant 1 : index
    %c0_75 = arith.constant 0 : index
    %c0_76 = arith.constant 0 : index
    %178 = vector.load %arg6[%c1_74, %c0_75, %c0_76] : memref<2x1x32xf32, #tpu.memory_space<vmem>>, vector<1x1x32xf32>
    %179 = vector.shape_cast %178 : vector<1x1x32xf32> to vector<1x32xf32>
    %180 = vector.broadcast %179 : vector<1x32xf32> to vector<16x32xf32>
    %181 = arith.addf %177, %180 : vector<16x32xf32>
    %182 = arith.addf %129, %181 : vector<16x32xf32>
    %c1_77 = arith.constant 1 : index
    %c0_78 = arith.constant 0 : index
    %c0_79 = arith.constant 0 : index
    %183 = vector.load %arg11[%c1_77, %c0_78, %c0_79] : memref<2x1x32xf32, #tpu.memory_space<vmem>>, vector<1x1x32xf32>
    %184 = vector.shape_cast %183 : vector<1x1x32xf32> to vector<1x32xf32>
    %c1_80 = arith.constant 1 : index
    %c0_81 = arith.constant 0 : index
    %c0_82 = arith.constant 0 : index
    %185 = vector.load %arg12[%c1_80, %c0_81, %c0_82] : memref<2x1x32xf32, #tpu.memory_space<vmem>>, vector<1x1x32xf32>
    %186 = vector.shape_cast %185 : vector<1x1x32xf32> to vector<1x32xf32>
    %cst_83 = arith.constant dense<0.000000e+00> : vector<16xf32>
    %187 = vector.multi_reduction <add>, %182, %cst_83 [1] : vector<16x32xf32> to vector<16xf32>
    %188 = vector.shape_cast %187 : vector<16xf32> to vector<16x1xf32>
    %cst_84 = arith.constant 3.200000e+01 : f32
    %189 = vector.broadcast %cst_84 : f32 to vector<16x1xf32>
    %190 = arith.divf %188, %189 : vector<16x1xf32>
    %191 = vector.broadcast %190 : vector<16x1xf32> to vector<16x32xf32>
    %192 = arith.subf %182, %191 : vector<16x32xf32>
    %193 = arith.mulf %192, %192 : vector<16x32xf32>
    %cst_85 = arith.constant dense<0.000000e+00> : vector<16xf32>
    %194 = vector.multi_reduction <add>, %193, %cst_85 [1] : vector<16x32xf32> to vector<16xf32>
    %195 = vector.shape_cast %194 : vector<16xf32> to vector<16x1xf32>
    %cst_86 = arith.constant 3.200000e+01 : f32
    %196 = vector.broadcast %cst_86 : f32 to vector<16x1xf32>
    %197 = arith.divf %195, %196 : vector<16x1xf32>
    %198 = vector.broadcast %190 : vector<16x1xf32> to vector<16x32xf32>
    %199 = arith.subf %182, %198 : vector<16x32xf32>
    %cst_87 = arith.constant 9.99999974E-6 : f32
    %200 = vector.broadcast %cst_87 : f32 to vector<16x1xf32>
    %201 = arith.addf %197, %200 : vector<16x1xf32>
    %202 = math.rsqrt %201 : vector<16x1xf32>
    %203 = vector.broadcast %202 : vector<16x1xf32> to vector<16x32xf32>
    %204 = arith.mulf %199, %203 : vector<16x32xf32>
    %205 = vector.broadcast %184 : vector<1x32xf32> to vector<16x32xf32>
    %206 = arith.mulf %204, %205 : vector<16x32xf32>
    %207 = vector.broadcast %186 : vector<1x32xf32> to vector<16x32xf32>
    %208 = arith.addf %206, %207 : vector<16x32xf32>
    %209 = arith.truncf %208 : vector<16x32xf32> to vector<16x32xbf16>
    %c1_88 = arith.constant 1 : index
    %c0_89 = arith.constant 0 : index
    %c0_90 = arith.constant 0 : index
    %210 = vector.load %arg7[%c1_88, %c0_89, %c0_90] : memref<2x32x64xbf16, #tpu.memory_space<vmem>>, vector<1x32x64xbf16>
    %211 = vector.shape_cast %210 : vector<1x32x64xbf16> to vector<32x64xbf16>
    %cst_91 = arith.constant dense<0.000000e+00> : vector<16x64xf32>
    %212 = tpu.matmul %209, %211, %cst_91 {dimension_numbers = #tpu.dot_dimension_numbers<[1], [0], [0], [1], [0, 0, 1, 1], [], []>} : vector<16x32xbf16>, vector<32x64xbf16>, vector<16x64xf32> -> vector<16x64xf32>
    %c1_92 = arith.constant 1 : index
    %c0_93 = arith.constant 0 : index
    %c0_94 = arith.constant 0 : index
    %213 = vector.load %arg8[%c1_92, %c0_93, %c0_94] : memref<2x1x64xf32, #tpu.memory_space<vmem>>, vector<1x1x64xf32>
    %214 = vector.shape_cast %213 : vector<1x1x64xf32> to vector<1x64xf32>
    %215 = vector.broadcast %214 : vector<1x64xf32> to vector<16x64xf32>
    %216 = arith.addf %212, %215 : vector<16x64xf32>
    %cst_95 = arith.constant 0.000000e+00 : f32
    %217 = vector.broadcast %cst_95 : f32 to vector<16x64xf32>
    %218 = arith.maximumf %216, %217 : vector<16x64xf32>
    %219 = arith.truncf %218 : vector<16x64xf32> to vector<16x64xbf16>
    %c1_96 = arith.constant 1 : index
    %c0_97 = arith.constant 0 : index
    %c0_98 = arith.constant 0 : index
    %220 = vector.load %arg9[%c1_96, %c0_97, %c0_98] : memref<2x64x32xbf16, #tpu.memory_space<vmem>>, vector<1x64x32xbf16>
    %221 = vector.shape_cast %220 : vector<1x64x32xbf16> to vector<64x32xbf16>
    %cst_99 = arith.constant dense<0.000000e+00> : vector<16x32xf32>
    %222 = tpu.matmul %219, %221, %cst_99 {dimension_numbers = #tpu.dot_dimension_numbers<[1], [0], [0], [1], [0, 0, 1, 1], [], []>} : vector<16x64xbf16>, vector<64x32xbf16>, vector<16x32xf32> -> vector<16x32xf32>
    %c1_100 = arith.constant 1 : index
    %c0_101 = arith.constant 0 : index
    %c0_102 = arith.constant 0 : index
    %223 = vector.load %arg10[%c1_100, %c0_101, %c0_102] : memref<2x1x32xf32, #tpu.memory_space<vmem>>, vector<1x1x32xf32>
    %224 = vector.shape_cast %223 : vector<1x1x32xf32> to vector<1x32xf32>
    %225 = vector.broadcast %224 : vector<1x32xf32> to vector<16x32xf32>
    %226 = arith.addf %222, %225 : vector<16x32xf32>
    %227 = arith.addf %208, %226 : vector<16x32xf32>
    %c1_103 = arith.constant 1 : index
    %c0_104 = arith.constant 0 : index
    %c0_105 = arith.constant 0 : index
    %228 = vector.load %arg13[%c1_103, %c0_104, %c0_105] : memref<2x1x32xf32, #tpu.memory_space<vmem>>, vector<1x1x32xf32>
    %229 = vector.shape_cast %228 : vector<1x1x32xf32> to vector<1x32xf32>
    %c1_106 = arith.constant 1 : index
    %c0_107 = arith.constant 0 : index
    %c0_108 = arith.constant 0 : index
    %230 = vector.load %arg14[%c1_106, %c0_107, %c0_108] : memref<2x1x32xf32, #tpu.memory_space<vmem>>, vector<1x1x32xf32>
    %231 = vector.shape_cast %230 : vector<1x1x32xf32> to vector<1x32xf32>
    %cst_109 = arith.constant dense<0.000000e+00> : vector<16xf32>
    %232 = vector.multi_reduction <add>, %227, %cst_109 [1] : vector<16x32xf32> to vector<16xf32>
    %233 = vector.shape_cast %232 : vector<16xf32> to vector<16x1xf32>
    %cst_110 = arith.constant 3.200000e+01 : f32
    %234 = vector.broadcast %cst_110 : f32 to vector<16x1xf32>
    %235 = arith.divf %233, %234 : vector<16x1xf32>
    %236 = vector.broadcast %235 : vector<16x1xf32> to vector<16x32xf32>
    %237 = arith.subf %227, %236 : vector<16x32xf32>
    %238 = arith.mulf %237, %237 : vector<16x32xf32>
    %cst_111 = arith.constant dense<0.000000e+00> : vector<16xf32>
    %239 = vector.multi_reduction <add>, %238, %cst_111 [1] : vector<16x32xf32> to vector<16xf32>
    %240 = vector.shape_cast %239 : vector<16xf32> to vector<16x1xf32>
    %cst_112 = arith.constant 3.200000e+01 : f32
    %241 = vector.broadcast %cst_112 : f32 to vector<16x1xf32>
    %242 = arith.divf %240, %241 : vector<16x1xf32>
    %243 = vector.broadcast %235 : vector<16x1xf32> to vector<16x32xf32>
    %244 = arith.subf %227, %243 : vector<16x32xf32>
    %cst_113 = arith.constant 9.99999974E-6 : f32
    %245 = vector.broadcast %cst_113 : f32 to vector<16x1xf32>
    %246 = arith.addf %242, %245 : vector<16x1xf32>
    %247 = math.rsqrt %246 : vector<16x1xf32>
    %248 = vector.broadcast %247 : vector<16x1xf32> to vector<16x32xf32>
    %249 = arith.mulf %244, %248 : vector<16x32xf32>
    %250 = vector.broadcast %229 : vector<1x32xf32> to vector<16x32xf32>
    %251 = arith.mulf %249, %250 : vector<16x32xf32>
    %252 = vector.broadcast %231 : vector<1x32xf32> to vector<16x32xf32>
    %253 = arith.addf %251, %252 : vector<16x32xf32>
    %c0_114 = arith.constant 0 : index
    %c0_115 = arith.constant 0 : index
    %254 = vector.load %arg15[%c0_114, %c0_115] : memref<1x32xf32, #tpu.memory_space<vmem>>, vector<1x32xf32>
    %c0_116 = arith.constant 0 : index
    %c0_117 = arith.constant 0 : index
    %255 = vector.load %arg16[%c0_116, %c0_117] : memref<1x32xf32, #tpu.memory_space<vmem>>, vector<1x32xf32>
    %cst_118 = arith.constant dense<0.000000e+00> : vector<16xf32>
    %256 = vector.multi_reduction <add>, %253, %cst_118 [1] : vector<16x32xf32> to vector<16xf32>
    %257 = vector.shape_cast %256 : vector<16xf32> to vector<16x1xf32>
    %cst_119 = arith.constant 3.200000e+01 : f32
    %258 = vector.broadcast %cst_119 : f32 to vector<16x1xf32>
    %259 = arith.divf %257, %258 : vector<16x1xf32>
    %260 = vector.broadcast %259 : vector<16x1xf32> to vector<16x32xf32>
    %261 = arith.subf %253, %260 : vector<16x32xf32>
    %262 = arith.mulf %261, %261 : vector<16x32xf32>
    %cst_120 = arith.constant dense<0.000000e+00> : vector<16xf32>
    %263 = vector.multi_reduction <add>, %262, %cst_120 [1] : vector<16x32xf32> to vector<16xf32>
    %264 = vector.shape_cast %263 : vector<16xf32> to vector<16x1xf32>
    %cst_121 = arith.constant 3.200000e+01 : f32
    %265 = vector.broadcast %cst_121 : f32 to vector<16x1xf32>
    %266 = arith.divf %264, %265 : vector<16x1xf32>
    %267 = vector.broadcast %259 : vector<16x1xf32> to vector<16x32xf32>
    %268 = arith.subf %253, %267 : vector<16x32xf32>
    %cst_122 = arith.constant 9.99999974E-6 : f32
    %269 = vector.broadcast %cst_122 : f32 to vector<16x1xf32>
    %270 = arith.addf %266, %269 : vector<16x1xf32>
    %271 = math.rsqrt %270 : vector<16x1xf32>
    %272 = vector.broadcast %271 : vector<16x1xf32> to vector<16x32xf32>
    %273 = arith.mulf %268, %272 : vector<16x32xf32>
    %274 = vector.broadcast %254 : vector<1x32xf32> to vector<16x32xf32>
    %275 = arith.mulf %273, %274 : vector<16x32xf32>
    %276 = vector.broadcast %255 : vector<1x32xf32> to vector<16x32xf32>
    %277 = arith.addf %275, %276 : vector<16x32xf32>
    %278 = arith.truncf %277 : vector<16x32xf32> to vector<16x32xbf16>
    %c0_123 = arith.constant 0 : index
    %c0_124 = arith.constant 0 : index
    %279 = vector.load %arg17[%c0_123, %c0_124] : memref<32x8xbf16, #tpu.memory_space<vmem>>, vector<32x8xbf16>
    %cst_125 = arith.constant dense<0.000000e+00> : vector<16x8xf32>
    %280 = tpu.matmul %278, %279, %cst_125 {dimension_numbers = #tpu.dot_dimension_numbers<[1], [0], [0], [1], [0, 0, 1, 1], [], []>} : vector<16x32xbf16>, vector<32x8xbf16>, vector<16x8xf32> -> vector<16x8xf32>
    %c0_126 = arith.constant 0 : index
    %c0_127 = arith.constant 0 : index
    %281 = vector.load %arg18[%c0_126, %c0_127] : memref<1x8xf32, #tpu.memory_space<vmem>>, vector<1x8xf32>
    %282 = vector.broadcast %281 : vector<1x8xf32> to vector<16x8xf32>
    %283 = arith.addf %280, %282 : vector<16x8xf32>
    %c0_128 = arith.constant 0 : index
    %c0_129 = arith.constant 0 : index
    %284 = vector.load %arg19[%c0_128, %c0_129] : memref<16x8xf32, #tpu.memory_space<vmem>>, vector<16x8xf32>
    tpu.vector_store %arg19[%c0_128, %c0_129], %283 {strides = array<i32>} : memref<16x8xf32, #tpu.memory_space<vmem>>, vector<16x8xf32>,
    return
  }
}

</mosaic_0001>

<llo_original>
// kernel: tpu_custom_call.1
$region0: #{tpu_custom_call.1}
  #allocation0 [shape = 'u32[]', space=smem, size = 0x4, offset = 0x4, fixed_abs, tag = 'smem constant byte address 0x4 - core index']
  #allocation1 [shape = 'u32[144,128]{1,0:T(1,128)}', space=vmem, size = 0x12000, scoped, tag = 'internal scratch']
  %s0 = inlined_call_operand.hbm [shape: bf16[16,16], index: 0, kind: input, shape index: {}]
  %s1 = inlined_call_operand.hbm [shape: bf16[16,32], index: 1, kind: input, shape index: {}]
  %s2 = inlined_call_operand.hbm [shape: f32[1,32], index: 2, kind: input, shape index: {}]
  %s3 = inlined_call_operand.vmem [shape: bf16[2,32,96], index: 3, kind: input, shape index: {}]
  %s4 = inlined_call_operand.vmem [shape: f32[2,1,96], index: 4, kind: input, shape index: {}]
  %s5 = inlined_call_operand.vmem [shape: bf16[2,32,32], index: 5, kind: input, shape index: {}]
  %s6 = inlined_call_operand.hbm [shape: f32[2,1,32], index: 6, kind: input, shape index: {}]
  %s7 = inlined_call_operand.vmem [shape: bf16[2,32,64], index: 7, kind: input, shape index: {}]
  %s8 = inlined_call_operand.hbm [shape: f32[2,1,64], index: 8, kind: input, shape index: {}]
  %s9 = inlined_call_operand.vmem [shape: bf16[2,64,32], index: 9, kind: input, shape index: {}]
  %s10 = inlined_call_operand.hbm [shape: f32[2,1,32], index: 10, kind: input, shape index: {}]
  %s11 = inlined_call_operand.vmem [shape: f32[2,1,32], index: 11, kind: input, shape index: {}]
  %s12 = inlined_call_operand.hbm [shape: f32[2,1,32], index: 12, kind: input, shape index: {}]
  %s13 = inlined_call_operand.vmem [shape: f32[2,1,32], index: 13, kind: input, shape index: {}]
  %s14 = inlined_call_operand.vmem [shape: f32[2,1,32], index: 14, kind: input, shape index: {}]
  %s15 = inlined_call_operand.vmem [shape: f32[1,32], index: 15, kind: input, shape index: {}]
  %s16 = inlined_call_operand.vmem [shape: f32[1,32], index: 16, kind: input, shape index: {}]
  %s17 = inlined_call_operand.vmem [shape: bf16[32,8], index: 17, kind: input, shape index: {}]
  %s18 = inlined_call_operand.vmem [shape: f32[1,8], index: 18, kind: input, shape index: {}]
  %s19 = inlined_call_operand.vmem [shape: f32[16,8], index: 19, kind: output, shape index: {}]
  %s20 = sld [smem:[#allocation0]]
  $region114: #{tpu_custom_call.1} parent=0
    _
  %s22 = ssub.s32 1, %s20
  %s23 = scalar_select 0, %s22, %s20
  $region1: #{tpu_custom_call.1} parent=0
    #allocation2 [shape = 'u8[4096]{0}', space=vmem, size = 0x1000, scoped, tag = 'input window, operand 0, single buffered']
    #allocation3 [shape = 's32[1]{0}', space=sflag, size = 0x4, scoped, tag = 'scoped memory for tpu_custom_call.1']
    #allocation4 [shape = 'u8[4096]{0}', space=vmem, size = 0x1000, scoped, tag = 'input window, operand 1, single buffered']
    #allocation5 [shape = 's32[1]{0}', space=sflag, size = 0x4, scoped, tag = 'scoped memory for tpu_custom_call.1']
    #allocation6 [shape = 'u8[512]{0}', space=vmem, size = 0x400, scoped, tag = 'input window, operand 2, single buffered']
    #allocation7 [shape = 'u8[1024]{0}', space=vmem, size = 0x400, scoped, tag = 'input window, operand 6, single buffered']
    #allocation8 [shape = 's32[1]{0}', space=sflag, size = 0x4, scoped, tag = 'scoped memory for tpu_custom_call.1']
    #allocation9 [shape = 'u8[1024]{0}', space=vmem, size = 0x400, scoped, tag = 'input window, operand 8, single buffered']
    #allocation10 [shape = 'u8[1024]{0}', space=vmem, size = 0x400, scoped, tag = 'input window, operand 10, single buffered']
    #allocation11 [shape = 's32[1]{0}', space=sflag, size = 0x4, scoped, tag = 'scoped memory for tpu_custom_call.1']
    #allocation12 [shape = 'u8[1024]{0}', space=vmem, size = 0x400, scoped, tag = 'input window, operand 12, single buffered']
    %24 = vsyncpa [#allocation3], 0
    %25 = vsyncpa [#allocation5], 0
    %26 = vsyncpa [#allocation8], 0
    %27 = vsyncpa [#allocation11], 0
    // Predicated region
    $region2: #{tpu_custom_call.1} parent=1 // pred_check
      _
    $region3: #{tpu_custom_call.1} parent=1 // pred_check_branch
      %29 = sbr.rel (0) target = $region5
    $region4: #{tpu_custom_call.1} parent=1 // pred_region
      %s31 = ssub.s32 128, 128
      %32 = vsyncadd [#allocation3], %s31
      %s33 = sshll.u32 [#allocation2], 4
      %s34 = int_to_ptr.vmem [resolvable:$true] %s33
      %39 = dma.hbm_to_vmem [thread:$0]  %s0, 128, %s34, [#allocation3], 64, 64, 4
    $region5: #{tpu_custom_call.1} parent=1 // pred_fallthru
      _
    // Predicated region
    $region6: #{tpu_custom_call.1} parent=1 // pred_check
      _
    $region7: #{tpu_custom_call.1} parent=1 // pred_check_branch
      %41 = sbr.rel (0) target = $region9
    $region8: #{tpu_custom_call.1} parent=1 // pred_region
      %s43 = ssub.s32 128, 128
      %44 = vsyncadd [#allocation5], %s43
      %s45 = sshll.u32 [#allocation4], 4
      %s46 = int_to_ptr.vmem [resolvable:$true] %s45
      %51 = dma.hbm_to_vmem [thread:$0]  %s1, 128, %s46, [#allocation5], 64, 64, 4
    $region9: #{tpu_custom_call.1} parent=1 // pred_fallthru
      _
    // Predicated region
    $region10: #{tpu_custom_call.1} parent=1 // pred_check
      _
    $region11: #{tpu_custom_call.1} parent=1 // pred_check_branch
      %53 = sbr.rel (0) target = $region13
    $region12: #{tpu_custom_call.1} parent=1 // pred_region
      %s55 = ssub.s32 16, 16
      %56 = vsyncadd [#allocation5], %s55
      %s58 = sshll.u32 [#allocation6], 4
      %s59 = int_to_ptr.vmem [resolvable:$true] %s58
      %61 = dma.hbm_to_vmem [thread:$0]  %s2, 16, %s59, [#allocation5]
    $region13: #{tpu_custom_call.1} parent=1 // pred_fallthru
      _
    // Predicated region
    $region14: #{tpu_custom_call.1} parent=1 // pred_check
      _
    $region15: #{tpu_custom_call.1} parent=1 // pred_check_branch
      %63 = sbr.rel (0) target = $region17
    $region16: #{tpu_custom_call.1} parent=1 // pred_region
      _
    $region17: #{tpu_custom_call.1} parent=1 // pred_fallthru
      _
    // Predicated region
    $region18: #{tpu_custom_call.1} parent=1 // pred_check
      _
    $region19: #{tpu_custom_call.1} parent=1 // pred_check_branch
      %65 = sbr.rel (0) target = $region21
    $region20: #{tpu_custom_call.1} parent=1 // pred_region
      _
    $region21: #{tpu_custom_call.1} parent=1 // pred_fallthru
      _
    // Predicated region
    $region22: #{tpu_custom_call.1} parent=1 // pred_check
      _
    $region23: #{tpu_custom_call.1} parent=1 // pred_check_branch
      %67 = sbr.rel (0) target = $region25
    $region24: #{tpu_custom_call.1} parent=1 // pred_region
      _
    $region25: #{tpu_custom_call.1} parent=1 // pred_fallthru
      _
    // Predicated region
    $region26: #{tpu_custom_call.1} parent=1 // pred_check
      _
    $region27: #{tpu_custom_call.1} parent=1 // pred_check_branch
      %69 = sbr.rel (0) target = $region29
    $region28: #{tpu_custom_call.1} parent=1 // pred_region
      %s71 = ssub.s32 32, 32
      %72 = vsyncadd [#allocation8], %s71
      %s73 = sshll.u32 [#allocation7], 4
      %s74 = int_to_ptr.vmem [resolvable:$true] %s73
      %79 = dma.hbm_to_vmem [thread:$0]  %s6, 32, %s74, [#allocation8], 16, 16, 1
    $region29: #{tpu_custom_call.1} parent=1 // pred_fallthru
      _
    // Predicated region
    $region30: #{tpu_custom_call.1} parent=1 // pred_check
      _
    $region31: #{tpu_custom_call.1} parent=1 // pred_check_branch
      %81 = sbr.rel (0) target = $region33
    $region32: #{tpu_custom_call.1} parent=1 // pred_region
      _
    $region33: #{tpu_custom_call.1} parent=1 // pred_fallthru
      _
    // Predicated region
    $region34: #{tpu_custom_call.1} parent=1 // pred_check
      _
    $region35: #{tpu_custom_call.1} parent=1 // pred_check_branch
      %83 = sbr.rel (0) target = $region37
    $region36: #{tpu_custom_call.1} parent=1 // pred_region
      %s85 = ssub.s32 32, 32
      %86 = vsyncadd [#allocation8], %s85
      %s87 = sshll.u32 [#allocation9], 4
      %s88 = int_to_ptr.vmem [resolvable:$true] %s87
      %93 = dma.hbm_to_vmem [thread:$0]  %s8, 32, %s88, [#allocation8], 16, 16, 1
    $region37: #{tpu_custom_call.1} parent=1 // pred_fallthru
      _
    // Predicated region
    $region38: #{tpu_custom_call.1} parent=1 // pred_check
      _
    $region39: #{tpu_custom_call.1} parent=1 // pred_check_branch
      %95 = sbr.rel (0) target = $region41
    $region40: #{tpu_custom_call.1} parent=1 // pred_region
      _
    $region41: #{tpu_custom_call.1} parent=1 // pred_fallthru
      _
    // Predicated region
    $region42: #{tpu_custom_call.1} parent=1 // pred_check
      _
    $region43: #{tpu_custom_call.1} parent=1 // pred_check_branch
      %97 = sbr.rel (0) target = $region45
    $region44: #{tpu_custom_call.1} parent=1 // pred_region
      %s99 = ssub.s32 32, 32
      %100 = vsyncadd [#allocation11], %s99
      %s101 = sshll.u32 [#allocation10], 4
      %s102 = int_to_ptr.vmem [resolvable:$true] %s101
      %107 = dma.hbm_to_vmem [thread:$0]  %s10, 32, %s102, [#allocation11], 16, 16, 1
    $region45: #{tpu_custom_call.1} parent=1 // pred_fallthru
      _
    // Predicated region
    $region46: #{tpu_custom_call.1} parent=1 // pred_check
      _
    $region47: #{tpu_custom_call.1} parent=1 // pred_check_branch
      %109 = sbr.rel (0) target = $region49
    $region48: #{tpu_custom_call.1} parent=1 // pred_region
      _
    $region49: #{tpu_custom_call.1} parent=1 // pred_fallthru
      _
    // Predicated region
    $region50: #{tpu_custom_call.1} parent=1 // pred_check
      _
    $region51: #{tpu_custom_call.1} parent=1 // pred_check_branch
      %111 = sbr.rel (0) target = $region53
    $region52: #{tpu_custom_call.1} parent=1 // pred_region
      %s113 = ssub.s32 32, 32
      %114 = vsyncadd [#allocation11], %s113
      %s115 = sshll.u32 [#allocation12], 4
      %s116 = int_to_ptr.vmem [resolvable:$true] %s115
      %121 = dma.hbm_to_vmem [thread:$0]  %s12, 32, %s116, [#allocation11], 16, 16, 1
    $region53: #{tpu_custom_call.1} parent=1 // pred_fallthru
      _
    // Predicated region
    $region54: #{tpu_custom_call.1} parent=1 // pred_check
      _
    $region55: #{tpu_custom_call.1} parent=1 // pred_check_branch
      %123 = sbr.rel (0) target = $region57
    $region56: #{tpu_custom_call.1} parent=1 // pred_region
      _
    $region57: #{tpu_custom_call.1} parent=1 // pred_fallthru
      _
    // Predicated region
    $region58: #{tpu_custom_call.1} parent=1 // pred_check
      _
    $region59: #{tpu_custom_call.1} parent=1 // pred_check_branch
      %125 = sbr.rel (0) target = $region61
    $region60: #{tpu_custom_call.1} parent=1 // pred_region
      _
    $region61: #{tpu_custom_call.1} parent=1 // pred_fallthru
      _
    // Predicated region
    $region62: #{tpu_custom_call.1} parent=1 // pred_check
      _
    $region63: #{tpu_custom_call.1} parent=1 // pred_check_branch
      %127 = sbr.rel (0) target = $region65
    $region64: #{tpu_custom_call.1} parent=1 // pred_region
      _
    $region65: #{tpu_custom_call.1} parent=1 // pred_fallthru
      _
    // Predicated region
    $region66: #{tpu_custom_call.1} parent=1 // pred_check
      _
    $region67: #{tpu_custom_call.1} parent=1 // pred_check_branch
      %129 = sbr.rel (0) target = $region69
    $region68: #{tpu_custom_call.1} parent=1 // pred_region
      _
    $region69: #{tpu_custom_call.1} parent=1 // pred_fallthru
      _
    // Predicated region
    $region70: #{tpu_custom_call.1} parent=1 // pred_check
      _
    $region71: #{tpu_custom_call.1} parent=1 // pred_check_branch
      %131 = sbr.rel (0) target = $region73
    $region72: #{tpu_custom_call.1} parent=1 // pred_region
      _
    $region73: #{tpu_custom_call.1} parent=1 // pred_fallthru
      _
    // Predicated region
    $region74: #{tpu_custom_call.1} parent=1 // pred_check
      _
    $region75: #{tpu_custom_call.1} parent=1 // pred_check_branch
      %133 = sbr.rel (0) target = $region77
    $region76: #{tpu_custom_call.1} parent=1 // pred_region
      _
    $region77: #{tpu_custom_call.1} parent=1 // pred_fallthru
      _
    // Predicated region
    $region78: #{tpu_custom_call.1} parent=1 // pred_check
      _
    $region79: #{tpu_custom_call.1} parent=1 // pred_check_branch
      %135 = sbr.rel (0) target = $region81
    $region80: #{tpu_custom_call.1} parent=1 // pred_region
      %136 = dma.done [#allocation3], 128
    $region81: #{tpu_custom_call.1} parent=1 // pred_fallthru
      _
    // Predicated region
    $region82: #{tpu_custom_call.1} parent=1 // pred_check
      _
    $region83: #{tpu_custom_call.1} parent=1 // pred_check_branch
      %138 = sbr.rel (0) target = $region85
    $region84: #{tpu_custom_call.1} parent=1 // pred_region
      %139 = dma.done [#allocation5], 128
    $region85: #{tpu_custom_call.1} parent=1 // pred_fallthru
      _
    // Predicated region
    $region86: #{tpu_custom_call.1} parent=1 // pred_check
      _
    $region87: #{tpu_custom_call.1} parent=1 // pred_check_branch
      %141 = sbr.rel (0) target = $region89
    $region88: #{tpu_custom_call.1} parent=1 // pred_region
      %142 = dma.done [#allocation5], 16
    $region89: #{tpu_custom_call.1} parent=1 // pred_fallthru
      _
    // Predicated region
    $region90: #{tpu_custom_call.1} parent=1 // pred_check
      _
    $region91: #{tpu_custom_call.1} parent=1 // pred_check_branch
      %144 = sbr.rel (0) target = $region93
    $region92: #{tpu_custom_call.1} parent=1 // pred_region
      %145 = dma.done [#allocation8], 32
    $region93: #{tpu_custom_call.1} parent=1 // pred_fallthru
      _
    // Predicated region
    $region94: #{tpu_custom_call.1} parent=1 // pred_check
      _
    $region95: #{tpu_custom_call.1} parent=1 // pred_check_branch
      %147 = sbr.rel (0) target = $region97
    $region96: #{tpu_custom_call.1} parent=1 // pred_region
      %148 = dma.done [#allocation8], 32
    $region97: #{tpu_custom_call.1} parent=1 // pred_fallthru
      _
    // Predicated region
    $region98: #{tpu_custom_call.1} parent=1 // pred_check
      _
    $region99: #{tpu_custom_call.1} parent=1 // pred_check_branch
      %150 = sbr.rel (0) target = $region101
    $region100: #{tpu_custom_call.1} parent=1 // pred_region
      %151 = dma.done [#allocation11], 32
    $region101: #{tpu_custom_call.1} parent=1 // pred_fallthru
      _
    // Predicated region
    $region102: #{tpu_custom_call.1} parent=1 // pred_check
      _
    $region103: #{tpu_custom_call.1} parent=1 // pred_check_branch
      %153 = sbr.rel (0) target = $region105
    $region104: #{tpu_custom_call.1} parent=1 // pred_region
      %154 = dma.done [#allocation11], 32
    $region105: #{tpu_custom_call.1} parent=1 // pred_fallthru
      _
    %v156 = vld [vmem:[#allocation2] sm:$0xf]
    %v157 = vld [vmem:[#allocation2 + $0x4] sm:$0xf]
    %v158 = vld [vmem:[#allocation4] sm:$0xf]
    %v159 = vld [vmem:[#allocation4 + $0x4] sm:$0xf]
    %v160 = vld [vmem:[#allocation6] sm:$0x1]
    %v162 = vlaneseq
    %v163 = vshrl.u32 %v162, 7
    %v164 = vsub.s32 0, %v163
    %v165 = vrot.slane %v160, %v164
    %v169 = vunpack.c.l.b16 %v156
    %v170 = vunpack.c.l.b16 %v157
    %v171 = vpack.c.b16 %v170, %v169
    %v174 = vunpack.c.l.b16 %v158
    %v175 = vunpack.c.l.b16 %v159
    %v176 = vpack.c.b16 %v175, %v174
    %vm178 = vcmask 130048
    %v180 = vsel %vm178, %v171, 0
    %182 = vmatprep.subr.bf16.mxu0 0
    %183 = vmatpush1.bf16.msra.mxu0 0
    %184 = vmatprep.subr.bf16.mxu0 0
    %185 = vmatpush1.bf16.msra.mxu0 0
    %186 = vmatprep.subr.bf16.mxu0 0
    %187 = vmatpush1.bf16.msra.mxu0 0
    %188 = vmatprep.subr.bf16.mxu0 0
    %189 = vmatpush1.bf16.msra.mxu0 0
    %190 = vmatprep.subr.bf16.mxu0 0
    %191 = vmatpush1.bf16.msra.mxu0 0
    %192 = vmatprep.subr.bf16.mxu0 0
    %193 = vmatpush1.bf16.msra.mxu0 0
    %194 = vmatprep.subr.bf16.mxu0 0
    %195 = vmatpush1.bf16.msra.mxu0 0
    %196 = vmatprep.subr.bf16.mxu0 0
    %197 = vmatpush1.bf16.msra.mxu0 %v176
    %198 = vmatprep.subr.bf16.mxu0 0
    %199 = vmatpush2.bf16.msra.mxu0 0
    %200 = vmatprep.subr.bf16.mxu0 0
    %201 = vmatpush2.bf16.msra.mxu0 0
    %202 = vmatprep.subr.bf16.mxu0 0
    %203 = vmatpush2.bf16.msra.mxu0 0
    %204 = vmatprep.subr.bf16.mxu0 0
    %205 = vmatpush2.bf16.msra.mxu0 0
    %206 = vmatprep.subr.bf16.mxu0 0
    %207 = vmatpush2.bf16.msra.mxu0 0
    %208 = vmatprep.subr.bf16.mxu0 0
    %209 = vmatpush2.bf16.msra.mxu0 0
    %210 = vmatprep.subr.bf16.mxu0 0
    %211 = vmatpush2.bf16.msra.mxu0 0
    %212 = vmatprep.subr.bf16.mxu0 0
    %213 = vmatpush2.bf16.msra.mxu0 0
    %214 = vmatprep.mubr.bf16.mxu0 0
    %215 = vmatmul.mubr.bf16.gmra.mxu0 %v180
    %v216 = vpop.f32.mrf.mxu0
    %v217 = vadd.f32 %v165, %v216
    %v218 = vpop.f32.mrf.mxu0
    %v219 = vpop.f32.mrf.mxu0
    %v220 = vadd.f32 %v165, %v219
    %v221 = vpop.f32.mrf.mxu0
    %222 = vdwg.mxu0
    %v223 = vpack.c.bf16 %v220, %v217
    %v224 = vld [vmem:[%s3] sm:$0xf]
    %v225 = vld [vmem:[%s3 + $0x4] sm:$0xf]
    %v226 = vld [vmem:[%s3 + $0x8] sm:$0xf]
    %v227 = vld [vmem:[%s3 + $0xc] sm:$0xf]
    %v228 = vld [vmem:[%s4] sm:$0x1]
    %v230 = vlaneseq
    %v231 = vshrl.u32 %v230, 7
    %v232 = vsub.s32 0, %v231
    %v233 = vrot.slane %v228, %v232
    %v239 = vunpack.c.l.b16 %v224
    %v240 = vunpack.c.l.b16 %v225
    %v241 = vunpack.c.l.b16 %v226
    %v242 = vunpack.c.l.b16 %v227
    %v243 = vpack.c.b16 %v240, %v239
    %v244 = vpack.c.b16 %v242, %v241
    %vm247 = vcmask 261120
    %v249 = vsel %vm247, %v223, 0
    %251 = vmatprep.subr.bf16.mxu0 0
    %252 = vmatpush1.bf16.msra.mxu0 0
    %253 = vmatprep.subr.bf16.mxu0 0
    %254 = vmatpush1.bf16.msra.mxu0 0
    %255 = vmatprep.subr.bf16.mxu0 0
    %256 = vmatpush1.bf16.msra.mxu0 0
    %257 = vmatprep.subr.bf16.mxu0 0
    %258 = vmatpush1.bf16.msra.mxu0 0
    %259 = vmatprep.subr.bf16.mxu0 0
    %260 = vmatpush1.bf16.msra.mxu0 0
    %261 = vmatprep.subr.bf16.mxu0 0
    %262 = vmatpush1.bf16.msra.mxu0 0
    %263 = vmatprep.subr.bf16.mxu0 0
    %264 = vmatpush1.bf16.msra.mxu0 %v244
    %265 = vmatprep.subr.bf16.mxu0 0
    %266 = vmatpush1.bf16.msra.mxu0 %v243
    %267 = vmatprep.subr.bf16.mxu0 0
    %268 = vmatpush2.bf16.msra.mxu0 0
    %269 = vmatprep.subr.bf16.mxu0 0
    %270 = vmatpush2.bf16.msra.mxu0 0
    %271 = vmatprep.subr.bf16.mxu0 0
    %272 = vmatpush2.bf16.msra.mxu0 0
    %273 = vmatprep.subr.bf16.mxu0 0
    %274 = vmatpush2.bf16.msra.mxu0 0
    %275 = vmatprep.subr.bf16.mxu0 0
    %276 = vmatpush2.bf16.msra.mxu0 0
    %277 = vmatprep.subr.bf16.mxu0 0
    %278 = vmatpush2.bf16.msra.mxu0 0
    %279 = vmatprep.subr.bf16.mxu0 0
    %280 = vmatpush2.bf16.msra.mxu0 0
    %281 = vmatprep.subr.bf16.mxu0 0
    %282 = vmatpush2.bf16.msra.mxu0 0
    %283 = vmatprep.mubr.bf16.mxu0 0
    %284 = vmatmul.mubr.bf16.gmra.mxu0 %v249
    %v285 = vpop.f32.mrf.mxu0
    %v286 = vadd.f32 %v233, %v285
    %v287 = vpop.f32.mrf.mxu0
    %v288 = vpop.f32.mrf.mxu0
    %v289 = vadd.f32 %v233, %v288
    %v290 = vpop.f32.mrf.mxu0
    %291 = vdwg.mxu0
    %v292 = vpack.c.bf16 %v289, %v286
    %v294 = vunpack.c.l.b16 %v292
    %v295 = vunpack.c.h.b16 %v292
    %v296 = vpack.c.b16 %v294, %v294
    %v297 = vpack.c.b16 %v295, %v295
    %298 = vrot.lane.b32.xlu0 %v296, 120
    %v299 = vpop.permute.xlu0 %298
    %300 = vrot.lane.b32.xlu0 %v297, 120
    %v301 = vpop.permute.xlu0 %300
    %302 = vrot.lane.b32.xlu0 %v296, 112
    %v303 = vpop.permute.xlu0 %302
    %304 = vrot.lane.b32.xlu0 %v297, 112
    %v305 = vpop.permute.xlu0 %304
    %306 = vrot.lane.b32.xlu0 %v296, 104
    %v307 = vpop.permute.xlu0 %306
    %308 = vrot.lane.b32.xlu0 %v297, 104
    %v309 = vpop.permute.xlu0 %308
    %310 = vrot.lane.b32.xlu0 %v296, 96
    %v311 = vpop.permute.xlu0 %310
    %vm312 = vcmask 64512
    %v314 = vsel %vm312, %v296, 0
    %v317 = vsel %vm312, %v311, 0
    %319 = vmatprep.subr.bf16.mxu0 0
    %320 = vmatpush1.bf16.xpose.msra.mxu0 0
    %321 = vmatprep.subr.bf16.mxu0 0
    %322 = vmatpush1.bf16.xpose.msra.mxu0 0
    %323 = vmatprep.subr.bf16.mxu0 0
    %324 = vmatpush1.bf16.xpose.msra.mxu0 0
    %325 = vmatprep.subr.bf16.mxu0 0
    %326 = vmatpush1.bf16.xpose.msra.mxu0 0
    %327 = vmatprep.subr.bf16.mxu0 0
    %328 = vmatpush1.bf16.xpose.msra.mxu0 0
    %329 = vmatprep.subr.bf16.mxu0 0
    %330 = vmatpush1.bf16.xpose.msra.mxu0 0
    %331 = vmatprep.subr.bf16.mxu0 0
    %332 = vmatpush1.bf16.xpose.msra.mxu0 0
    %333 = vmatprep.subr.bf16.mxu0 0
    %334 = vmatpush1.bf16.xpose.msra.mxu0 %v317
    %335 = vmatprep.subr.bf16.mxu0 0
    %336 = vmatpush2.bf16.xpose.msra.mxu0 0
    %337 = vmatprep.subr.bf16.mxu0 0
    %338 = vmatpush2.bf16.xpose.msra.mxu0 0
    %339 = vmatprep.subr.bf16.mxu0 0
    %340 = vmatpush2.bf16.xpose.msra.mxu0 0
    %341 = vmatprep.subr.bf16.mxu0 0
    %342 = vmatpush2.bf16.xpose.msra.mxu0 0
    %343 = vmatprep.subr.bf16.mxu0 0
    %344 = vmatpush2.bf16.xpose.msra.mxu0 0
    %345 = vmatprep.subr.bf16.mxu0 0
    %346 = vmatpush2.bf16.xpose.msra.mxu0 0
    %347 = vmatprep.subr.bf16.mxu0 0
    %348 = vmatpush2.bf16.xpose.msra.mxu0 0
    %349 = vmatprep.subr.bf16.mxu0 0
    %350 = vmatpush2.bf16.xpose.msra.mxu0 0
    %351 = vmatprep.mubr.bf16.mxu0 0
    %352 = vmatmul.mubr.bf16.gmra.mxu0 %v314
    %v353 = vpop.f32.mrf.mxu0
    %v354 = vadd.f32 0.0, %v353
    %v355 = vpop.f32.mrf.mxu0
    %v356 = vpop.f32.mrf.mxu0
    %v357 = vpop.f32.mrf.mxu0
    %358 = vdwg.mxu0
    %359 = vrot.lane.b32.xlu0 %v297, 96
    %v360 = vpop.permute.xlu0 %359
    %v362 = vsel %vm312, %v297, 0
    %v365 = vsel %vm312, %v360, 0
    %367 = vmatprep.subr.bf16.mxu0 0
    %368 = vmatpush1.bf16.xpose.msra.mxu0 0
    %369 = vmatprep.subr.bf16.mxu0 0
    %370 = vmatpush1.bf16.xpose.msra.mxu0 0
    %371 = vmatprep.subr.bf16.mxu0 0
    %372 = vmatpush1.bf16.xpose.msra.mxu0 0
    %373 = vmatprep.subr.bf16.mxu0 0
    %374 = vmatpush1.bf16.xpose.msra.mxu0 0
    %375 = vmatprep.subr.bf16.mxu0 0
    %376 = vmatpush1.bf16.xpose.msra.mxu0 0
    %377 = vmatprep.subr.bf16.mxu0 0
    %378 = vmatpush1.bf16.xpose.msra.mxu0 0
    %379 = vmatprep.subr.bf16.mxu0 0
    %380 = vmatpush1.bf16.xpose.msra.mxu0 0
    %381 = vmatprep.subr.bf16.mxu0 0
    %382 = vmatpush1.bf16.xpose.msra.mxu0 %v365
    %383 = vmatprep.subr.bf16.mxu0 0
    %384 = vmatpush2.bf16.xpose.msra.mxu0 0
    %385 = vmatprep.subr.bf16.mxu0 0
    %386 = vmatpush2.bf16.xpose.msra.mxu0 0
    %387 = vmatprep.subr.bf16.mxu0 0
    %388 = vmatpush2.bf16.xpose.msra.mxu0 0
    %389 = vmatprep.subr.bf16.mxu0 0
    %390 = vmatpush2.bf16.xpose.msra.mxu0 0
    %391 = vmatprep.subr.bf16.mxu0 0
    %392 = vmatpush2.bf16.xpose.msra.mxu0 0
    %393 = vmatprep.subr.bf16.mxu0 0
    %394 = vmatpush2.bf16.xpose.msra.mxu0 0
    %395 = vmatprep.subr.bf16.mxu0 0
    %396 = vmatpush2.bf16.xpose.msra.mxu0 0
    %397 = vmatprep.subr.bf16.mxu0 0
    %398 = vmatpush2.bf16.xpose.msra.mxu0 0
    %399 = vmatprep.mubr.bf16.mxu0 0
    %400 = vmatmul.mubr.bf16.gmra.mxu0 %v362
    %v401 = vpop.f32.mrf.mxu0
    %v402 = vadd.f32 0.0, %v401
    %v403 = vpop.f32.mrf.mxu0
    %v404 = vpop.f32.mrf.mxu0
    %v405 = vpop.f32.mrf.mxu0
    %406 = vdwg.mxu0
    %v407 = vunpack.c.l.b16 %v299
    %v408 = vpack.c.b16 %v407, %v407
    %409 = vrot.lane.b32.xlu0 %v408, 96
    %v410 = vpop.permute.xlu0 %409
    %v412 = vsel %vm312, %v299, 0
    %v415 = vsel %vm312, %v410, 0
    %417 = vmatprep.subr.bf16.mxu0 0
    %418 = vmatpush1.bf16.xpose.msra.mxu0 0
    %419 = vmatprep.subr.bf16.mxu0 0
    %420 = vmatpush1.bf16.xpose.msra.mxu0 0
    %421 = vmatprep.subr.bf16.mxu0 0
    %422 = vmatpush1.bf16.xpose.msra.mxu0 0
    %423 = vmatprep.subr.bf16.mxu0 0
    %424 = vmatpush1.bf16.xpose.msra.mxu0 0
    %425 = vmatprep.subr.bf16.mxu0 0
    %426 = vmatpush1.bf16.xpose.msra.mxu0 0
    %427 = vmatprep.subr.bf16.mxu0 0
    %428 = vmatpush1.bf16.xpose.msra.mxu0 0
    %429 = vmatprep.subr.bf16.mxu0 0
    %430 = vmatpush1.bf16.xpose.msra.mxu0 0
    %431 = vmatprep.subr.bf16.mxu0 0
    %432 = vmatpush1.bf16.xpose.msra.mxu0 %v415
    %433 = vmatprep.subr.bf16.mxu0 0
    %434 = vmatpush2.bf16.xpose.msra.mxu0 0
    %435 = vmatprep.subr.bf16.mxu0 0
    %436 = vmatpush2.bf16.xpose.msra.mxu0 0
    %437 = vmatprep.subr.bf16.mxu0 0
    %438 = vmatpush2.bf16.xpose.msra.mxu0 0
    %439 = vmatprep.subr.bf16.mxu0 0
    %440 = vmatpush2.bf16.xpose.msra.mxu0 0
    %441 = vmatprep.subr.bf16.mxu0 0
    %442 = vmatpush2.bf16.xpose.msra.mxu0 0
    %443 = vmatprep.subr.bf16.mxu0 0
    %444 = vmatpush2.bf16.xpose.msra.mxu0 0
    %445 = vmatprep.subr.bf16.mxu0 0
    %446 = vmatpush2.bf16.xpose.msra.mxu0 0
    %447 = vmatprep.subr.bf16.mxu0 0
    %448 = vmatpush2.bf16.xpose.msra.mxu0 0
    %449 = vmatprep.mubr.bf16.mxu0 0
    %450 = vmatmul.mubr.bf16.gmra.mxu0 %v412
    %v451 = vpop.f32.mrf.mxu0
    %v452 = vadd.f32 0.0, %v451
    %v453 = vpop.f32.mrf.mxu0
    %v454 = vpop.f32.mrf.mxu0
    %v455 = vpop.f32.mrf.mxu0
    %456 = vdwg.mxu0
    %v457 = vunpack.c.l.b16 %v301
    %v458 = vpack.c.b16 %v457, %v457
    %459 = vrot.lane.b32.xlu0 %v458, 96
    %v460 = vpop.permute.xlu0 %459
    %v462 = vsel %vm312, %v301, 0
    %v465 = vsel %vm312, %v460, 0
    %467 = vmatprep.subr.bf16.mxu0 0
    %468 = vmatpush1.bf16.xpose.msra.mxu0 0
    %469 = vmatprep.subr.bf16.mxu0 0
    %470 = vmatpush1.bf16.xpose.msra.mxu0 0
    %471 = vmatprep.subr.bf16.mxu0 0
    %472 = vmatpush1.bf16.xpose.msra.mxu0 0
    %473 = vmatprep.subr.bf16.mxu0 0
    %474 = vmatpush1.bf16.xpose.msra.mxu0 0
    %475 = vmatprep.subr.bf16.mxu0 0
    %476 = vmatpush1.bf16.xpose.msra.mxu0 0
    %477 = vmatprep.subr.bf16.mxu0 0
    %478 = vmatpush1.bf16.xpose.msra.mxu0 0
    %479 = vmatprep.subr.bf16.mxu0 0
    %480 = vmatpush1.bf16.xpose.msra.mxu0 0
    %481 = vmatprep.subr.bf16.mxu0 0
    %482 = vmatpush1.bf16.xpose.msra.mxu0 %v465
    %483 = vmatprep.subr.bf16.mxu0 0
    %484 = vmatpush2.bf16.xpose.msra.mxu0 0
    %485 = vmatprep.subr.bf16.mxu0 0
    %486 = vmatpush2.bf16.xpose.msra.mxu0 0
    %487 = vmatprep.subr.bf16.mxu0 0
    %488 = vmatpush2.bf16.xpose.msra.mxu0 0
    %489 = vmatprep.subr.bf16.mxu0 0
    %490 = vmatpush2.bf16.xpose.msra.mxu0 0
    %491 = vmatprep.subr.bf16.mxu0 0
    %492 = vmatpush2.bf16.xpose.msra.mxu0 0
    %493 = vmatprep.subr.bf16.mxu0 0
    %494 = vmatpush2.bf16.xpose.msra.mxu0 0
    %495 = vmatprep.subr.bf16.mxu0 0
    %496 = vmatpush2.bf16.xpose.msra.mxu0 0
    %497 = vmatprep.subr.bf16.mxu0 0
    %498 = vmatpush2.bf16.xpose.msra.mxu0 0
    %499 = vmatprep.mubr.bf16.mxu0 0
    %500 = vmatmul.mubr.bf16.gmra.mxu0 %v462
    %v501 = vpop.f32.mrf.mxu0
    %v502 = vadd.f32 0.0, %v501
    %v503 = vpop.f32.mrf.mxu0
    %v504 = vpop.f32.mrf.mxu0
    %v505 = vpop.f32.mrf.mxu0
    %506 = vdwg.mxu0
    %v507 = vunpack.c.l.b16 %v303
    %v508 = vpack.c.b16 %v507, %v507
    %509 = vrot.lane.b32.xlu0 %v508, 96
    %v510 = vpop.permute.xlu0 %509
    %v512 = vsel %vm312, %v303, 0
    %v515 = vsel %vm312, %v510, 0
    %517 = vmatprep.subr.bf16.mxu0 0
    %518 = vmatpush1.bf16.xpose.msra.mxu0 0
    %519 = vmatprep.subr.bf16.mxu0 0
    %520 = vmatpush1.bf16.xpose.msra.mxu0 0
    %521 = vmatprep.subr.bf16.mxu0 0
    %522 = vmatpush1.bf16.xpose.msra.mxu0 0
    %523 = vmatprep.subr.bf16.mxu0 0
    %524 = vmatpush1.bf16.xpose.msra.mxu0 0
    %525 = vmatprep.subr.bf16.mxu0 0
    %526 = vmatpush1.bf16.xpose.msra.mxu0 0
    %527 = vmatprep.subr.bf16.mxu0 0
    %528 = vmatpush1.bf16.xpose.msra.mxu0 0
    %529 = vmatprep.subr.bf16.mxu0 0
    %530 = vmatpush1.bf16.xpose.msra.mxu0 0
    %531 = vmatprep.subr.bf16.mxu0 0
    %532 = vmatpush1.bf16.xpose.msra.mxu0 %v515
    %533 = vmatprep.subr.bf16.mxu0 0
    %534 = vmatpush2.bf16.xpose.msra.mxu0 0
    %535 = vmatprep.subr.bf16.mxu0 0
    %536 = vmatpush2.bf16.xpose.msra.mxu0 0
    %537 = vmatprep.subr.bf16.mxu0 0
    %538 = vmatpush2.bf16.xpose.msra.mxu0 0
    %539 = vmatprep.subr.bf16.mxu0 0
    %540 = vmatpush2.bf16.xpose.msra.mxu0 0
    %541 = vmatprep.subr.bf16.mxu0 0
    %542 = vmatpush2.bf16.xpose.msra.mxu0 0
    %543 = vmatprep.subr.bf16.mxu0 0
    %544 = vmatpush2.bf16.xpose.msra.mxu0 0
    %545 = vmatprep.subr.bf16.mxu0 0
    %546 = vmatpush2.bf16.xpose.msra.mxu0 0
    %547 = vmatprep.subr.bf16.mxu0 0
    %548 = vmatpush2.bf16.xpose.msra.mxu0 0
    %549 = vmatprep.mubr.bf16.mxu0 0
    %550 = vmatmul.mubr.bf16.gmra.mxu0 %v512
    %v551 = vpop.f32.mrf.mxu0
    %v552 = vadd.f32 0.0, %v551
    %v553 = vpop.f32.mrf.mxu0
    %v554 = vpop.f32.mrf.mxu0
    %v555 = vpop.f32.mrf.mxu0
    %556 = vdwg.mxu0
    %v557 = vunpack.c.l.b16 %v305
    %v558 = vpack.c.b16 %v557, %v557
    %559 = vrot.lane.b32.xlu0 %v558, 96
    %v560 = vpop.permute.xlu0 %559
    %v562 = vsel %vm312, %v305, 0
    %v565 = vsel %vm312, %v560, 0
    %567 = vmatprep.subr.bf16.mxu0 0
    %568 = vmatpush1.bf16.xpose.msra.mxu0 0
    %569 = vmatprep.subr.bf16.mxu0 0
    %570 = vmatpush1.bf16.xpose.msra.mxu0 0
    %571 = vmatprep.subr.bf16.mxu0 0
    %572 = vmatpush1.bf16.xpose.msra.mxu0 0
    %573 = vmatprep.subr.bf16.mxu0 0
    %574 = vmatpush1.bf16.xpose.msra.mxu0 0
    %575 = vmatprep.subr.bf16.mxu0 0
    %576 = vmatpush1.bf16.xpose.msra.mxu0 0
    %577 = vmatprep.subr.bf16.mxu0 0
    %578 = vmatpush1.bf16.xpose.msra.mxu0 0
    %579 = vmatprep.subr.bf16.mxu0 0
    %580 = vmatpush1.bf16.xpose.msra.mxu0 0
    %581 = vmatprep.subr.bf16.mxu0 0
    %582 = vmatpush1.bf16.xpose.msra.mxu0 %v565
    %583 = vmatprep.subr.bf16.mxu0 0
    %584 = vmatpush2.bf16.xpose.msra.mxu0 0
    %585 = vmatprep.subr.bf16.mxu0 0
    %586 = vmatpush2.bf16.xpose.msra.mxu0 0
    %587 = vmatprep.subr.bf16.mxu0 0
    %588 = vmatpush2.bf16.xpose.msra.mxu0 0
    %589 = vmatprep.subr.bf16.mxu0 0
    %590 = vmatpush2.bf16.xpose.msra.mxu0 0
    %591 = vmatprep.subr.bf16.mxu0 0
    %592 = vmatpush2.bf16.xpose.msra.mxu0 0
    %593 = vmatprep.subr.bf16.mxu0 0
    %594 = vmatpush2.bf16.xpose.msra.mxu0 0
    %595 = vmatprep.subr.bf16.mxu0 0
    %596 = vmatpush2.bf16.xpose.msra.mxu0 0
    %597 = vmatprep.subr.bf16.mxu0 0
    %598 = vmatpush2.bf16.xpose.msra.mxu0 0
    %599 = vmatprep.mubr.bf16.mxu0 0
    %600 = vmatmul.mubr.bf16.gmra.mxu0 %v562
    %v601 = vpop.f32.mrf.mxu0
    %v602 = vadd.f32 0.0, %v601
    %v603 = vpop.f32.mrf.mxu0
    %v604 = vpop.f32.mrf.mxu0
    %v605 = vpop.f32.mrf.mxu0
    %606 = vdwg.mxu0
    %v607 = vunpack.c.l.b16 %v307
    %v608 = vpack.c.b16 %v607, %v607
    %609 = vrot.lane.b32.xlu0 %v608, 96
    %v610 = vpop.permute.xlu0 %609
    %v612 = vsel %vm312, %v307, 0
    %v615 = vsel %vm312, %v610, 0
    %617 = vmatprep.subr.bf16.mxu0 0
    %618 = vmatpush1.bf16.xpose.msra.mxu0 0
    %619 = vmatprep.subr.bf16.mxu0 0
    %620 = vmatpush1.bf16.xpose.msra.mxu0 0
    %621 = vmatprep.subr.bf16.mxu0 0
    %622 = vmatpush1.bf16.xpose.msra.mxu0 0
    %623 = vmatprep.subr.bf16.mxu0 0
    %624 = vmatpush1.bf16.xpose.msra.mxu0 0
    %625 = vmatprep.subr.bf16.mxu0 0
    %626 = vmatpush1.bf16.xpose.msra.mxu0 0
    %627 = vmatprep.subr.bf16.mxu0 0
    %628 = vmatpush1.bf16.xpose.msra.mxu0 0
    %629 = vmatprep.subr.bf16.mxu0 0
    %630 = vmatpush1.bf16.xpose.msra.mxu0 0
    %631 = vmatprep.subr.bf16.mxu0 0
    %632 = vmatpush1.bf16.xpose.msra.mxu0 %v615
    %633 = vmatprep.subr.bf16.mxu0 0
    %634 = vmatpush2.bf16.xpose.msra.mxu0 0
    %635 = vmatprep.subr.bf16.mxu0 0
    %636 = vmatpush2.bf16.xpose.msra.mxu0 0
    %637 = vmatprep.subr.bf16.mxu0 0
    %638 = vmatpush2.bf16.xpose.msra.mxu0 0
    %639 = vmatprep.subr.bf16.mxu0 0
    %640 = vmatpush2.bf16.xpose.msra.mxu0 0
    %641 = vmatprep.subr.bf16.mxu0 0
    %642 = vmatpush2.bf16.xpose.msra.mxu0 0
    %643 = vmatprep.subr.bf16.mxu0 0
    %644 = vmatpush2.bf16.xpose.msra.mxu0 0
    %645 = vmatprep.subr.bf16.mxu0 0
    %646 = vmatpush2.bf16.xpose.msra.mxu0 0
    %647 = vmatprep.subr.bf16.mxu0 0
    %648 = vmatpush2.bf16.xpose.msra.mxu0 0
    %649 = vmatprep.mubr.bf16.mxu0 0
    %650 = vmatmul.mubr.bf16.gmra.mxu0 %v612
    %v651 = vpop.f32.mrf.mxu0
    %v652 = vadd.f32 0.0, %v651
    %v653 = vpop.f32.mrf.mxu0
    %v654 = vpop.f32.mrf.mxu0
    %v655 = vpop.f32.mrf.mxu0
    %656 = vdwg.mxu0
    %v657 = vunpack.c.l.b16 %v309
    %v658 = vpack.c.b16 %v657, %v657
    %659 = vrot.lane.b32.xlu0 %v658, 96
    %v660 = vpop.permute.xlu0 %659
    %v662 = vsel %vm312, %v309, 0
    %v665 = vsel %vm312, %v660, 0
    %667 = vmatprep.subr.bf16.mxu0 0
    %668 = vmatpush1.bf16.xpose.msra.mxu0 0
    %669 = vmatprep.subr.bf16.mxu0 0
    %670 = vmatpush1.bf16.xpose.msra.mxu0 0
    %671 = vmatprep.subr.bf16.mxu0 0
    %672 = vmatpush1.bf16.xpose.msra.mxu0 0
    %673 = vmatprep.subr.bf16.mxu0 0
    %674 = vmatpush1.bf16.xpose.msra.mxu0 0
    %675 = vmatprep.subr.bf16.mxu0 0
    %676 = vmatpush1.bf16.xpose.msra.mxu0 0
    %677 = vmatprep.subr.bf16.mxu0 0
    %678 = vmatpush1.bf16.xpose.msra.mxu0 0
    %679 = vmatprep.subr.bf16.mxu0 0
    %680 = vmatpush1.bf16.xpose.msra.mxu0 0
    %681 = vmatprep.subr.bf16.mxu0 0
    %682 = vmatpush1.bf16.xpose.msra.mxu0 %v665
    %683 = vmatprep.subr.bf16.mxu0 0
    %684 = vmatpush2.bf16.xpose.msra.mxu0 0
    %685 = vmatprep.subr.bf16.mxu0 0
    %686 = vmatpush2.bf16.xpose.msra.mxu0 0
    %687 = vmatprep.subr.bf16.mxu0 0
    %688 = vmatpush2.bf16.xpose.msra.mxu0 0
    %689 = vmatprep.subr.bf16.mxu0 0
    %690 = vmatpush2.bf16.xpose.msra.mxu0 0
    %691 = vmatprep.subr.bf16.mxu0 0
    %692 = vmatpush2.bf16.xpose.msra.mxu0 0
    %693 = vmatprep.subr.bf16.mxu0 0
    %694 = vmatpush2.bf16.xpose.msra.mxu0 0
    %695 = vmatprep.subr.bf16.mxu0 0
    %696 = vmatpush2.bf16.xpose.msra.mxu0 0
    %697 = vmatprep.subr.bf16.mxu0 0
    %698 = vmatpush2.bf16.xpose.msra.mxu0 0
    %699 = vmatprep.mubr.bf16.mxu0 0
    %700 = vmatmul.mubr.bf16.gmra.mxu0 %v662
    %v701 = vpop.f32.mrf.mxu0
    %v702 = vadd.f32 0.0, %v701
    %v703 = vpop.f32.mrf.mxu0
    %v704 = vpop.f32.mrf.mxu0
    %v705 = vpop.f32.mrf.mxu0
    %706 = vdwg.mxu0
    %v707 = vsel %vm312, %v354, -inf
    %708 = vmax.xlane.f32.xlu0 %v707
    %v709 = vpop.xlane.xlu0 %708
    %v710 = vsel %vm312, %v402, -inf
    %711 = vmax.xlane.f32.xlu0 %v710
    %v712 = vpop.xlane.xlu0 %711
    %v713 = vsel %vm312, %v452, -inf
    %714 = vmax.xlane.f32.xlu0 %v713
    %v715 = vpop.xlane.xlu0 %714
    %v716 = vsel %vm312, %v502, -inf
    %717 = vmax.xlane.f32.xlu0 %v716
    %v718 = vpop.xlane.xlu0 %717
    %v719 = vsel %vm312, %v552, -inf
    %720 = vmax.xlane.f32.xlu0 %v719
    %v721 = vpop.xlane.xlu0 %720
    %v722 = vsel %vm312, %v602, -inf
    %723 = vmax.xlane.f32.xlu0 %v722
    %v724 = vpop.xlane.xlu0 %723
    %v725 = vsel %vm312, %v652, -inf
    %726 = vmax.xlane.f32.xlu0 %v725
    %v727 = vpop.xlane.xlu0 %726
    %v728 = vsel %vm312, %v702, -inf
    %729 = vmax.xlane.f32.xlu0 %v728
    %v730 = vpop.xlane.xlu0 %729
    %v731 = vsub.f32 %v354, %v709
    %v732 = vsub.f32 %v402, %v712
    %v733 = vsub.f32 %v452, %v715
    %v734 = vsub.f32 %v502, %v718
    %v735 = vsub.f32 %v552, %v721
    %v736 = vsub.f32 %v602, %v724
    %v737 = vsub.f32 %v652, %v727
    %v738 = vsub.f32 %v702, %v730
    %v739 = vmul.f32 %v731, 1.442695
    %v740 = vpow.pop %v739
    %v741 = vmul.f32 %v732, 1.442695
    %v742 = vpow.pop %v741
    %v743 = vmul.f32 %v733, 1.442695
    %v744 = vpow.pop %v743
    %v745 = vmul.f32 %v734, 1.442695
    %v746 = vpow.pop %v745
    %v747 = vmul.f32 %v735, 1.442695
    %v748 = vpow.pop %v747
    %v749 = vmul.f32 %v736, 1.442695
    %v750 = vpow.pop %v749
    %v751 = vmul.f32 %v737, 1.442695
    %v752 = vpow.pop %v751
    %v753 = vmul.f32 %v738, 1.442695
    %v754 = vpow.pop %v753
    %v755 = vsel %vm312, %v740, 0.0
    %756 = vadd.xlane.f32.xlu0 %v755
    %v757 = vpop.xlane.xlu0 %756
    %v758 = vsel %vm312, %v742, 0.0
    %759 = vadd.xlane.f32.xlu0 %v758
    %v760 = vpop.xlane.xlu0 %759
    %v761 = vsel %vm312, %v744, 0.0
    %762 = vadd.xlane.f32.xlu0 %v761
    %v763 = vpop.xlane.xlu0 %762
    %v764 = vsel %vm312, %v746, 0.0
    %765 = vadd.xlane.f32.xlu0 %v764
    %v766 = vpop.xlane.xlu0 %765
    %v767 = vsel %vm312, %v748, 0.0
    %768 = vadd.xlane.f32.xlu0 %v767
    %v769 = vpop.xlane.xlu0 %768
    %v770 = vsel %vm312, %v750, 0.0
    %771 = vadd.xlane.f32.xlu0 %v770
    %v772 = vpop.xlane.xlu0 %771
    %v773 = vsel %vm312, %v752, 0.0
    %774 = vadd.xlane.f32.xlu0 %v773
    %v775 = vpop.xlane.xlu0 %774
    %v776 = vsel %vm312, %v754, 0.0
    %777 = vadd.xlane.f32.xlu0 %v776
    %v778 = vpop.xlane.xlu0 %777
    %v779 = vrcp.pop %v757
    %v780 = vrcp.pop %v760
    %v781 = vrcp.pop %v763
    %v782 = vrcp.pop %v766
    %v783 = vrcp.pop %v769
    %v784 = vrcp.pop %v772
    %v785 = vrcp.pop %v775
    %v786 = vrcp.pop %v778
    %v787 = vmul.f32 %v740, %v779
    %v788 = vmul.f32 %v742, %v780
    %v789 = vmul.f32 %v744, %v781
    %v790 = vmul.f32 %v746, %v782
    %v791 = vmul.f32 %v748, %v783
    %v792 = vmul.f32 %v750, %v784
    %v793 = vmul.f32 %v752, %v785
    %v794 = vmul.f32 %v754, %v786
    %v795 = vpack.c.bf16 %v787, %v787
    %v796 = vpack.c.bf16 %v788, %v788
    %v797 = vpack.c.bf16 %v789, %v789
    %v798 = vpack.c.bf16 %v790, %v790
    %v799 = vpack.c.bf16 %v791, %v791
    %v800 = vpack.c.bf16 %v792, %v792
    %v801 = vpack.c.bf16 %v793, %v793
    %v802 = vpack.c.bf16 %v794, %v794
    %803 = vrot.lane.b32.xlu0 %v296, 64
    %v804 = vpop.permute.xlu0 %803
    %v806 = vsel %vm312, %v795, 0
    %vm808 = vcmask 1043456
    %v810 = vsel %vm808, %v804, 0
    %812 = vmatprep.subr.bf16.mxu0 0
    %813 = vmatpush1.bf16.msra.mxu0 0
    %814 = vmatprep.subr.bf16.mxu0 0
    %815 = vmatpush1.bf16.msra.mxu0 0
    %816 = vmatprep.subr.bf16.mxu0 0
    %817 = vmatpush1.bf16.msra.mxu0 0
    %818 = vmatprep.subr.bf16.mxu0 0
    %819 = vmatpush1.bf16.msra.mxu0 0
    %820 = vmatprep.subr.bf16.mxu0 0
    %821 = vmatpush1.bf16.msra.mxu0 0
    %822 = vmatprep.subr.bf16.mxu0 0
    %823 = vmatpush1.bf16.msra.mxu0 0
    %824 = vmatprep.subr.bf16.mxu0 0
    %825 = vmatpush1.bf16.msra.mxu0 0
    %826 = vmatprep.subr.bf16.mxu0 0
    %827 = vmatpush1.bf16.msra.mxu0 %v810
    %828 = vmatprep.subr.bf16.mxu0 0
    %829 = vmatpush2.bf16.msra.mxu0 0
    %830 = vmatprep.subr.bf16.mxu0 0
    %831 = vmatpush2.bf16.msra.mxu0 0
    %832 = vmatprep.subr.bf16.mxu0 0
    %833 = vmatpush2.bf16.msra.mxu0 0
    %834 = vmatprep.subr.bf16.mxu0 0
    %835 = vmatpush2.bf16.msra.mxu0 0
    %836 = vmatprep.subr.bf16.mxu0 0
    %837 = vmatpush2.bf16.msra.mxu0 0
    %838 = vmatprep.subr.bf16.mxu0 0
    %839 = vmatpush2.bf16.msra.mxu0 0
    %840 = vmatprep.subr.bf16.mxu0 0
    %841 = vmatpush2.bf16.msra.mxu0 0
    %842 = vmatprep.subr.bf16.mxu0 0
    %843 = vmatpush2.bf16.msra.mxu0 0
    %844 = vmatprep.mubr.bf16.mxu0 0
    %845 = vmatmul.mubr.bf16.gmra.mxu0 %v806
    %v846 = vpop.f32.mrf.mxu0
    %v847 = vadd.f32 0.0, %v846
    %v848 = vpop.f32.mrf.mxu0
    %v849 = vpop.f32.mrf.mxu0
    %v850 = vpop.f32.mrf.mxu0
    %851 = vdwg.mxu0
    %852 = vrot.lane.b32.xlu0 %v297, 64
    %v853 = vpop.permute.xlu0 %852
    %v855 = vsel %vm312, %v796, 0
    %v858 = vsel %vm808, %v853, 0
    %860 = vmatprep.subr.bf16.mxu0 0
    %861 = vmatpush1.bf16.msra.mxu0 0
    %862 = vmatprep.subr.bf16.mxu0 0
    %863 = vmatpush1.bf16.msra.mxu0 0
    %864 = vmatprep.subr.bf16.mxu0 0
    %865 = vmatpush1.bf16.msra.mxu0 0
    %866 = vmatprep.subr.bf16.mxu0 0
    %867 = vmatpush1.bf16.msra.mxu0 0
    %868 = vmatprep.subr.bf16.mxu0 0
    %869 = vmatpush1.bf16.msra.mxu0 0
    %870 = vmatprep.subr.bf16.mxu0 0
    %871 = vmatpush1.bf16.msra.mxu0 0
    %872 = vmatprep.subr.bf16.mxu0 0
    %873 = vmatpush1.bf16.msra.mxu0 0
    %874 = vmatprep.subr.bf16.mxu0 0
    %875 = vmatpush1.bf16.msra.mxu0 %v858
    %876 = vmatprep.subr.bf16.mxu0 0
    %877 = vmatpush2.bf16.msra.mxu0 0
    %878 = vmatprep.subr.bf16.mxu0 0
    %879 = vmatpush2.bf16.msra.mxu0 0
    %880 = vmatprep.subr.bf16.mxu0 0
    %881 = vmatpush2.bf16.msra.mxu0 0
    %882 = vmatprep.subr.bf16.mxu0 0
    %883 = vmatpush2.bf16.msra.mxu0 0
    %884 = vmatprep.subr.bf16.mxu0 0
    %885 = vmatpush2.bf16.msra.mxu0 0
    %886 = vmatprep.subr.bf16.mxu0 0
    %887 = vmatpush2.bf16.msra.mxu0 0
    %888 = vmatprep.subr.bf16.mxu0 0
    %889 = vmatpush2.bf16.msra.mxu0 0
    %890 = vmatprep.subr.bf16.mxu0 0
    %891 = vmatpush2.bf16.msra.mxu0 0
    %892 = vmatprep.mubr.bf16.mxu0 0
    %893 = vmatmul.mubr.bf16.gmra.mxu0 %v855
    %v894 = vpop.f32.mrf.mxu0
    %v895 = vadd.f32 0.0, %v894
    %v896 = vpop.f32.mrf.mxu0
    %v897 = vpop.f32.mrf.mxu0
    %v898 = vpop.f32.mrf.mxu0
    %899 = vdwg.mxu0
    %900 = vrot.lane.b32.xlu0 %v408, 64
    %v901 = vpop.permute.xlu0 %900
    %v903 = vsel %vm312, %v797, 0
    %v906 = vsel %vm808, %v901, 0
    %908 = vmatprep.subr.bf16.mxu0 0
    %909 = vmatpush1.bf16.msra.mxu0 0
    %910 = vmatprep.subr.bf16.mxu0 0
    %911 = vmatpush1.bf16.msra.mxu0 0
    %912 = vmatprep.subr.bf16.mxu0 0
    %913 = vmatpush1.bf16.msra.mxu0 0
    %914 = vmatprep.subr.bf16.mxu0 0
    %915 = vmatpush1.bf16.msra.mxu0 0
    %916 = vmatprep.subr.bf16.mxu0 0
    %917 = vmatpush1.bf16.msra.mxu0 0
    %918 = vmatprep.subr.bf16.mxu0 0
    %919 = vmatpush1.bf16.msra.mxu0 0
    %920 = vmatprep.subr.bf16.mxu0 0
    %921 = vmatpush1.bf16.msra.mxu0 0
    %922 = vmatprep.subr.bf16.mxu0 0
    %923 = vmatpush1.bf16.msra.mxu0 %v906
    %924 = vmatprep.subr.bf16.mxu0 0
    %925 = vmatpush2.bf16.msra.mxu0 0
    %926 = vmatprep.subr.bf16.mxu0 0
    %927 = vmatpush2.bf16.msra.mxu0 0
    %928 = vmatprep.subr.bf16.mxu0 0
    %929 = vmatpush2.bf16.msra.mxu0 0
    %930 = vmatprep.subr.bf16.mxu0 0
    %931 = vmatpush2.bf16.msra.mxu0 0
    %932 = vmatprep.subr.bf16.mxu0 0
    %933 = vmatpush2.bf16.msra.mxu0 0
    %934 = vmatprep.subr.bf16.mxu0 0
    %935 = vmatpush2.bf16.msra.mxu0 0
    %936 = vmatprep.subr.bf16.mxu0 0
    %937 = vmatpush2.bf16.msra.mxu0 0
    %938 = vmatprep.subr.bf16.mxu0 0
    %939 = vmatpush2.bf16.msra.mxu0 0
    %940 = vmatprep.mubr.bf16.mxu0 0
    %941 = vmatmul.mubr.bf16.gmra.mxu0 %v903
    %v942 = vpop.f32.mrf.mxu0
    %v943 = vadd.f32 0.0, %v942
    %v944 = vpop.f32.mrf.mxu0
    %v945 = vpop.f32.mrf.mxu0
    %v946 = vpop.f32.mrf.mxu0
    %947 = vdwg.mxu0
    %948 = vrot.lane.b32.xlu0 %v458, 64
    %v949 = vpop.permute.xlu0 %948
    %v951 = vsel %vm312, %v798, 0
    %v954 = vsel %vm808, %v949, 0
    %956 = vmatprep.subr.bf16.mxu0 0
    %957 = vmatpush1.bf16.msra.mxu0 0
    %958 = vmatprep.subr.bf16.mxu0 0
    %959 = vmatpush1.bf16.msra.mxu0 0
    %960 = vmatprep.subr.bf16.mxu0 0
    %961 = vmatpush1.bf16.msra.mxu0 0
    %962 = vmatprep.subr.bf16.mxu0 0
    %963 = vmatpush1.bf16.msra.mxu0 0
    %964 = vmatprep.subr.bf16.mxu0 0
    %965 = vmatpush1.bf16.msra.mxu0 0
    %966 = vmatprep.subr.bf16.mxu0 0
    %967 = vmatpush1.bf16.msra.mxu0 0
    %968 = vmatprep.subr.bf16.mxu0 0
    %969 = vmatpush1.bf16.msra.mxu0 0
    %970 = vmatprep.subr.bf16.mxu0 0
    %971 = vmatpush1.bf16.msra.mxu0 %v954
    %972 = vmatprep.subr.bf16.mxu0 0
    %973 = vmatpush2.bf16.msra.mxu0 0
    %974 = vmatprep.subr.bf16.mxu0 0
    %975 = vmatpush2.bf16.msra.mxu0 0
    %976 = vmatprep.subr.bf16.mxu0 0
    %977 = vmatpush2.bf16.msra.mxu0 0
    %978 = vmatprep.subr.bf16.mxu0 0
    %979 = vmatpush2.bf16.msra.mxu0 0
    %980 = vmatprep.subr.bf16.mxu0 0
    %981 = vmatpush2.bf16.msra.mxu0 0
    %982 = vmatprep.subr.bf16.mxu0 0
    %983 = vmatpush2.bf16.msra.mxu0 0
    %984 = vmatprep.subr.bf16.mxu0 0
    %985 = vmatpush2.bf16.msra.mxu0 0
    %986 = vmatprep.subr.bf16.mxu0 0
    %987 = vmatpush2.bf16.msra.mxu0 0
    %988 = vmatprep.mubr.bf16.mxu0 0
    %989 = vmatmul.mubr.bf16.gmra.mxu0 %v951
    %v990 = vpop.f32.mrf.mxu0
    %v991 = vadd.f32 0.0, %v990
    %v992 = vpop.f32.mrf.mxu0
    %v993 = vpop.f32.mrf.mxu0
    %v994 = vpop.f32.mrf.mxu0
    %995 = vdwg.mxu0
    %996 = vrot.lane.b32.xlu0 %v508, 64
    %v997 = vpop.permute.xlu0 %996
    %v999 = vsel %vm312, %v799, 0
    %v1002 = vsel %vm808, %v997, 0
    %1004 = vmatprep.subr.bf16.mxu0 0
    %1005 = vmatpush1.bf16.msra.mxu0 0
    %1006 = vmatprep.subr.bf16.mxu0 0
    %1007 = vmatpush1.bf16.msra.mxu0 0
    %1008 = vmatprep.subr.bf16.mxu0 0
    %1009 = vmatpush1.bf16.msra.mxu0 0
    %1010 = vmatprep.subr.bf16.mxu0 0
    %1011 = vmatpush1.bf16.msra.mxu0 0
    %1012 = vmatprep.subr.bf16.mxu0 0
    %1013 = vmatpush1.bf16.msra.mxu0 0
    %1014 = vmatprep.subr.bf16.mxu0 0
    %1015 = vmatpush1.bf16.msra.mxu0 0
    %1016 = vmatprep.subr.bf16.mxu0 0
    %1017 = vmatpush1.bf16.msra.mxu0 0
    %1018 = vmatprep.subr.bf16.mxu0 0
    %1019 = vmatpush1.bf16.msra.mxu0 %v1002
    %1020 = vmatprep.subr.bf16.mxu0 0
    %1021 = vmatpush2.bf16.msra.mxu0 0
    %1022 = vmatprep.subr.bf16.mxu0 0
    %1023 = vmatpush2.bf16.msra.mxu0 0
    %1024 = vmatprep.subr.bf16.mxu0 0
    %1025 = vmatpush2.bf16.msra.mxu0 0
    %1026 = vmatprep.subr.bf16.mxu0 0
    %1027 = vmatpush2.bf16.msra.mxu0 0
    %1028 = vmatprep.subr.bf16.mxu0 0
    %1029 = vmatpush2.bf16.msra.mxu0 0
    %1030 = vmatprep.subr.bf16.mxu0 0
    %1031 = vmatpush2.bf16.msra.mxu0 0
    %1032 = vmatprep.subr.bf16.mxu0 0
    %1033 = vmatpush2.bf16.msra.mxu0 0
    %1034 = vmatprep.subr.bf16.mxu0 0
    %1035 = vmatpush2.bf16.msra.mxu0 0
    %1036 = vmatprep.mubr.bf16.mxu0 0
    %1037 = vmatmul.mubr.bf16.gmra.mxu0 %v999
    %v1038 = vpop.f32.mrf.mxu0
    %v1039 = vadd.f32 0.0, %v1038
    %v1040 = vpop.f32.mrf.mxu0
    %v1041 = vpop.f32.mrf.mxu0
    %v1042 = vpop.f32.mrf.mxu0
    %1043 = vdwg.mxu0
    %1044 = vrot.lane.b32.xlu0 %v558, 64
    %v1045 = vpop.permute.xlu0 %1044
    %v1047 = vsel %vm312, %v800, 0
    %v1050 = vsel %vm808, %v1045, 0
    %1052 = vmatprep.subr.bf16.mxu0 0
    %1053 = vmatpush1.bf16.msra.mxu0 0
    %1054 = vmatprep.subr.bf16.mxu0 0
    %1055 = vmatpush1.bf16.msra.mxu0 0
    %1056 = vmatprep.subr.bf16.mxu0 0
    %1057 = vmatpush1.bf16.msra.mxu0 0
    %1058 = vmatprep.subr.bf16.mxu0 0
    %1059 = vmatpush1.bf16.msra.mxu0 0
    %1060 = vmatprep.subr.bf16.mxu0 0
    %1061 = vmatpush1.bf16.msra.mxu0 0
    %1062 = vmatprep.subr.bf16.mxu0 0
    %1063 = vmatpush1.bf16.msra.mxu0 0
    %1064 = vmatprep.subr.bf16.mxu0 0
    %1065 = vmatpush1.bf16.msra.mxu0 0
    %1066 = vmatprep.subr.bf16.mxu0 0
    %1067 = vmatpush1.bf16.msra.mxu0 %v1050
    %1068 = vmatprep.subr.bf16.mxu0 0
    %1069 = vmatpush2.bf16.msra.mxu0 0
    %1070 = vmatprep.subr.bf16.mxu0 0
    %1071 = vmatpush2.bf16.msra.mxu0 0
    %1072 = vmatprep.subr.bf16.mxu0 0
    %1073 = vmatpush2.bf16.msra.mxu0 0
    %1074 = vmatprep.subr.bf16.mxu0 0
    %1075 = vmatpush2.bf16.msra.mxu0 0
    %1076 = vmatprep.subr.bf16.mxu0 0
    %1077 = vmatpush2.bf16.msra.mxu0 0
    %1078 = vmatprep.subr.bf16.mxu0 0
    %1079 = vmatpush2.bf16.msra.mxu0 0
    %1080 = vmatprep.subr.bf16.mxu0 0
    %1081 = vmatpush2.bf16.msra.mxu0 0
    %1082 = vmatprep.subr.bf16.mxu0 0
    %1083 = vmatpush2.bf16.msra.mxu0 0
    %1084 = vmatprep.mubr.bf16.mxu0 0
    %1085 = vmatmul.mubr.bf16.gmra.mxu0 %v1047
    %v1086 = vpop.f32.mrf.mxu0
    %v1087 = vadd.f32 0.0, %v1086
    %v1088 = vpop.f32.mrf.mxu0
    %v1089 = vpop.f32.mrf.mxu0
    %v1090 = vpop.f32.mrf.mxu0
    %1091 = vdwg.mxu0
    %1092 = vrot.lane.b32.xlu0 %v608, 64
    %v1093 = vpop.permute.xlu0 %1092
    %v1095 = vsel %vm312, %v801, 0
    %v1098 = vsel %vm808, %v1093, 0
    %1100 = vmatprep.subr.bf16.mxu0 0
    %1101 = vmatpush1.bf16.msra.mxu0 0
    %1102 = vmatprep.subr.bf16.mxu0 0
    %1103 = vmatpush1.bf16.msra.mxu0 0
    %1104 = vmatprep.subr.bf16.mxu0 0
    %1105 = vmatpush1.bf16.msra.mxu0 0
    %1106 = vmatprep.subr.bf16.mxu0 0
    %1107 = vmatpush1.bf16.msra.mxu0 0
    %1108 = vmatprep.subr.bf16.mxu0 0
    %1109 = vmatpush1.bf16.msra.mxu0 0
    %1110 = vmatprep.subr.bf16.mxu0 0
    %1111 = vmatpush1.bf16.msra.mxu0 0
    %1112 = vmatprep.subr.bf16.mxu0 0
    %1113 = vmatpush1.bf16.msra.mxu0 0
    %1114 = vmatprep.subr.bf16.mxu0 0
    %1115 = vmatpush1.bf16.msra.mxu0 %v1098
    %1116 = vmatprep.subr.bf16.mxu0 0
    %1117 = vmatpush2.bf16.msra.mxu0 0
    %1118 = vmatprep.subr.bf16.mxu0 0
    %1119 = vmatpush2.bf16.msra.mxu0 0
    %1120 = vmatprep.subr.bf16.mxu0 0
    %1121 = vmatpush2.bf16.msra.mxu0 0
    %1122 = vmatprep.subr.bf16.mxu0 0
    %1123 = vmatpush2.bf16.msra.mxu0 0
    %1124 = vmatprep.subr.bf16.mxu0 0
    %1125 = vmatpush2.bf16.msra.mxu0 0
    %1126 = vmatprep.subr.bf16.mxu0 0
    %1127 = vmatpush2.bf16.msra.mxu0 0
    %1128 = vmatprep.subr.bf16.mxu0 0
    %1129 = vmatpush2.bf16.msra.mxu0 0
    %1130 = vmatprep.subr.bf16.mxu0 0
    %1131 = vmatpush2.bf16.msra.mxu0 0
    %1132 = vmatprep.mubr.bf16.mxu0 0
    %1133 = vmatmul.mubr.bf16.gmra.mxu0 %v1095
    %v1134 = vpop.f32.mrf.mxu0
    %v1135 = vadd.f32 0.0, %v1134
    %v1136 = vpop.f32.mrf.mxu0
    %v1137 = vpop.f32.mrf.mxu0
    %v1138 = vpop.f32.mrf.mxu0
    %1139 = vdwg.mxu0
    %1140 = vrot.lane.b32.xlu0 %v658, 64
    %v1141 = vpop.permute.xlu0 %1140
    %v1143 = vsel %vm312, %v802, 0
    %v1146 = vsel %vm808, %v1141, 0
    %1148 = vmatprep.subr.bf16.mxu0 0
    %1149 = vmatpush1.bf16.msra.mxu0 0
    %1150 = vmatprep.subr.bf16.mxu0 0
    %1151 = vmatpush1.bf16.msra.mxu0 0
    %1152 = vmatprep.subr.bf16.mxu0 0
    %1153 = vmatpush1.bf16.msra.mxu0 0
    %1154 = vmatprep.subr.bf16.mxu0 0
    %1155 = vmatpush1.bf16.msra.mxu0 0
    %1156 = vmatprep.subr.bf16.mxu0 0
    %1157 = vmatpush1.bf16.msra.mxu0 0
    %1158 = vmatprep.subr.bf16.mxu0 0
    %1159 = vmatpush1.bf16.msra.mxu0 0
    %1160 = vmatprep.subr.bf16.mxu0 0
    %1161 = vmatpush1.bf16.msra.mxu0 0
    %1162 = vmatprep.subr.bf16.mxu0 0
    %1163 = vmatpush1.bf16.msra.mxu0 %v1146
    %1164 = vmatprep.subr.bf16.mxu0 0
    %1165 = vmatpush2.bf16.msra.mxu0 0
    %1166 = vmatprep.subr.bf16.mxu0 0
    %1167 = vmatpush2.bf16.msra.mxu0 0
    %1168 = vmatprep.subr.bf16.mxu0 0
    %1169 = vmatpush2.bf16.msra.mxu0 0
    %1170 = vmatprep.subr.bf16.mxu0 0
    %1171 = vmatpush2.bf16.msra.mxu0 0
    %1172 = vmatprep.subr.bf16.mxu0 0
    %1173 = vmatpush2.bf16.msra.mxu0 0
    %1174 = vmatprep.subr.bf16.mxu0 0
    %1175 = vmatpush2.bf16.msra.mxu0 0
    %1176 = vmatprep.subr.bf16.mxu0 0
    %1177 = vmatpush2.bf16.msra.mxu0 0
    %1178 = vmatprep.subr.bf16.mxu0 0
    %1179 = vmatpush2.bf16.msra.mxu0 0
    %1180 = vmatprep.mubr.bf16.mxu0 0
    %1181 = vmatmul.mubr.bf16.gmra.mxu0 %v1143
    %v1182 = vpop.f32.mrf.mxu0
    %v1183 = vadd.f32 0.0, %v1182
    %v1184 = vpop.f32.mrf.mxu0
    %v1185 = vpop.f32.mrf.mxu0
    %v1186 = vpop.f32.mrf.mxu0
    %1187 = vdwg.mxu0
    %1190 = vrot.lane.b32.xlu0 %v943, 8
    %v1191 = vpop.permute.xlu0 %1190
    %1192 = vrot.lane.b32.xlu0 %v991, 8
    %v1193 = vpop.permute.xlu0 %1192
    %1198 = vrot.lane.b32.xlu0 %v1039, 16
    %v1199 = vpop.permute.xlu0 %1198
    %1200 = vrot.lane.b32.xlu0 %v1087, 16
    %v1201 = vpop.permute.xlu0 %1200
    %1206 = vrot.lane.b32.xlu0 %v1135, 24
    %v1207 = vpop.permute.xlu0 %1206
    %1208 = vrot.lane.b32.xlu0 %v1183, 24
    %v1209 = vpop.permute.xlu0 %1208
    %v1212 = vsel %vm312, %v847, %v1191
    %v1213 = vsel %vm312, %v895, %v1193
    %v1214 = vsel %vm178, %v1212, %v1199
    %v1215 = vsel %vm178, %v1213, %v1201
    %vm1216 = vcmask 195584
    %v1217 = vsel %vm1216, %v1214, %v1207
    %v1218 = vsel %vm1216, %v1215, %v1209
    %v1219 = vpack.c.bf16 %v1218, %v1217
    %v1220 = vld [vmem:[%s5] sm:$0xf]
    %v1221 = vld [vmem:[%s5 + $0x4] sm:$0xf]
    %v1222 = vld [vmem:[%s5 + $0x8] sm:$0xf]
    %v1223 = vld [vmem:[%s5 + $0xc] sm:$0xf]
    %v1224 = vld [vmem:[#allocation7] sm:$0x1]
    %v1226 = vlaneseq
    %v1227 = vshrl.u32 %v1226, 7
    %v1228 = vsub.s32 0, %v1227
    %v1229 = vrot.slane %v1224, %v1228
    %v1235 = vunpack.c.l.b16 %v1220
    %v1236 = vunpack.c.l.b16 %v1221
    %v1237 = vunpack.c.l.b16 %v1222
    %v1238 = vunpack.c.l.b16 %v1223
    %v1239 = vpack.c.b16 %v1236, %v1235
    %v1240 = vpack.c.b16 %v1238, %v1237
    %v1244 = vsel %vm247, %v1219, 0
    %1246 = vmatprep.subr.bf16.mxu0 0
    %1247 = vmatpush1.bf16.msra.mxu0 0
    %1248 = vmatprep.subr.bf16.mxu0 0
    %1249 = vmatpush1.bf16.msra.mxu0 0
    %1250 = vmatprep.subr.bf16.mxu0 0
    %1251 = vmatpush1.bf16.msra.mxu0 0
    %1252 = vmatprep.subr.bf16.mxu0 0
    %1253 = vmatpush1.bf16.msra.mxu0 0
    %1254 = vmatprep.subr.bf16.mxu0 0
    %1255 = vmatpush1.bf16.msra.mxu0 0
    %1256 = vmatprep.subr.bf16.mxu0 0
    %1257 = vmatpush1.bf16.msra.mxu0 0
    %1258 = vmatprep.subr.bf16.mxu0 0
    %1259 = vmatpush1.bf16.msra.mxu0 %v1240
    %1260 = vmatprep.subr.bf16.mxu0 0
    %1261 = vmatpush1.bf16.msra.mxu0 %v1239
    %1262 = vmatprep.subr.bf16.mxu0 0
    %1263 = vmatpush2.bf16.msra.mxu0 0
    %1264 = vmatprep.subr.bf16.mxu0 0
    %1265 = vmatpush2.bf16.msra.mxu0 0
    %1266 = vmatprep.subr.bf16.mxu0 0
    %1267 = vmatpush2.bf16.msra.mxu0 0
    %1268 = vmatprep.subr.bf16.mxu0 0
    %1269 = vmatpush2.bf16.msra.mxu0 0
    %1270 = vmatprep.subr.bf16.mxu0 0
    %1271 = vmatpush2.bf16.msra.mxu0 0
    %1272 = vmatprep.subr.bf16.mxu0 0
    %1273 = vmatpush2.bf16.msra.mxu0 0
    %1274 = vmatprep.subr.bf16.mxu0 0
    %1275 = vmatpush2.bf16.msra.mxu0 0
    %1276 = vmatprep.subr.bf16.mxu0 0
    %1277 = vmatpush2.bf16.msra.mxu0 0
    %1278 = vmatprep.mubr.bf16.mxu0 0
    %1279 = vmatmul.mubr.bf16.gmra.mxu0 %v1244
    %v1280 = vpop.f32.mrf.mxu0
    %v1281 = vadd.f32 %v1229, %v1280
    %v1282 = vpop.f32.mrf.mxu0
    %v1283 = vpop.f32.mrf.mxu0
    %v1284 = vadd.f32 %v1229, %v1283
    %v1285 = vpop.f32.mrf.mxu0
    %1286 = vdwg.mxu0
    %v1287 = vadd.f32 %v217, %v1281
    %v1288 = vadd.f32 %v220, %v1284
    %v1289 = vld [vmem:[%s11] sm:$0x1]
    %v1290 = vld [vmem:[#allocation12] sm:$0x1]
    %v1291 = vsel %vm247, %v1287, 0.0
    %1292 = vadd.xlane.f32.xlu0 %v1291
    %v1293 = vpop.xlane.xlu0 %1292
    %v1294 = vsel %vm247, %v1288, 0.0
    %1295 = vadd.xlane.f32.xlu0 %v1294
    %v1296 = vpop.xlane.xlu0 %1295
    %v1297 = vrcp.pop 32.0
    %v1298 = vmul.f32 %v1293, %v1297
    %v1299 = vmul.f32 %v1296, %v1297
    %v1300 = vsub.f32 %v1287, %v1298
    %v1301 = vsub.f32 %v1288, %v1299
    %v1302 = vmul.f32 %v1300, %v1300
    %v1303 = vmul.f32 %v1301, %v1301
    %v1304 = vsel %vm247, %v1302, 0.0
    %1305 = vadd.xlane.f32.xlu0 %v1304
    %v1306 = vpop.xlane.xlu0 %1305
    %v1307 = vsel %vm247, %v1303, 0.0
    %1308 = vadd.xlane.f32.xlu0 %v1307
    %v1309 = vpop.xlane.xlu0 %1308
    %v1310 = vmul.f32 %v1306, %v1297
    %v1311 = vmul.f32 %v1309, %v1297
    %v1312 = vadd.f32 %v1310, 1e-05
    %v1313 = vadd.f32 %v1311, 1e-05
    %v1314 = vrsqrt.pop %v1312
    %v1315 = vrsqrt.pop %v1313
    %v1316 = vmul.f32 %v1300, %v1314
    %v1317 = vmul.f32 %v1301, %v1315
    %v1319 = vlaneseq
    %v1320 = vshrl.u32 %v1319, 7
    %v1321 = vsub.s32 0, %v1320
    %v1322 = vrot.slane %v1289, %v1321
    %v1324 = vmul.f32 %v1316, %v1322
    %v1325 = vmul.f32 %v1317, %v1322
    %v1327 = vlaneseq
    %v1328 = vshrl.u32 %v1327, 7
    %v1329 = vsub.s32 0, %v1328
    %v1330 = vrot.slane %v1290, %v1329
    %v1332 = vadd.f32 %v1324, %v1330
    %v1333 = vadd.f32 %v1325, %v1330
    %v1334 = vpack.c.bf16 %v1333, %v1332
    %v1335 = vld [vmem:[%s7] sm:$0xf]
    %v1336 = vld [vmem:[%s7 + $0x4] sm:$0xf]
    %v1337 = vld [vmem:[%s7 + $0x8] sm:$0xf]
    %v1338 = vld [vmem:[%s7 + $0xc] sm:$0xf]
    %v1339 = vld [vmem:[#allocation9] sm:$0x1]
    %v1341 = vlaneseq
    %v1342 = vshrl.u32 %v1341, 7
    %v1343 = vsub.s32 0, %v1342
    %v1344 = vrot.slane %v1339, %v1343
    %v1350 = vunpack.c.l.b16 %v1335
    %v1351 = vunpack.c.l.b16 %v1336
    %v1352 = vunpack.c.l.b16 %v1337
    %v1353 = vunpack.c.l.b16 %v1338
    %v1354 = vpack.c.b16 %v1351, %v1350
    %v1355 = vpack.c.b16 %v1353, %v1352
    %v1359 = vsel %vm247, %v1334, 0
    %1361 = vmatprep.subr.bf16.mxu0 0
    %1362 = vmatpush1.bf16.msra.mxu0 0
    %1363 = vmatprep.subr.bf16.mxu0 0
    %1364 = vmatpush1.bf16.msra.mxu0 0
    %1365 = vmatprep.subr.bf16.mxu0 0
    %1366 = vmatpush1.bf16.msra.mxu0 0
    %1367 = vmatprep.subr.bf16.mxu0 0
    %1368 = vmatpush1.bf16.msra.mxu0 0
    %1369 = vmatprep.subr.bf16.mxu0 0
    %1370 = vmatpush1.bf16.msra.mxu0 0
    %1371 = vmatprep.subr.bf16.mxu0 0
    %1372 = vmatpush1.bf16.msra.mxu0 0
    %1373 = vmatprep.subr.bf16.mxu0 0
    %1374 = vmatpush1.bf16.msra.mxu0 %v1355
    %1375 = vmatprep.subr.bf16.mxu0 0
    %1376 = vmatpush1.bf16.msra.mxu0 %v1354
    %1377 = vmatprep.subr.bf16.mxu0 0
    %1378 = vmatpush2.bf16.msra.mxu0 0
    %1379 = vmatprep.subr.bf16.mxu0 0
    %1380 = vmatpush2.bf16.msra.mxu0 0
    %1381 = vmatprep.subr.bf16.mxu0 0
    %1382 = vmatpush2.bf16.msra.mxu0 0
    %1383 = vmatprep.subr.bf16.mxu0 0
    %1384 = vmatpush2.bf16.msra.mxu0 0
    %1385 = vmatprep.subr.bf16.mxu0 0
    %1386 = vmatpush2.bf16.msra.mxu0 0
    %1387 = vmatprep.subr.bf16.mxu0 0
    %1388 = vmatpush2.bf16.msra.mxu0 0
    %1389 = vmatprep.subr.bf16.mxu0 0
    %1390 = vmatpush2.bf16.msra.mxu0 0
    %1391 = vmatprep.subr.bf16.mxu0 0
    %1392 = vmatpush2.bf16.msra.mxu0 0
    %1393 = vmatprep.mubr.bf16.mxu0 0
    %1394 = vmatmul.mubr.bf16.gmra.mxu0 %v1359
    %v1395 = vpop.f32.mrf.mxu0
    %v1396 = vadd.f32 %v1344, %v1395
    %v1397 = vpop.f32.mrf.mxu0
    %v1398 = vpop.f32.mrf.mxu0
    %v1399 = vadd.f32 %v1344, %v1398
    %v1400 = vpop.f32.mrf.mxu0
    %1401 = vdwg.mxu0
    %v1402 = vmax.f32 %v1396, 0.0
    %v1403 = vmax.f32 %v1399, 0.0
    %v1404 = vpack.c.bf16 %v1403, %v1402
    %v1405 = vld [vmem:[%s9] sm:$0xf]
    %v1406 = vld [vmem:[%s9 + $0x4] sm:$0xf]
    %v1407 = vld [vmem:[%s9 + $0x8] sm:$0xf]
    %v1408 = vld [vmem:[%s9 + $0xc] sm:$0xf]
    %v1409 = vld [vmem:[%s9 + $0x10] sm:$0xf]
    %v1410 = vld [vmem:[%s9 + $0x14] sm:$0xf]
    %v1411 = vld [vmem:[%s9 + $0x18] sm:$0xf]
    %v1412 = vld [vmem:[%s9 + $0x1c] sm:$0xf]
    %v1413 = vld [vmem:[#allocation10] sm:$0x1]
    %v1415 = vlaneseq
    %v1416 = vshrl.u32 %v1415, 7
    %v1417 = vsub.s32 0, %v1416
    %v1418 = vrot.slane %v1413, %v1417
    %v1428 = vunpack.c.l.b16 %v1405
    %v1429 = vunpack.c.l.b16 %v1406
    %v1430 = vunpack.c.l.b16 %v1407
    %v1431 = vunpack.c.l.b16 %v1408
    %v1432 = vunpack.c.l.b16 %v1409
    %v1433 = vunpack.c.l.b16 %v1410
    %v1434 = vunpack.c.l.b16 %v1411
    %v1435 = vunpack.c.l.b16 %v1412
    %v1436 = vpack.c.b16 %v1429, %v1428
    %v1437 = vpack.c.b16 %v1431, %v1430
    %v1438 = vpack.c.b16 %v1433, %v1432
    %v1439 = vpack.c.b16 %v1435, %v1434
    %vm1444 = vcmask 523264
    %v1446 = vsel %vm1444, %v1404, 0
    %1448 = vmatprep.subr.bf16.mxu0 0
    %1449 = vmatpush1.bf16.msra.mxu0 0
    %1450 = vmatprep.subr.bf16.mxu0 0
    %1451 = vmatpush1.bf16.msra.mxu0 0
    %1452 = vmatprep.subr.bf16.mxu0 0
    %1453 = vmatpush1.bf16.msra.mxu0 0
    %1454 = vmatprep.subr.bf16.mxu0 0
    %1455 = vmatpush1.bf16.msra.mxu0 0
    %1456 = vmatprep.subr.bf16.mxu0 0
    %1457 = vmatpush1.bf16.msra.mxu0 %v1439
    %1458 = vmatprep.subr.bf16.mxu0 0
    %1459 = vmatpush1.bf16.msra.mxu0 %v1438
    %1460 = vmatprep.subr.bf16.mxu0 0
    %1461 = vmatpush1.bf16.msra.mxu0 %v1437
    %1462 = vmatprep.subr.bf16.mxu0 0
    %1463 = vmatpush1.bf16.msra.mxu0 %v1436
    %1464 = vmatprep.subr.bf16.mxu0 0
    %1465 = vmatpush2.bf16.msra.mxu0 0
    %1466 = vmatprep.subr.bf16.mxu0 0
    %1467 = vmatpush2.bf16.msra.mxu0 0
    %1468 = vmatprep.subr.bf16.mxu0 0
    %1469 = vmatpush2.bf16.msra.mxu0 0
    %1470 = vmatprep.subr.bf16.mxu0 0
    %1471 = vmatpush2.bf16.msra.mxu0 0
    %1472 = vmatprep.subr.bf16.mxu0 0
    %1473 = vmatpush2.bf16.msra.mxu0 0
    %1474 = vmatprep.subr.bf16.mxu0 0
    %1475 = vmatpush2.bf16.msra.mxu0 0
    %1476 = vmatprep.subr.bf16.mxu0 0
    %1477 = vmatpush2.bf16.msra.mxu0 0
    %1478 = vmatprep.subr.bf16.mxu0 0
    %1479 = vmatpush2.bf16.msra.mxu0 0
    %1480 = vmatprep.mubr.bf16.mxu0 0
    %1481 = vmatmul.mubr.bf16.gmra.mxu0 %v1446
    %v1482 = vpop.f32.mrf.mxu0
    %v1483 = vadd.f32 %v1418, %v1482
    %v1484 = vpop.f32.mrf.mxu0
    %v1485 = vpop.f32.mrf.mxu0
    %v1486 = vadd.f32 %v1418, %v1485
    %v1487 = vpop.f32.mrf.mxu0
    %1488 = vdwg.mxu0
    %v1489 = vadd.f32 %v1332, %v1483
    %v1490 = vadd.f32 %v1333, %v1486
    %v1491 = vld [vmem:[%s13] sm:$0x1]
    %v1492 = vld [vmem:[%s14] sm:$0x1]
    %v1493 = vsel %vm247, %v1489, 0.0
    %1494 = vadd.xlane.f32.xlu0 %v1493
    %v1495 = vpop.xlane.xlu0 %1494
    %v1496 = vsel %vm247, %v1490, 0.0
    %1497 = vadd.xlane.f32.xlu0 %v1496
    %v1498 = vpop.xlane.xlu0 %1497
    %v1499 = vmul.f32 %v1495, %v1297
    %v1500 = vmul.f32 %v1498, %v1297
    %v1501 = vsub.f32 %v1489, %v1499
    %v1502 = vsub.f32 %v1490, %v1500
    %v1503 = vmul.f32 %v1501, %v1501
    %v1504 = vmul.f32 %v1502, %v1502
    %v1505 = vsel %vm247, %v1503, 0.0
    %1506 = vadd.xlane.f32.xlu0 %v1505
    %v1507 = vpop.xlane.xlu0 %1506
    %v1508 = vsel %vm247, %v1504, 0.0
    %1509 = vadd.xlane.f32.xlu0 %v1508
    %v1510 = vpop.xlane.xlu0 %1509
    %v1511 = vmul.f32 %v1507, %v1297
    %v1512 = vmul.f32 %v1510, %v1297
    %v1513 = vadd.f32 %v1511, 1e-05
    %v1514 = vadd.f32 %v1512, 1e-05
    %v1515 = vrsqrt.pop %v1513
    %v1516 = vrsqrt.pop %v1514
    %v1517 = vmul.f32 %v1501, %v1515
    %v1518 = vmul.f32 %v1502, %v1516
    %v1520 = vlaneseq
    %v1521 = vshrl.u32 %v1520, 7
    %v1522 = vsub.s32 0, %v1521
    %v1523 = vrot.slane %v1491, %v1522
    %v1525 = vmul.f32 %v1517, %v1523
    %v1526 = vmul.f32 %v1518, %v1523
    %v1528 = vlaneseq
    %v1529 = vshrl.u32 %v1528, 7
    %v1530 = vsub.s32 0, %v1529
    %v1531 = vrot.slane %v1492, %v1530
    %v1533 = vadd.f32 %v1525, %v1531
    %v1534 = vadd.f32 %v1526, %v1531
    %v1535 = vpack.c.bf16 %v1534, %v1533
    %s1536 = scalar_lea.vmem %s3, 16
    %v1537 = vld [vmem:[%s1536] sm:$0xf]
    %v1538 = vld [vmem:[%s1536 + $0x4] sm:$0xf]
    %v1539 = vld [vmem:[%s1536 + $0x8] sm:$0xf]
    %v1540 = vld [vmem:[%s1536 + $0xc] sm:$0xf]
    %s1541 = scalar_lea.vmem %s4, 1
    %v1542 = vld [vmem:[%s1541] sm:$0x1]
    %v1544 = vlaneseq
    %v1545 = vshrl.u32 %v1544, 7
    %v1546 = vsub.s32 0, %v1545
    %v1547 = vrot.slane %v1542, %v1546
    %v1553 = vunpack.c.l.b16 %v1537
    %v1554 = vunpack.c.l.b16 %v1538
    %v1555 = vunpack.c.l.b16 %v1539
    %v1556 = vunpack.c.l.b16 %v1540
    %v1557 = vpack.c.b16 %v1554, %v1553
    %v1558 = vpack.c.b16 %v1556, %v1555
    %v1562 = vsel %vm247, %v1535, 0
    %1564 = vmatprep.subr.bf16.mxu0 0
    %1565 = vmatpush1.bf16.msra.mxu0 0
    %1566 = vmatprep.subr.bf16.mxu0 0
    %1567 = vmatpush1.bf16.msra.mxu0 0
    %1568 = vmatprep.subr.bf16.mxu0 0
    %1569 = vmatpush1.bf16.msra.mxu0 0
    %1570 = vmatprep.subr.bf16.mxu0 0
    %1571 = vmatpush1.bf16.msra.mxu0 0
    %1572 = vmatprep.subr.bf16.mxu0 0
    %1573 = vmatpush1.bf16.msra.mxu0 0
    %1574 = vmatprep.subr.bf16.mxu0 0
    %1575 = vmatpush1.bf16.msra.mxu0 0
    %1576 = vmatprep.subr.bf16.mxu0 0
    %1577 = vmatpush1.bf16.msra.mxu0 %v1558
    %1578 = vmatprep.subr.bf16.mxu0 0
    %1579 = vmatpush1.bf16.msra.mxu0 %v1557
    %1580 = vmatprep.subr.bf16.mxu0 0
    %1581 = vmatpush2.bf16.msra.mxu0 0
    %1582 = vmatprep.subr.bf16.mxu0 0
    %1583 = vmatpush2.bf16.msra.mxu0 0
    %1584 = vmatprep.subr.bf16.mxu0 0
    %1585 = vmatpush2.bf16.msra.mxu0 0
    %1586 = vmatprep.subr.bf16.mxu0 0
    %1587 = vmatpush2.bf16.msra.mxu0 0
    %1588 = vmatprep.subr.bf16.mxu0 0
    %1589 = vmatpush2.bf16.msra.mxu0 0
    %1590 = vmatprep.subr.bf16.mxu0 0
    %1591 = vmatpush2.bf16.msra.mxu0 0
    %1592 = vmatprep.subr.bf16.mxu0 0
    %1593 = vmatpush2.bf16.msra.mxu0 0
    %1594 = vmatprep.subr.bf16.mxu0 0
    %1595 = vmatpush2.bf16.msra.mxu0 0
    %1596 = vmatprep.mubr.bf16.mxu0 0
    %1597 = vmatmul.mubr.bf16.gmra.mxu0 %v1562
    %v1598 = vpop.f32.mrf.mxu0
    %v1599 = vadd.f32 %v1547, %v1598
    %v1600 = vpop.f32.mrf.mxu0
    %v1601 = vpop.f32.mrf.mxu0
    %v1602 = vadd.f32 %v1547, %v1601
    %v1603 = vpop.f32.mrf.mxu0
    %1604 = vdwg.mxu0
    %v1605 = vpack.c.bf16 %v1602, %v1599
    %v1607 = vunpack.c.l.b16 %v1605
    %v1608 = vunpack.c.h.b16 %v1605
    %v1609 = vpack.c.b16 %v1607, %v1607
    %v1610 = vpack.c.b16 %v1608, %v1608
    %1611 = vrot.lane.b32.xlu0 %v1609, 120
    %v1612 = vpop.permute.xlu0 %1611
    %1613 = vrot.lane.b32.xlu0 %v1610, 120
    %v1614 = vpop.permute.xlu0 %1613
    %1615 = vrot.lane.b32.xlu0 %v1609, 112
    %v1616 = vpop.permute.xlu0 %1615
    %1617 = vrot.lane.b32.xlu0 %v1610, 112
    %v1618 = vpop.permute.xlu0 %1617
    %1619 = vrot.lane.b32.xlu0 %v1609, 104
    %v1620 = vpop.permute.xlu0 %1619
    %1621 = vrot.lane.b32.xlu0 %v1610, 104
    %v1622 = vpop.permute.xlu0 %1621
    %1623 = vrot.lane.b32.xlu0 %v1609, 96
    %v1624 = vpop.permute.xlu0 %1623
    %v1626 = vsel %vm312, %v1609, 0
    %v1629 = vsel %vm312, %v1624, 0
    %1631 = vmatprep.subr.bf16.mxu0 0
    %1632 = vmatpush1.bf16.xpose.msra.mxu0 0
    %1633 = vmatprep.subr.bf16.mxu0 0
    %1634 = vmatpush1.bf16.xpose.msra.mxu0 0
    %1635 = vmatprep.subr.bf16.mxu0 0
    %1636 = vmatpush1.bf16.xpose.msra.mxu0 0
    %1637 = vmatprep.subr.bf16.mxu0 0
    %1638 = vmatpush1.bf16.xpose.msra.mxu0 0
    %1639 = vmatprep.subr.bf16.mxu0 0
    %1640 = vmatpush1.bf16.xpose.msra.mxu0 0
    %1641 = vmatprep.subr.bf16.mxu0 0
    %1642 = vmatpush1.bf16.xpose.msra.mxu0 0
    %1643 = vmatprep.subr.bf16.mxu0 0
    %1644 = vmatpush1.bf16.xpose.msra.mxu0 0
    %1645 = vmatprep.subr.bf16.mxu0 0
    %1646 = vmatpush1.bf16.xpose.msra.mxu0 %v1629
    %1647 = vmatprep.subr.bf16.mxu0 0
    %1648 = vmatpush2.bf16.xpose.msra.mxu0 0
    %1649 = vmatprep.subr.bf16.mxu0 0
    %1650 = vmatpush2.bf16.xpose.msra.mxu0 0
    %1651 = vmatprep.subr.bf16.mxu0 0
    %1652 = vmatpush2.bf16.xpose.msra.mxu0 0
    %1653 = vmatprep.subr.bf16.mxu0 0
    %1654 = vmatpush2.bf16.xpose.msra.mxu0 0
    %1655 = vmatprep.subr.bf16.mxu0 0
    %1656 = vmatpush2.bf16.xpose.msra.mxu0 0
    %1657 = vmatprep.subr.bf16.mxu0 0
    %1658 = vmatpush2.bf16.xpose.msra.mxu0 0
    %1659 = vmatprep.subr.bf16.mxu0 0
    %1660 = vmatpush2.bf16.xpose.msra.mxu0 0
    %1661 = vmatprep.subr.bf16.mxu0 0
    %1662 = vmatpush2.bf16.xpose.msra.mxu0 0
    %1663 = vmatprep.mubr.bf16.mxu0 0
    %1664 = vmatmul.mubr.bf16.gmra.mxu0 %v1626
    %v1665 = vpop.f32.mrf.mxu0
    %v1666 = vadd.f32 0.0, %v1665
    %v1667 = vpop.f32.mrf.mxu0
    %v1668 = vpop.f32.mrf.mxu0
    %v1669 = vpop.f32.mrf.mxu0
    %1670 = vdwg.mxu0
    %1671 = vrot.lane.b32.xlu0 %v1610, 96
    %v1672 = vpop.permute.xlu0 %1671
    %v1674 = vsel %vm312, %v1610, 0
    %v1677 = vsel %vm312, %v1672, 0
    %1679 = vmatprep.subr.bf16.mxu0 0
    %1680 = vmatpush1.bf16.xpose.msra.mxu0 0
    %1681 = vmatprep.subr.bf16.mxu0 0
    %1682 = vmatpush1.bf16.xpose.msra.mxu0 0
    %1683 = vmatprep.subr.bf16.mxu0 0
    %1684 = vmatpush1.bf16.xpose.msra.mxu0 0
    %1685 = vmatprep.subr.bf16.mxu0 0
    %1686 = vmatpush1.bf16.xpose.msra.mxu0 0
    %1687 = vmatprep.subr.bf16.mxu0 0
    %1688 = vmatpush1.bf16.xpose.msra.mxu0 0
    %1689 = vmatprep.subr.bf16.mxu0 0
    %1690 = vmatpush1.bf16.xpose.msra.mxu0 0
    %1691 = vmatprep.subr.bf16.mxu0 0
    %1692 = vmatpush1.bf16.xpose.msra.mxu0 0
    %1693 = vmatprep.subr.bf16.mxu0 0
    %1694 = vmatpush1.bf16.xpose.msra.mxu0 %v1677
    %1695 = vmatprep.subr.bf16.mxu0 0
    %1696 = vmatpush2.bf16.xpose.msra.mxu0 0
    %1697 = vmatprep.subr.bf16.mxu0 0
    %1698 = vmatpush2.bf16.xpose.msra.mxu0 0
    %1699 = vmatprep.subr.bf16.mxu0 0
    %1700 = vmatpush2.bf16.xpose.msra.mxu0 0
    %1701 = vmatprep.subr.bf16.mxu0 0
    %1702 = vmatpush2.bf16.xpose.msra.mxu0 0
    %1703 = vmatprep.subr.bf16.mxu0 0
    %1704 = vmatpush2.bf16.xpose.msra.mxu0 0
    %1705 = vmatprep.subr.bf16.mxu0 0
    %1706 = vmatpush2.bf16.xpose.msra.mxu0 0
    %1707 = vmatprep.subr.bf16.mxu0 0
    %1708 = vmatpush2.bf16.xpose.msra.mxu0 0
    %1709 = vmatprep.subr.bf16.mxu0 0
    %1710 = vmatpush2.bf16.xpose.msra.mxu0 0
    %1711 = vmatprep.mubr.bf16.mxu0 0
    %1712 = vmatmul.mubr.bf16.gmra.mxu0 %v1674
    %v1713 = vpop.f32.mrf.mxu0
    %v1714 = vadd.f32 0.0, %v1713
    %v1715 = vpop.f32.mrf.mxu0
    %v1716 = vpop.f32.mrf.mxu0
    %v1717 = vpop.f32.mrf.mxu0
    %1718 = vdwg.mxu0
    %v1719 = vunpack.c.l.b16 %v1612
    %v1720 = vpack.c.b16 %v1719, %v1719
    %1721 = vrot.lane.b32.xlu0 %v1720, 96
    %v1722 = vpop.permute.xlu0 %1721
    %v1724 = vsel %vm312, %v1612, 0
    %v1727 = vsel %vm312, %v1722, 0
    %1729 = vmatprep.subr.bf16.mxu0 0
    %1730 = vmatpush1.bf16.xpose.msra.mxu0 0
    %1731 = vmatprep.subr.bf16.mxu0 0
    %1732 = vmatpush1.bf16.xpose.msra.mxu0 0
    %1733 = vmatprep.subr.bf16.mxu0 0
    %1734 = vmatpush1.bf16.xpose.msra.mxu0 0
    %1735 = vmatprep.subr.bf16.mxu0 0
    %1736 = vmatpush1.bf16.xpose.msra.mxu0 0
    %1737 = vmatprep.subr.bf16.mxu0 0
    %1738 = vmatpush1.bf16.xpose.msra.mxu0 0
    %1739 = vmatprep.subr.bf16.mxu0 0
    %1740 = vmatpush1.bf16.xpose.msra.mxu0 0
    %1741 = vmatprep.subr.bf16.mxu0 0
    %1742 = vmatpush1.bf16.xpose.msra.mxu0 0
    %1743 = vmatprep.subr.bf16.mxu0 0
    %1744 = vmatpush1.bf16.xpose.msra.mxu0 %v1727
    %1745 = vmatprep.subr.bf16.mxu0 0
    %1746 = vmatpush2.bf16.xpose.msra.mxu0 0
    %1747 = vmatprep.subr.bf16.mxu0 0
    %1748 = vmatpush2.bf16.xpose.msra.mxu0 0
    %1749 = vmatprep.subr.bf16.mxu0 0
    %1750 = vmatpush2.bf16.xpose.msra.mxu0 0
    %1751 = vmatprep.subr.bf16.mxu0 0
    %1752 = vmatpush2.bf16.xpose.msra.mxu0 0
    %1753 = vmatprep.subr.bf16.mxu0 0
    %1754 = vmatpush2.bf16.xpose.msra.mxu0 0
    %1755 = vmatprep.subr.bf16.mxu0 0
    %1756 = vmatpush2.bf16.xpose.msra.mxu0 0
    %1757 = vmatprep.subr.bf16.mxu0 0
    %1758 = vmatpush2.bf16.xpose.msra.mxu0 0
    %1759 = vmatprep.subr.bf16.mxu0 0
    %1760 = vmatpush2.bf16.xpose.msra.mxu0 0
    %1761 = vmatprep.mubr.bf16.mxu0 0
    %1762 = vmatmul.mubr.bf16.gmra.mxu0 %v1724
    %v1763 = vpop.f32.mrf.mxu0
    %v1764 = vadd.f32 0.0, %v1763
    %v1765 = vpop.f32.mrf.mxu0
    %v1766 = vpop.f32.mrf.mxu0
    %v1767 = vpop.f32.mrf.mxu0
    %1768 = vdwg.mxu0
    %v1769 = vunpack.c.l.b16 %v1614
    %v1770 = vpack.c.b16 %v1769, %v1769
    %1771 = vrot.lane.b32.xlu0 %v1770, 96
    %v1772 = vpop.permute.xlu0 %1771
    %v1774 = vsel %vm312, %v1614, 0
    %v1777 = vsel %vm312, %v1772, 0
    %1779 = vmatprep.subr.bf16.mxu0 0
    %1780 = vmatpush1.bf16.xpose.msra.mxu0 0
    %1781 = vmatprep.subr.bf16.mxu0 0
    %1782 = vmatpush1.bf16.xpose.msra.mxu0 0
    %1783 = vmatprep.subr.bf16.mxu0 0
    %1784 = vmatpush1.bf16.xpose.msra.mxu0 0
    %1785 = vmatprep.subr.bf16.mxu0 0
    %1786 = vmatpush1.bf16.xpose.msra.mxu0 0
    %1787 = vmatprep.subr.bf16.mxu0 0
    %1788 = vmatpush1.bf16.xpose.msra.mxu0 0
    %1789 = vmatprep.subr.bf16.mxu0 0
    %1790 = vmatpush1.bf16.xpose.msra.mxu0 0
    %1791 = vmatprep.subr.bf16.mxu0 0
    %1792 = vmatpush1.bf16.xpose.msra.mxu0 0
    %1793 = vmatprep.subr.bf16.mxu0 0
    %1794 = vmatpush1.bf16.xpose.msra.mxu0 %v1777
    %1795 = vmatprep.subr.bf16.mxu0 0
    %1796 = vmatpush2.bf16.xpose.msra.mxu0 0
    %1797 = vmatprep.subr.bf16.mxu0 0
    %1798 = vmatpush2.bf16.xpose.msra.mxu0 0
    %1799 = vmatprep.subr.bf16.mxu0 0
    %1800 = vmatpush2.bf16.xpose.msra.mxu0 0
    %1801 = vmatprep.subr.bf16.mxu0 0
    %1802 = vmatpush2.bf16.xpose.msra.mxu0 0
    %1803 = vmatprep.subr.bf16.mxu0 0
    %1804 = vmatpush2.bf16.xpose.msra.mxu0 0
    %1805 = vmatprep.subr.bf16.mxu0 0
    %1806 = vmatpush2.bf16.xpose.msra.mxu0 0
    %1807 = vmatprep.subr.bf16.mxu0 0
    %1808 = vmatpush2.bf16.xpose.msra.mxu0 0
    %1809 = vmatprep.subr.bf16.mxu0 0
    %1810 = vmatpush2.bf16.xpose.msra.mxu0 0
    %1811 = vmatprep.mubr.bf16.mxu0 0
    %1812 = vmatmul.mubr.bf16.gmra.mxu0 %v1774
    %v1813 = vpop.f32.mrf.mxu0
    %v1814 = vadd.f32 0.0, %v1813
    %v1815 = vpop.f32.mrf.mxu0
    %v1816 = vpop.f32.mrf.mxu0
    %v1817 = vpop.f32.mrf.mxu0
    %1818 = vdwg.mxu0
    %v1819 = vunpack.c.l.b16 %v1616
    %v1820 = vpack.c.b16 %v1819, %v1819
    %1821 = vrot.lane.b32.xlu0 %v1820, 96
    %v1822 = vpop.permute.xlu0 %1821
    %v1824 = vsel %vm312, %v1616, 0
    %v1827 = vsel %vm312, %v1822, 0
    %1829 = vmatprep.subr.bf16.mxu0 0
    %1830 = vmatpush1.bf16.xpose.msra.mxu0 0
    %1831 = vmatprep.subr.bf16.mxu0 0
    %1832 = vmatpush1.bf16.xpose.msra.mxu0 0
    %1833 = vmatprep.subr.bf16.mxu0 0
    %1834 = vmatpush1.bf16.xpose.msra.mxu0 0
    %1835 = vmatprep.subr.bf16.mxu0 0
    %1836 = vmatpush1.bf16.xpose.msra.mxu0 0
    %1837 = vmatprep.subr.bf16.mxu0 0
    %1838 = vmatpush1.bf16.xpose.msra.mxu0 0
    %1839 = vmatprep.subr.bf16.mxu0 0
    %1840 = vmatpush1.bf16.xpose.msra.mxu0 0
    %1841 = vmatprep.subr.bf16.mxu0 0
    %1842 = vmatpush1.bf16.xpose.msra.mxu0 0
    %1843 = vmatprep.subr.bf16.mxu0 0
    %1844 = vmatpush1.bf16.xpose.msra.mxu0 %v1827
    %1845 = vmatprep.subr.bf16.mxu0 0
    %1846 = vmatpush2.bf16.xpose.msra.mxu0 0
    %1847 = vmatprep.subr.bf16.mxu0 0
    %1848 = vmatpush2.bf16.xpose.msra.mxu0 0
    %1849 = vmatprep.subr.bf16.mxu0 0
    %1850 = vmatpush2.bf16.xpose.msra.mxu0 0
    %1851 = vmatprep.subr.bf16.mxu0 0
    %1852 = vmatpush2.bf16.xpose.msra.mxu0 0
    %1853 = vmatprep.subr.bf16.mxu0 0
    %1854 = vmatpush2.bf16.xpose.msra.mxu0 0
    %1855 = vmatprep.subr.bf16.mxu0 0
    %1856 = vmatpush2.bf16.xpose.msra.mxu0 0
    %1857 = vmatprep.subr.bf16.mxu0 0
    %1858 = vmatpush2.bf16.xpose.msra.mxu0 0
    %1859 = vmatprep.subr.bf16.mxu0 0
    %1860 = vmatpush2.bf16.xpose.msra.mxu0 0
    %1861 = vmatprep.mubr.bf16.mxu0 0
    %1862 = vmatmul.mubr.bf16.gmra.mxu0 %v1824
    %v1863 = vpop.f32.mrf.mxu0
    %v1864 = vadd.f32 0.0, %v1863
    %v1865 = vpop.f32.mrf.mxu0
    %v1866 = vpop.f32.mrf.mxu0
    %v1867 = vpop.f32.mrf.mxu0
    %1868 = vdwg.mxu0
    %v1869 = vunpack.c.l.b16 %v1618
    %v1870 = vpack.c.b16 %v1869, %v1869
    %1871 = vrot.lane.b32.xlu0 %v1870, 96
    %v1872 = vpop.permute.xlu0 %1871
    %v1874 = vsel %vm312, %v1618, 0
    %v1877 = vsel %vm312, %v1872, 0
    %1879 = vmatprep.subr.bf16.mxu0 0
    %1880 = vmatpush1.bf16.xpose.msra.mxu0 0
    %1881 = vmatprep.subr.bf16.mxu0 0
    %1882 = vmatpush1.bf16.xpose.msra.mxu0 0
    %1883 = vmatprep.subr.bf16.mxu0 0
    %1884 = vmatpush1.bf16.xpose.msra.mxu0 0
    %1885 = vmatprep.subr.bf16.mxu0 0
    %1886 = vmatpush1.bf16.xpose.msra.mxu0 0
    %1887 = vmatprep.subr.bf16.mxu0 0
    %1888 = vmatpush1.bf16.xpose.msra.mxu0 0
    %1889 = vmatprep.subr.bf16.mxu0 0
    %1890 = vmatpush1.bf16.xpose.msra.mxu0 0
    %1891 = vmatprep.subr.bf16.mxu0 0
    %1892 = vmatpush1.bf16.xpose.msra.mxu0 0
    %1893 = vmatprep.subr.bf16.mxu0 0
    %1894 = vmatpush1.bf16.xpose.msra.mxu0 %v1877
    %1895 = vmatprep.subr.bf16.mxu0 0
    %1896 = vmatpush2.bf16.xpose.msra.mxu0 0
    %1897 = vmatprep.subr.bf16.mxu0 0
    %1898 = vmatpush2.bf16.xpose.msra.mxu0 0
    %1899 = vmatprep.subr.bf16.mxu0 0
    %1900 = vmatpush2.bf16.xpose.msra.mxu0 0
    %1901 = vmatprep.subr.bf16.mxu0 0
    %1902 = vmatpush2.bf16.xpose.msra.mxu0 0
    %1903 = vmatprep.subr.bf16.mxu0 0
    %1904 = vmatpush2.bf16.xpose.msra.mxu0 0
    %1905 = vmatprep.subr.bf16.mxu0 0
    %1906 = vmatpush2.bf16.xpose.msra.mxu0 0
    %1907 = vmatprep.subr.bf16.mxu0 0
    %1908 = vmatpush2.bf16.xpose.msra.mxu0 0
    %1909 = vmatprep.subr.bf16.mxu0 0
    %1910 = vmatpush2.bf16.xpose.msra.mxu0 0
    %1911 = vmatprep.mubr.bf16.mxu0 0
    %1912 = vmatmul.mubr.bf16.gmra.mxu0 %v1874
    %v1913 = vpop.f32.mrf.mxu0
    %v1914 = vadd.f32 0.0, %v1913
    %v1915 = vpop.f32.mrf.mxu0
    %v1916 = vpop.f32.mrf.mxu0
    %v1917 = vpop.f32.mrf.mxu0
    %1918 = vdwg.mxu0
    %v1919 = vunpack.c.l.b16 %v1620
    %v1920 = vpack.c.b16 %v1919, %v1919
    %1921 = vrot.lane.b32.xlu0 %v1920, 96
    %v1922 = vpop.permute.xlu0 %1921
    %v1924 = vsel %vm312, %v1620, 0
    %v1927 = vsel %vm312, %v1922, 0
    %1929 = vmatprep.subr.bf16.mxu0 0
    %1930 = vmatpush1.bf16.xpose.msra.mxu0 0
    %1931 = vmatprep.subr.bf16.mxu0 0
    %1932 = vmatpush1.bf16.xpose.msra.mxu0 0
    %1933 = vmatprep.subr.bf16.mxu0 0
    %1934 = vmatpush1.bf16.xpose.msra.mxu0 0
    %1935 = vmatprep.subr.bf16.mxu0 0
    %1936 = vmatpush1.bf16.xpose.msra.mxu0 0
    %1937 = vmatprep.subr.bf16.mxu0 0
    %1938 = vmatpush1.bf16.xpose.msra.mxu0 0
    %1939 = vmatprep.subr.bf16.mxu0 0
    %1940 = vmatpush1.bf16.xpose.msra.mxu0 0
    %1941 = vmatprep.subr.bf16.mxu0 0
    %1942 = vmatpush1.bf16.xpose.msra.mxu0 0
    %1943 = vmatprep.subr.bf16.mxu0 0
    %1944 = vmatpush1.bf16.xpose.msra.mxu0 %v1927
    %1945 = vmatprep.subr.bf16.mxu0 0
    %1946 = vmatpush2.bf16.xpose.msra.mxu0 0
    %1947 = vmatprep.subr.bf16.mxu0 0
    %1948 = vmatpush2.bf16.xpose.msra.mxu0 0
    %1949 = vmatprep.subr.bf16.mxu0 0
    %1950 = vmatpush2.bf16.xpose.msra.mxu0 0
    %1951 = vmatprep.subr.bf16.mxu0 0
    %1952 = vmatpush2.bf16.xpose.msra.mxu0 0
    %1953 = vmatprep.subr.bf16.mxu0 0
    %1954 = vmatpush2.bf16.xpose.msra.mxu0 0
    %1955 = vmatprep.subr.bf16.mxu0 0
    %1956 = vmatpush2.bf16.xpose.msra.mxu0 0
    %1957 = vmatprep.subr.bf16.mxu0 0
    %1958 = vmatpush2.bf16.xpose.msra.mxu0 0
    %1959 = vmatprep.subr.bf16.mxu0 0
    %1960 = vmatpush2.bf16.xpose.msra.mxu0 0
    %1961 = vmatprep.mubr.bf16.mxu0 0
    %1962 = vmatmul.mubr.bf16.gmra.mxu0 %v1924
    %v1963 = vpop.f32.mrf.mxu0
    %v1964 = vadd.f32 0.0, %v1963
    %v1965 = vpop.f32.mrf.mxu0
    %v1966 = vpop.f32.mrf.mxu0
    %v1967 = vpop.f32.mrf.mxu0
    %1968 = vdwg.mxu0
    %v1969 = vunpack.c.l.b16 %v1622
    %v1970 = vpack.c.b16 %v1969, %v1969
    %1971 = vrot.lane.b32.xlu0 %v1970, 96
    %v1972 = vpop.permute.xlu0 %1971
    %v1974 = vsel %vm312, %v1622, 0
    %v1977 = vsel %vm312, %v1972, 0
    %1979 = vmatprep.subr.bf16.mxu0 0
    %1980 = vmatpush1.bf16.xpose.msra.mxu0 0
    %1981 = vmatprep.subr.bf16.mxu0 0
    %1982 = vmatpush1.bf16.xpose.msra.mxu0 0
    %1983 = vmatprep.subr.bf16.mxu0 0
    %1984 = vmatpush1.bf16.xpose.msra.mxu0 0
    %1985 = vmatprep.subr.bf16.mxu0 0
    %1986 = vmatpush1.bf16.xpose.msra.mxu0 0
    %1987 = vmatprep.subr.bf16.mxu0 0
    %1988 = vmatpush1.bf16.xpose.msra.mxu0 0
    %1989 = vmatprep.subr.bf16.mxu0 0
    %1990 = vmatpush1.bf16.xpose.msra.mxu0 0
    %1991 = vmatprep.subr.bf16.mxu0 0
    %1992 = vmatpush1.bf16.xpose.msra.mxu0 0
    %1993 = vmatprep.subr.bf16.mxu0 0
    %1994 = vmatpush1.bf16.xpose.msra.mxu0 %v1977
    %1995 = vmatprep.subr.bf16.mxu0 0
    %1996 = vmatpush2.bf16.xpose.msra.mxu0 0
    %1997 = vmatprep.subr.bf16.mxu0 0
    %1998 = vmatpush2.bf16.xpose.msra.mxu0 0
    %1999 = vmatprep.subr.bf16.mxu0 0
    %2000 = vmatpush2.bf16.xpose.msra.mxu0 0
    %2001 = vmatprep.subr.bf16.mxu0 0
    %2002 = vmatpush2.bf16.xpose.msra.mxu0 0
    %2003 = vmatprep.subr.bf16.mxu0 0
    %2004 = vmatpush2.bf16.xpose.msra.mxu0 0
    %2005 = vmatprep.subr.bf16.mxu0 0
    %2006 = vmatpush2.bf16.xpose.msra.mxu0 0
    %2007 = vmatprep.subr.bf16.mxu0 0
    %2008 = vmatpush2.bf16.xpose.msra.mxu0 0
    %2009 = vmatprep.subr.bf16.mxu0 0
    %2010 = vmatpush2.bf16.xpose.msra.mxu0 0
    %2011 = vmatprep.mubr.bf16.mxu0 0
    %2012 = vmatmul.mubr.bf16.gmra.mxu0 %v1974
    %v2013 = vpop.f32.mrf.mxu0
    %v2014 = vadd.f32 0.0, %v2013
    %v2015 = vpop.f32.mrf.mxu0
    %v2016 = vpop.f32.mrf.mxu0
    %v2017 = vpop.f32.mrf.mxu0
    %2018 = vdwg.mxu0
    %v2019 = vsel %vm312, %v1666, -inf
    %2020 = vmax.xlane.f32.xlu0 %v2019
    %v2021 = vpop.xlane.xlu0 %2020
    %v2022 = vsel %vm312, %v1714, -inf
    %2023 = vmax.xlane.f32.xlu0 %v2022
    %v2024 = vpop.xlane.xlu0 %2023
    %v2025 = vsel %vm312, %v1764, -inf
    %2026 = vmax.xlane.f32.xlu0 %v2025
    %v2027 = vpop.xlane.xlu0 %2026
    %v2028 = vsel %vm312, %v1814, -inf
    %2029 = vmax.xlane.f32.xlu0 %v2028
    %v2030 = vpop.xlane.xlu0 %2029
    %v2031 = vsel %vm312, %v1864, -inf
    %2032 = vmax.xlane.f32.xlu0 %v2031
    %v2033 = vpop.xlane.xlu0 %2032
    %v2034 = vsel %vm312, %v1914, -inf
    %2035 = vmax.xlane.f32.xlu0 %v2034
    %v2036 = vpop.xlane.xlu0 %2035
    %v2037 = vsel %vm312, %v1964, -inf
    %2038 = vmax.xlane.f32.xlu0 %v2037
    %v2039 = vpop.xlane.xlu0 %2038
    %v2040 = vsel %vm312, %v2014, -inf
    %2041 = vmax.xlane.f32.xlu0 %v2040
    %v2042 = vpop.xlane.xlu0 %2041
    %v2043 = vsub.f32 %v1666, %v2021
    %v2044 = vsub.f32 %v1714, %v2024
    %v2045 = vsub.f32 %v1764, %v2027
    %v2046 = vsub.f32 %v1814, %v2030
    %v2047 = vsub.f32 %v1864, %v2033
    %v2048 = vsub.f32 %v1914, %v2036
    %v2049 = vsub.f32 %v1964, %v2039
    %v2050 = vsub.f32 %v2014, %v2042
    %v2051 = vmul.f32 %v2043, 1.442695
    %v2052 = vpow.pop %v2051
    %v2053 = vmul.f32 %v2044, 1.442695
    %v2054 = vpow.pop %v2053
    %v2055 = vmul.f32 %v2045, 1.442695
    %v2056 = vpow.pop %v2055
    %v2057 = vmul.f32 %v2046, 1.442695
    %v2058 = vpow.pop %v2057
    %v2059 = vmul.f32 %v2047, 1.442695
    %v2060 = vpow.pop %v2059
    %v2061 = vmul.f32 %v2048, 1.442695
    %v2062 = vpow.pop %v2061
    %v2063 = vmul.f32 %v2049, 1.442695
    %v2064 = vpow.pop %v2063
    %v2065 = vmul.f32 %v2050, 1.442695
    %v2066 = vpow.pop %v2065
    %v2067 = vsel %vm312, %v2052, 0.0
    %2068 = vadd.xlane.f32.xlu0 %v2067
    %v2069 = vpop.xlane.xlu0 %2068
    %v2070 = vsel %vm312, %v2054, 0.0
    %2071 = vadd.xlane.f32.xlu0 %v2070
    %v2072 = vpop.xlane.xlu0 %2071
    %v2073 = vsel %vm312, %v2056, 0.0
    %2074 = vadd.xlane.f32.xlu0 %v2073
    %v2075 = vpop.xlane.xlu0 %2074
    %v2076 = vsel %vm312, %v2058, 0.0
    %2077 = vadd.xlane.f32.xlu0 %v2076
    %v2078 = vpop.xlane.xlu0 %2077
    %v2079 = vsel %vm312, %v2060, 0.0
    %2080 = vadd.xlane.f32.xlu0 %v2079
    %v2081 = vpop.xlane.xlu0 %2080
    %v2082 = vsel %vm312, %v2062, 0.0
    %2083 = vadd.xlane.f32.xlu0 %v2082
    %v2084 = vpop.xlane.xlu0 %2083
    %v2085 = vsel %vm312, %v2064, 0.0
    %2086 = vadd.xlane.f32.xlu0 %v2085
    %v2087 = vpop.xlane.xlu0 %2086
    %v2088 = vsel %vm312, %v2066, 0.0
    %2089 = vadd.xlane.f32.xlu0 %v2088
    %v2090 = vpop.xlane.xlu0 %2089
    %v2091 = vrcp.pop %v2069
    %v2092 = vrcp.pop %v2072
    %v2093 = vrcp.pop %v2075
    %v2094 = vrcp.pop %v2078
    %v2095 = vrcp.pop %v2081
    %v2096 = vrcp.pop %v2084
    %v2097 = vrcp.pop %v2087
    %v2098 = vrcp.pop %v2090
    %v2099 = vmul.f32 %v2052, %v2091
    %v2100 = vmul.f32 %v2054, %v2092
    %v2101 = vmul.f32 %v2056, %v2093
    %v2102 = vmul.f32 %v2058, %v2094
    %v2103 = vmul.f32 %v2060, %v2095
    %v2104 = vmul.f32 %v2062, %v2096
    %v2105 = vmul.f32 %v2064, %v2097
    %v2106 = vmul.f32 %v2066, %v2098
    %v2107 = vpack.c.bf16 %v2099, %v2099
    %v2108 = vpack.c.bf16 %v2100, %v2100
    %v2109 = vpack.c.bf16 %v2101, %v2101
    %v2110 = vpack.c.bf16 %v2102, %v2102
    %v2111 = vpack.c.bf16 %v2103, %v2103
    %v2112 = vpack.c.bf16 %v2104, %v2104
    %v2113 = vpack.c.bf16 %v2105, %v2105
    %v2114 = vpack.c.bf16 %v2106, %v2106
    %2115 = vrot.lane.b32.xlu0 %v1609, 64
    %v2116 = vpop.permute.xlu0 %2115
    %v2118 = vsel %vm312, %v2107, 0
    %v2121 = vsel %vm808, %v2116, 0
    %2123 = vmatprep.subr.bf16.mxu0 0
    %2124 = vmatpush1.bf16.msra.mxu0 0
    %2125 = vmatprep.subr.bf16.mxu0 0
    %2126 = vmatpush1.bf16.msra.mxu0 0
    %2127 = vmatprep.subr.bf16.mxu0 0
    %2128 = vmatpush1.bf16.msra.mxu0 0
    %2129 = vmatprep.subr.bf16.mxu0 0
    %2130 = vmatpush1.bf16.msra.mxu0 0
    %2131 = vmatprep.subr.bf16.mxu0 0
    %2132 = vmatpush1.bf16.msra.mxu0 0
    %2133 = vmatprep.subr.bf16.mxu0 0
    %2134 = vmatpush1.bf16.msra.mxu0 0
    %2135 = vmatprep.subr.bf16.mxu0 0
    %2136 = vmatpush1.bf16.msra.mxu0 0
    %2137 = vmatprep.subr.bf16.mxu0 0
    %2138 = vmatpush1.bf16.msra.mxu0 %v2121
    %2139 = vmatprep.subr.bf16.mxu0 0
    %2140 = vmatpush2.bf16.msra.mxu0 0
    %2141 = vmatprep.subr.bf16.mxu0 0
    %2142 = vmatpush2.bf16.msra.mxu0 0
    %2143 = vmatprep.subr.bf16.mxu0 0
    %2144 = vmatpush2.bf16.msra.mxu0 0
    %2145 = vmatprep.subr.bf16.mxu0 0
    %2146 = vmatpush2.bf16.msra.mxu0 0
    %2147 = vmatprep.subr.bf16.mxu0 0
    %2148 = vmatpush2.bf16.msra.mxu0 0
    %2149 = vmatprep.subr.bf16.mxu0 0
    %2150 = vmatpush2.bf16.msra.mxu0 0
    %2151 = vmatprep.subr.bf16.mxu0 0
    %2152 = vmatpush2.bf16.msra.mxu0 0
    %2153 = vmatprep.subr.bf16.mxu0 0
    %2154 = vmatpush2.bf16.msra.mxu0 0
    %2155 = vmatprep.mubr.bf16.mxu0 0
    %2156 = vmatmul.mubr.bf16.gmra.mxu0 %v2118
    %v2157 = vpop.f32.mrf.mxu0
    %v2158 = vadd.f32 0.0, %v2157
    %v2159 = vpop.f32.mrf.mxu0
    %v2160 = vpop.f32.mrf.mxu0
    %v2161 = vpop.f32.mrf.mxu0
    %2162 = vdwg.mxu0
    %2163 = vrot.lane.b32.xlu0 %v1610, 64
    %v2164 = vpop.permute.xlu0 %2163
    %v2166 = vsel %vm312, %v2108, 0
    %v2169 = vsel %vm808, %v2164, 0
    %2171 = vmatprep.subr.bf16.mxu0 0
    %2172 = vmatpush1.bf16.msra.mxu0 0
    %2173 = vmatprep.subr.bf16.mxu0 0
    %2174 = vmatpush1.bf16.msra.mxu0 0
    %2175 = vmatprep.subr.bf16.mxu0 0
    %2176 = vmatpush1.bf16.msra.mxu0 0
    %2177 = vmatprep.subr.bf16.mxu0 0
    %2178 = vmatpush1.bf16.msra.mxu0 0
    %2179 = vmatprep.subr.bf16.mxu0 0
    %2180 = vmatpush1.bf16.msra.mxu0 0
    %2181 = vmatprep.subr.bf16.mxu0 0
    %2182 = vmatpush1.bf16.msra.mxu0 0
    %2183 = vmatprep.subr.bf16.mxu0 0
    %2184 = vmatpush1.bf16.msra.mxu0 0
    %2185 = vmatprep.subr.bf16.mxu0 0
    %2186 = vmatpush1.bf16.msra.mxu0 %v2169
    %2187 = vmatprep.subr.bf16.mxu0 0
    %2188 = vmatpush2.bf16.msra.mxu0 0
    %2189 = vmatprep.subr.bf16.mxu0 0
    %2190 = vmatpush2.bf16.msra.mxu0 0
    %2191 = vmatprep.subr.bf16.mxu0 0
    %2192 = vmatpush2.bf16.msra.mxu0 0
    %2193 = vmatprep.subr.bf16.mxu0 0
    %2194 = vmatpush2.bf16.msra.mxu0 0
    %2195 = vmatprep.subr.bf16.mxu0 0
    %2196 = vmatpush2.bf16.msra.mxu0 0
    %2197 = vmatprep.subr.bf16.mxu0 0
    %2198 = vmatpush2.bf16.msra.mxu0 0
    %2199 = vmatprep.subr.bf16.mxu0 0
    %2200 = vmatpush2.bf16.msra.mxu0 0
    %2201 = vmatprep.subr.bf16.mxu0 0
    %2202 = vmatpush2.bf16.msra.mxu0 0
    %2203 = vmatprep.mubr.bf16.mxu0 0
    %2204 = vmatmul.mubr.bf16.gmra.mxu0 %v2166
    %v2205 = vpop.f32.mrf.mxu0
    %v2206 = vadd.f32 0.0, %v2205
    %v2207 = vpop.f32.mrf.mxu0
    %v2208 = vpop.f32.mrf.mxu0
    %v2209 = vpop.f32.mrf.mxu0
    %2210 = vdwg.mxu0
    %2211 = vrot.lane.b32.xlu0 %v1720, 64
    %v2212 = vpop.permute.xlu0 %2211
    %v2214 = vsel %vm312, %v2109, 0
    %v2217 = vsel %vm808, %v2212, 0
    %2219 = vmatprep.subr.bf16.mxu0 0
    %2220 = vmatpush1.bf16.msra.mxu0 0
    %2221 = vmatprep.subr.bf16.mxu0 0
    %2222 = vmatpush1.bf16.msra.mxu0 0
    %2223 = vmatprep.subr.bf16.mxu0 0
    %2224 = vmatpush1.bf16.msra.mxu0 0
    %2225 = vmatprep.subr.bf16.mxu0 0
    %2226 = vmatpush1.bf16.msra.mxu0 0
    %2227 = vmatprep.subr.bf16.mxu0 0
    %2228 = vmatpush1.bf16.msra.mxu0 0
    %2229 = vmatprep.subr.bf16.mxu0 0
    %2230 = vmatpush1.bf16.msra.mxu0 0
    %2231 = vmatprep.subr.bf16.mxu0 0
    %2232 = vmatpush1.bf16.msra.mxu0 0
    %2233 = vmatprep.subr.bf16.mxu0 0
    %2234 = vmatpush1.bf16.msra.mxu0 %v2217
    %2235 = vmatprep.subr.bf16.mxu0 0
    %2236 = vmatpush2.bf16.msra.mxu0 0
    %2237 = vmatprep.subr.bf16.mxu0 0
    %2238 = vmatpush2.bf16.msra.mxu0 0
    %2239 = vmatprep.subr.bf16.mxu0 0
    %2240 = vmatpush2.bf16.msra.mxu0 0
    %2241 = vmatprep.subr.bf16.mxu0 0
    %2242 = vmatpush2.bf16.msra.mxu0 0
    %2243 = vmatprep.subr.bf16.mxu0 0
    %2244 = vmatpush2.bf16.msra.mxu0 0
    %2245 = vmatprep.subr.bf16.mxu0 0
    %2246 = vmatpush2.bf16.msra.mxu0 0
    %2247 = vmatprep.subr.bf16.mxu0 0
    %2248 = vmatpush2.bf16.msra.mxu0 0
    %2249 = vmatprep.subr.bf16.mxu0 0
    %2250 = vmatpush2.bf16.msra.mxu0 0
    %2251 = vmatprep.mubr.bf16.mxu0 0
    %2252 = vmatmul.mubr.bf16.gmra.mxu0 %v2214
    %v2253 = vpop.f32.mrf.mxu0
    %v2254 = vadd.f32 0.0, %v2253
    %v2255 = vpop.f32.mrf.mxu0
    %v2256 = vpop.f32.mrf.mxu0
    %v2257 = vpop.f32.mrf.mxu0
    %2258 = vdwg.mxu0
    %2259 = vrot.lane.b32.xlu0 %v1770, 64
    %v2260 = vpop.permute.xlu0 %2259
    %v2262 = vsel %vm312, %v2110, 0
    %v2265 = vsel %vm808, %v2260, 0
    %2267 = vmatprep.subr.bf16.mxu0 0
    %2268 = vmatpush1.bf16.msra.mxu0 0
    %2269 = vmatprep.subr.bf16.mxu0 0
    %2270 = vmatpush1.bf16.msra.mxu0 0
    %2271 = vmatprep.subr.bf16.mxu0 0
    %2272 = vmatpush1.bf16.msra.mxu0 0
    %2273 = vmatprep.subr.bf16.mxu0 0
    %2274 = vmatpush1.bf16.msra.mxu0 0
    %2275 = vmatprep.subr.bf16.mxu0 0
    %2276 = vmatpush1.bf16.msra.mxu0 0
    %2277 = vmatprep.subr.bf16.mxu0 0
    %2278 = vmatpush1.bf16.msra.mxu0 0
    %2279 = vmatprep.subr.bf16.mxu0 0
    %2280 = vmatpush1.bf16.msra.mxu0 0
    %2281 = vmatprep.subr.bf16.mxu0 0
    %2282 = vmatpush1.bf16.msra.mxu0 %v2265
    %2283 = vmatprep.subr.bf16.mxu0 0
    %2284 = vmatpush2.bf16.msra.mxu0 0
    %2285 = vmatprep.subr.bf16.mxu0 0
    %2286 = vmatpush2.bf16.msra.mxu0 0
    %2287 = vmatprep.subr.bf16.mxu0 0
    %2288 = vmatpush2.bf16.msra.mxu0 0
    %2289 = vmatprep.subr.bf16.mxu0 0
    %2290 = vmatpush2.bf16.msra.mxu0 0
    %2291 = vmatprep.subr.bf16.mxu0 0
    %2292 = vmatpush2.bf16.msra.mxu0 0
    %2293 = vmatprep.subr.bf16.mxu0 0
    %2294 = vmatpush2.bf16.msra.mxu0 0
    %2295 = vmatprep.subr.bf16.mxu0 0
    %2296 = vmatpush2.bf16.msra.mxu0 0
    %2297 = vmatprep.subr.bf16.mxu0 0
    %2298 = vmatpush2.bf16.msra.mxu0 0
    %2299 = vmatprep.mubr.bf16.mxu0 0
    %2300 = vmatmul.mubr.bf16.gmra.mxu0 %v2262
    %v2301 = vpop.f32.mrf.mxu0
    %v2302 = vadd.f32 0.0, %v2301
    %v2303 = vpop.f32.mrf.mxu0
    %v2304 = vpop.f32.mrf.mxu0
    %v2305 = vpop.f32.mrf.mxu0
    %2306 = vdwg.mxu0
    %2307 = vrot.lane.b32.xlu0 %v1820, 64
    %v2308 = vpop.permute.xlu0 %2307
    %v2310 = vsel %vm312, %v2111, 0
    %v2313 = vsel %vm808, %v2308, 0
    %2315 = vmatprep.subr.bf16.mxu0 0
    %2316 = vmatpush1.bf16.msra.mxu0 0
    %2317 = vmatprep.subr.bf16.mxu0 0
    %2318 = vmatpush1.bf16.msra.mxu0 0
    %2319 = vmatprep.subr.bf16.mxu0 0
    %2320 = vmatpush1.bf16.msra.mxu0 0
    %2321 = vmatprep.subr.bf16.mxu0 0
    %2322 = vmatpush1.bf16.msra.mxu0 0
    %2323 = vmatprep.subr.bf16.mxu0 0
    %2324 = vmatpush1.bf16.msra.mxu0 0
    %2325 = vmatprep.subr.bf16.mxu0 0
    %2326 = vmatpush1.bf16.msra.mxu0 0
    %2327 = vmatprep.subr.bf16.mxu0 0
    %2328 = vmatpush1.bf16.msra.mxu0 0
    %2329 = vmatprep.subr.bf16.mxu0 0
    %2330 = vmatpush1.bf16.msra.mxu0 %v2313
    %2331 = vmatprep.subr.bf16.mxu0 0
    %2332 = vmatpush2.bf16.msra.mxu0 0
    %2333 = vmatprep.subr.bf16.mxu0 0
    %2334 = vmatpush2.bf16.msra.mxu0 0
    %2335 = vmatprep.subr.bf16.mxu0 0
    %2336 = vmatpush2.bf16.msra.mxu0 0
    %2337 = vmatprep.subr.bf16.mxu0 0
    %2338 = vmatpush2.bf16.msra.mxu0 0
    %2339 = vmatprep.subr.bf16.mxu0 0
    %2340 = vmatpush2.bf16.msra.mxu0 0
    %2341 = vmatprep.subr.bf16.mxu0 0
    %2342 = vmatpush2.bf16.msra.mxu0 0
    %2343 = vmatprep.subr.bf16.mxu0 0
    %2344 = vmatpush2.bf16.msra.mxu0 0
    %2345 = vmatprep.subr.bf16.mxu0 0
    %2346 = vmatpush2.bf16.msra.mxu0 0
    %2347 = vmatprep.mubr.bf16.mxu0 0
    %2348 = vmatmul.mubr.bf16.gmra.mxu0 %v2310
    %v2349 = vpop.f32.mrf.mxu0
    %v2350 = vadd.f32 0.0, %v2349
    %v2351 = vpop.f32.mrf.mxu0
    %v2352 = vpop.f32.mrf.mxu0
    %v2353 = vpop.f32.mrf.mxu0
    %2354 = vdwg.mxu0
    %2355 = vrot.lane.b32.xlu0 %v1870, 64
    %v2356 = vpop.permute.xlu0 %2355
    %v2358 = vsel %vm312, %v2112, 0
    %v2361 = vsel %vm808, %v2356, 0
    %2363 = vmatprep.subr.bf16.mxu0 0
    %2364 = vmatpush1.bf16.msra.mxu0 0
    %2365 = vmatprep.subr.bf16.mxu0 0
    %2366 = vmatpush1.bf16.msra.mxu0 0
    %2367 = vmatprep.subr.bf16.mxu0 0
    %2368 = vmatpush1.bf16.msra.mxu0 0
    %2369 = vmatprep.subr.bf16.mxu0 0
    %2370 = vmatpush1.bf16.msra.mxu0 0
    %2371 = vmatprep.subr.bf16.mxu0 0
    %2372 = vmatpush1.bf16.msra.mxu0 0
    %2373 = vmatprep.subr.bf16.mxu0 0
    %2374 = vmatpush1.bf16.msra.mxu0 0
    %2375 = vmatprep.subr.bf16.mxu0 0
    %2376 = vmatpush1.bf16.msra.mxu0 0
    %2377 = vmatprep.subr.bf16.mxu0 0
    %2378 = vmatpush1.bf16.msra.mxu0 %v2361
    %2379 = vmatprep.subr.bf16.mxu0 0
    %2380 = vmatpush2.bf16.msra.mxu0 0
    %2381 = vmatprep.subr.bf16.mxu0 0
    %2382 = vmatpush2.bf16.msra.mxu0 0
    %2383 = vmatprep.subr.bf16.mxu0 0
    %2384 = vmatpush2.bf16.msra.mxu0 0
    %2385 = vmatprep.subr.bf16.mxu0 0
    %2386 = vmatpush2.bf16.msra.mxu0 0
    %2387 = vmatprep.subr.bf16.mxu0 0
    %2388 = vmatpush2.bf16.msra.mxu0 0
    %2389 = vmatprep.subr.bf16.mxu0 0
    %2390 = vmatpush2.bf16.msra.mxu0 0
    %2391 = vmatprep.subr.bf16.mxu0 0
    %2392 = vmatpush2.bf16.msra.mxu0 0
    %2393 = vmatprep.subr.bf16.mxu0 0
    %2394 = vmatpush2.bf16.msra.mxu0 0
    %2395 = vmatprep.mubr.bf16.mxu0 0
    %2396 = vmatmul.mubr.bf16.gmra.mxu0 %v2358
    %v2397 = vpop.f32.mrf.mxu0
    %v2398 = vadd.f32 0.0, %v2397
    %v2399 = vpop.f32.mrf.mxu0
    %v2400 = vpop.f32.mrf.mxu0
    %v2401 = vpop.f32.mrf.mxu0
    %2402 = vdwg.mxu0
    %2403 = vrot.lane.b32.xlu0 %v1920, 64
    %v2404 = vpop.permute.xlu0 %2403
    %v2406 = vsel %vm312, %v2113, 0
    %v2409 = vsel %vm808, %v2404, 0
    %2411 = vmatprep.subr.bf16.mxu0 0
    %2412 = vmatpush1.bf16.msra.mxu0 0
    %2413 = vmatprep.subr.bf16.mxu0 0
    %2414 = vmatpush1.bf16.msra.mxu0 0
    %2415 = vmatprep.subr.bf16.mxu0 0
    %2416 = vmatpush1.bf16.msra.mxu0 0
    %2417 = vmatprep.subr.bf16.mxu0 0
    %2418 = vmatpush1.bf16.msra.mxu0 0
    %2419 = vmatprep.subr.bf16.mxu0 0
    %2420 = vmatpush1.bf16.msra.mxu0 0
    %2421 = vmatprep.subr.bf16.mxu0 0
    %2422 = vmatpush1.bf16.msra.mxu0 0
    %2423 = vmatprep.subr.bf16.mxu0 0
    %2424 = vmatpush1.bf16.msra.mxu0 0
    %2425 = vmatprep.subr.bf16.mxu0 0
    %2426 = vmatpush1.bf16.msra.mxu0 %v2409
    %2427 = vmatprep.subr.bf16.mxu0 0
    %2428 = vmatpush2.bf16.msra.mxu0 0
    %2429 = vmatprep.subr.bf16.mxu0 0
    %2430 = vmatpush2.bf16.msra.mxu0 0
    %2431 = vmatprep.subr.bf16.mxu0 0
    %2432 = vmatpush2.bf16.msra.mxu0 0
    %2433 = vmatprep.subr.bf16.mxu0 0
    %2434 = vmatpush2.bf16.msra.mxu0 0
    %2435 = vmatprep.subr.bf16.mxu0 0
    %2436 = vmatpush2.bf16.msra.mxu0 0
    %2437 = vmatprep.subr.bf16.mxu0 0
    %2438 = vmatpush2.bf16.msra.mxu0 0
    %2439 = vmatprep.subr.bf16.mxu0 0
    %2440 = vmatpush2.bf16.msra.mxu0 0
    %2441 = vmatprep.subr.bf16.mxu0 0
    %2442 = vmatpush2.bf16.msra.mxu0 0
    %2443 = vmatprep.mubr.bf16.mxu0 0
    %2444 = vmatmul.mubr.bf16.gmra.mxu0 %v2406
    %v2445 = vpop.f32.mrf.mxu0
    %v2446 = vadd.f32 0.0, %v2445
    %v2447 = vpop.f32.mrf.mxu0
    %v2448 = vpop.f32.mrf.mxu0
    %v2449 = vpop.f32.mrf.mxu0
    %2450 = vdwg.mxu0
    %2451 = vrot.lane.b32.xlu0 %v1970, 64
    %v2452 = vpop.permute.xlu0 %2451
    %v2454 = vsel %vm312, %v2114, 0
    %v2457 = vsel %vm808, %v2452, 0
    %2459 = vmatprep.subr.bf16.mxu0 0
    %2460 = vmatpush1.bf16.msra.mxu0 0
    %2461 = vmatprep.subr.bf16.mxu0 0
    %2462 = vmatpush1.bf16.msra.mxu0 0
    %2463 = vmatprep.subr.bf16.mxu0 0
    %2464 = vmatpush1.bf16.msra.mxu0 0
    %2465 = vmatprep.subr.bf16.mxu0 0
    %2466 = vmatpush1.bf16.msra.mxu0 0
    %2467 = vmatprep.subr.bf16.mxu0 0
    %2468 = vmatpush1.bf16.msra.mxu0 0
    %2469 = vmatprep.subr.bf16.mxu0 0
    %2470 = vmatpush1.bf16.msra.mxu0 0
    %2471 = vmatprep.subr.bf16.mxu0 0
    %2472 = vmatpush1.bf16.msra.mxu0 0
    %2473 = vmatprep.subr.bf16.mxu0 0
    %2474 = vmatpush1.bf16.msra.mxu0 %v2457
    %2475 = vmatprep.subr.bf16.mxu0 0
    %2476 = vmatpush2.bf16.msra.mxu0 0
    %2477 = vmatprep.subr.bf16.mxu0 0
    %2478 = vmatpush2.bf16.msra.mxu0 0
    %2479 = vmatprep.subr.bf16.mxu0 0
    %2480 = vmatpush2.bf16.msra.mxu0 0
    %2481 = vmatprep.subr.bf16.mxu0 0
    %2482 = vmatpush2.bf16.msra.mxu0 0
    %2483 = vmatprep.subr.bf16.mxu0 0
    %2484 = vmatpush2.bf16.msra.mxu0 0
    %2485 = vmatprep.subr.bf16.mxu0 0
    %2486 = vmatpush2.bf16.msra.mxu0 0
    %2487 = vmatprep.subr.bf16.mxu0 0
    %2488 = vmatpush2.bf16.msra.mxu0 0
    %2489 = vmatprep.subr.bf16.mxu0 0
    %2490 = vmatpush2.bf16.msra.mxu0 0
    %2491 = vmatprep.mubr.bf16.mxu0 0
    %2492 = vmatmul.mubr.bf16.gmra.mxu0 %v2454
    %v2493 = vpop.f32.mrf.mxu0
    %v2494 = vadd.f32 0.0, %v2493
    %v2495 = vpop.f32.mrf.mxu0
    %v2496 = vpop.f32.mrf.mxu0
    %v2497 = vpop.f32.mrf.mxu0
    %2498 = vdwg.mxu0
    %2501 = vrot.lane.b32.xlu0 %v2254, 8
    %v2502 = vpop.permute.xlu0 %2501
    %2503 = vrot.lane.b32.xlu0 %v2302, 8
    %v2504 = vpop.permute.xlu0 %2503
    %2509 = vrot.lane.b32.xlu0 %v2350, 16
    %v2510 = vpop.permute.xlu0 %2509
    %2511 = vrot.lane.b32.xlu0 %v2398, 16
    %v2512 = vpop.permute.xlu0 %2511
    %2517 = vrot.lane.b32.xlu0 %v2446, 24
    %v2518 = vpop.permute.xlu0 %2517
    %2519 = vrot.lane.b32.xlu0 %v2494, 24
    %v2520 = vpop.permute.xlu0 %2519
    %v2523 = vsel %vm312, %v2158, %v2502
    %v2524 = vsel %vm312, %v2206, %v2504
    %v2525 = vsel %vm178, %v2523, %v2510
    %v2526 = vsel %vm178, %v2524, %v2512
    %v2527 = vsel %vm1216, %v2525, %v2518
    %v2528 = vsel %vm1216, %v2526, %v2520
    %v2529 = vpack.c.bf16 %v2528, %v2527
    %s2530 = scalar_lea.vmem %s5, 16
    %v2531 = vld [vmem:[%s2530] sm:$0xf]
    %v2532 = vld [vmem:[%s2530 + $0x4] sm:$0xf]
    %v2533 = vld [vmem:[%s2530 + $0x8] sm:$0xf]
    %v2534 = vld [vmem:[%s2530 + $0xc] sm:$0xf]
    %s2535 = scalar_lea.vmem [#allocation7], 1
    %v2536 = vld [vmem:[%s2535] sm:$0x1]
    %v2538 = vlaneseq
    %v2539 = vshrl.u32 %v2538, 7
    %v2540 = vsub.s32 0, %v2539
    %v2541 = vrot.slane %v2536, %v2540
    %v2547 = vunpack.c.l.b16 %v2531
    %v2548 = vunpack.c.l.b16 %v2532
    %v2549 = vunpack.c.l.b16 %v2533
    %v2550 = vunpack.c.l.b16 %v2534
    %v2551 = vpack.c.b16 %v2548, %v2547
    %v2552 = vpack.c.b16 %v2550, %v2549
    %v2556 = vsel %vm247, %v2529, 0
    %2558 = vmatprep.subr.bf16.mxu0 0
    %2559 = vmatpush1.bf16.msra.mxu0 0
    %2560 = vmatprep.subr.bf16.mxu0 0
    %2561 = vmatpush1.bf16.msra.mxu0 0
    %2562 = vmatprep.subr.bf16.mxu0 0
    %2563 = vmatpush1.bf16.msra.mxu0 0
    %2564 = vmatprep.subr.bf16.mxu0 0
    %2565 = vmatpush1.bf16.msra.mxu0 0
    %2566 = vmatprep.subr.bf16.mxu0 0
    %2567 = vmatpush1.bf16.msra.mxu0 0
    %2568 = vmatprep.subr.bf16.mxu0 0
    %2569 = vmatpush1.bf16.msra.mxu0 0
    %2570 = vmatprep.subr.bf16.mxu0 0
    %2571 = vmatpush1.bf16.msra.mxu0 %v2552
    %2572 = vmatprep.subr.bf16.mxu0 0
    %2573 = vmatpush1.bf16.msra.mxu0 %v2551
    %2574 = vmatprep.subr.bf16.mxu0 0
    %2575 = vmatpush2.bf16.msra.mxu0 0
    %2576 = vmatprep.subr.bf16.mxu0 0
    %2577 = vmatpush2.bf16.msra.mxu0 0
    %2578 = vmatprep.subr.bf16.mxu0 0
    %2579 = vmatpush2.bf16.msra.mxu0 0
    %2580 = vmatprep.subr.bf16.mxu0 0
    %2581 = vmatpush2.bf16.msra.mxu0 0
    %2582 = vmatprep.subr.bf16.mxu0 0
    %2583 = vmatpush2.bf16.msra.mxu0 0
    %2584 = vmatprep.subr.bf16.mxu0 0
    %2585 = vmatpush2.bf16.msra.mxu0 0
    %2586 = vmatprep.subr.bf16.mxu0 0
    %2587 = vmatpush2.bf16.msra.mxu0 0
    %2588 = vmatprep.subr.bf16.mxu0 0
    %2589 = vmatpush2.bf16.msra.mxu0 0
    %2590 = vmatprep.mubr.bf16.mxu0 0
    %2591 = vmatmul.mubr.bf16.gmra.mxu0 %v2556
    %v2592 = vpop.f32.mrf.mxu0
    %v2593 = vadd.f32 %v2541, %v2592
    %v2594 = vpop.f32.mrf.mxu0
    %v2595 = vpop.f32.mrf.mxu0
    %v2596 = vadd.f32 %v2541, %v2595
    %v2597 = vpop.f32.mrf.mxu0
    %2598 = vdwg.mxu0
    %v2599 = vadd.f32 %v1533, %v2593
    %v2600 = vadd.f32 %v1534, %v2596
    %s2601 = scalar_lea.vmem %s11, 1
    %v2602 = vld [vmem:[%s2601] sm:$0x1]
    %s2603 = scalar_lea.vmem [#allocation12], 1
    %v2604 = vld [vmem:[%s2603] sm:$0x1]
    %v2605 = vsel %vm247, %v2599, 0.0
    %2606 = vadd.xlane.f32.xlu0 %v2605
    %v2607 = vpop.xlane.xlu0 %2606
    %v2608 = vsel %vm247, %v2600, 0.0
    %2609 = vadd.xlane.f32.xlu0 %v2608
    %v2610 = vpop.xlane.xlu0 %2609
    %v2611 = vmul.f32 %v2607, %v1297
    %v2612 = vmul.f32 %v2610, %v1297
    %v2613 = vsub.f32 %v2599, %v2611
    %v2614 = vsub.f32 %v2600, %v2612
    %v2615 = vmul.f32 %v2613, %v2613
    %v2616 = vmul.f32 %v2614, %v2614
    %v2617 = vsel %vm247, %v2615, 0.0
    %2618 = vadd.xlane.f32.xlu0 %v2617
    %v2619 = vpop.xlane.xlu0 %2618
    %v2620 = vsel %vm247, %v2616, 0.0
    %2621 = vadd.xlane.f32.xlu0 %v2620
    %v2622 = vpop.xlane.xlu0 %2621
    %v2623 = vmul.f32 %v2619, %v1297
    %v2624 = vmul.f32 %v2622, %v1297
    %v2625 = vadd.f32 %v2623, 1e-05
    %v2626 = vadd.f32 %v2624, 1e-05
    %v2627 = vrsqrt.pop %v2625
    %v2628 = vrsqrt.pop %v2626
    %v2629 = vmul.f32 %v2613, %v2627
    %v2630 = vmul.f32 %v2614, %v2628
    %v2632 = vlaneseq
    %v2633 = vshrl.u32 %v2632, 7
    %v2634 = vsub.s32 0, %v2633
    %v2635 = vrot.slane %v2602, %v2634
    %v2637 = vmul.f32 %v2629, %v2635
    %v2638 = vmul.f32 %v2630, %v2635
    %v2640 = vlaneseq
    %v2641 = vshrl.u32 %v2640, 7
    %v2642 = vsub.s32 0, %v2641
    %v2643 = vrot.slane %v2604, %v2642
    %v2645 = vadd.f32 %v2637, %v2643
    %v2646 = vadd.f32 %v2638, %v2643
    %v2647 = vpack.c.bf16 %v2646, %v2645
    %s2648 = scalar_lea.vmem %s7, 16
    %v2649 = vld [vmem:[%s2648] sm:$0xf]
    %v2650 = vld [vmem:[%s2648 + $0x4] sm:$0xf]
    %v2651 = vld [vmem:[%s2648 + $0x8] sm:$0xf]
    %v2652 = vld [vmem:[%s2648 + $0xc] sm:$0xf]
    %s2653 = scalar_lea.vmem [#allocation9], 1
    %v2654 = vld [vmem:[%s2653] sm:$0x1]
    %v2656 = vlaneseq
    %v2657 = vshrl.u32 %v2656, 7
    %v2658 = vsub.s32 0, %v2657
    %v2659 = vrot.slane %v2654, %v2658
    %v2665 = vunpack.c.l.b16 %v2649
    %v2666 = vunpack.c.l.b16 %v2650
    %v2667 = vunpack.c.l.b16 %v2651
    %v2668 = vunpack.c.l.b16 %v2652
    %v2669 = vpack.c.b16 %v2666, %v2665
    %v2670 = vpack.c.b16 %v2668, %v2667
    %v2674 = vsel %vm247, %v2647, 0
    %2676 = vmatprep.subr.bf16.mxu0 0
    %2677 = vmatpush1.bf16.msra.mxu0 0
    %2678 = vmatprep.subr.bf16.mxu0 0
    %2679 = vmatpush1.bf16.msra.mxu0 0
    %2680 = vmatprep.subr.bf16.mxu0 0
    %2681 = vmatpush1.bf16.msra.mxu0 0
    %2682 = vmatprep.subr.bf16.mxu0 0
    %2683 = vmatpush1.bf16.msra.mxu0 0
    %2684 = vmatprep.subr.bf16.mxu0 0
    %2685 = vmatpush1.bf16.msra.mxu0 0
    %2686 = vmatprep.subr.bf16.mxu0 0
    %2687 = vmatpush1.bf16.msra.mxu0 0
    %2688 = vmatprep.subr.bf16.mxu0 0
    %2689 = vmatpush1.bf16.msra.mxu0 %v2670
    %2690 = vmatprep.subr.bf16.mxu0 0
    %2691 = vmatpush1.bf16.msra.mxu0 %v2669
    %2692 = vmatprep.subr.bf16.mxu0 0
    %2693 = vmatpush2.bf16.msra.mxu0 0
    %2694 = vmatprep.subr.bf16.mxu0 0
    %2695 = vmatpush2.bf16.msra.mxu0 0
    %2696 = vmatprep.subr.bf16.mxu0 0
    %2697 = vmatpush2.bf16.msra.mxu0 0
    %2698 = vmatprep.subr.bf16.mxu0 0
    %2699 = vmatpush2.bf16.msra.mxu0 0
    %2700 = vmatprep.subr.bf16.mxu0 0
    %2701 = vmatpush2.bf16.msra.mxu0 0
    %2702 = vmatprep.subr.bf16.mxu0 0
    %2703 = vmatpush2.bf16.msra.mxu0 0
    %2704 = vmatprep.subr.bf16.mxu0 0
    %2705 = vmatpush2.bf16.msra.mxu0 0
    %2706 = vmatprep.subr.bf16.mxu0 0
    %2707 = vmatpush2.bf16.msra.mxu0 0
    %2708 = vmatprep.mubr.bf16.mxu0 0
    %2709 = vmatmul.mubr.bf16.gmra.mxu0 %v2674
    %v2710 = vpop.f32.mrf.mxu0
    %v2711 = vadd.f32 %v2659, %v2710
    %v2712 = vpop.f32.mrf.mxu0
    %v2713 = vpop.f32.mrf.mxu0
    %v2714 = vadd.f32 %v2659, %v2713
    %v2715 = vpop.f32.mrf.mxu0
    %2716 = vdwg.mxu0
    %v2717 = vmax.f32 %v2711, 0.0
    %v2718 = vmax.f32 %v2714, 0.0
    %v2719 = vpack.c.bf16 %v2718, %v2717
    %s2720 = scalar_lea.vmem %s9, 32
    %v2721 = vld [vmem:[%s2720] sm:$0xf]
    %v2722 = vld [vmem:[%s2720 + $0x4] sm:$0xf]
    %v2723 = vld [vmem:[%s2720 + $0x8] sm:$0xf]
    %v2724 = vld [vmem:[%s2720 + $0xc] sm:$0xf]
    %v2725 = vld [vmem:[%s2720 + $0x10] sm:$0xf]
    %v2726 = vld [vmem:[%s2720 + $0x14] sm:$0xf]
    %v2727 = vld [vmem:[%s2720 + $0x18] sm:$0xf]
    %v2728 = vld [vmem:[%s2720 + $0x1c] sm:$0xf]
    %s2729 = scalar_lea.vmem [#allocation10], 1
    %v2730 = vld [vmem:[%s2729] sm:$0x1]
    %v2732 = vlaneseq
    %v2733 = vshrl.u32 %v2732, 7
    %v2734 = vsub.s32 0, %v2733
    %v2735 = vrot.slane %v2730, %v2734
    %v2745 = vunpack.c.l.b16 %v2721
    %v2746 = vunpack.c.l.b16 %v2722
    %v2747 = vunpack.c.l.b16 %v2723
    %v2748 = vunpack.c.l.b16 %v2724
    %v2749 = vunpack.c.l.b16 %v2725
    %v2750 = vunpack.c.l.b16 %v2726
    %v2751 = vunpack.c.l.b16 %v2727
    %v2752 = vunpack.c.l.b16 %v2728
    %v2753 = vpack.c.b16 %v2746, %v2745
    %v2754 = vpack.c.b16 %v2748, %v2747
    %v2755 = vpack.c.b16 %v2750, %v2749
    %v2756 = vpack.c.b16 %v2752, %v2751
    %v2762 = vsel %vm1444, %v2719, 0
    %2764 = vmatprep.subr.bf16.mxu0 0
    %2765 = vmatpush1.bf16.msra.mxu0 0
    %2766 = vmatprep.subr.bf16.mxu0 0
    %2767 = vmatpush1.bf16.msra.mxu0 0
    %2768 = vmatprep.subr.bf16.mxu0 0
    %2769 = vmatpush1.bf16.msra.mxu0 0
    %2770 = vmatprep.subr.bf16.mxu0 0
    %2771 = vmatpush1.bf16.msra.mxu0 0
    %2772 = vmatprep.subr.bf16.mxu0 0
    %2773 = vmatpush1.bf16.msra.mxu0 %v2756
    %2774 = vmatprep.subr.bf16.mxu0 0
    %2775 = vmatpush1.bf16.msra.mxu0 %v2755
    %2776 = vmatprep.subr.bf16.mxu0 0
    %2777 = vmatpush1.bf16.msra.mxu0 %v2754
    %2778 = vmatprep.subr.bf16.mxu0 0
    %2779 = vmatpush1.bf16.msra.mxu0 %v2753
    %2780 = vmatprep.subr.bf16.mxu0 0
    %2781 = vmatpush2.bf16.msra.mxu0 0
    %2782 = vmatprep.subr.bf16.mxu0 0
    %2783 = vmatpush2.bf16.msra.mxu0 0
    %2784 = vmatprep.subr.bf16.mxu0 0
    %2785 = vmatpush2.bf16.msra.mxu0 0
    %2786 = vmatprep.subr.bf16.mxu0 0
    %2787 = vmatpush2.bf16.msra.mxu0 0
    %2788 = vmatprep.subr.bf16.mxu0 0
    %2789 = vmatpush2.bf16.msra.mxu0 0
    %2790 = vmatprep.subr.bf16.mxu0 0
    %2791 = vmatpush2.bf16.msra.mxu0 0
    %2792 = vmatprep.subr.bf16.mxu0 0
    %2793 = vmatpush2.bf16.msra.mxu0 0
    %2794 = vmatprep.subr.bf16.mxu0 0
    %2795 = vmatpush2.bf16.msra.mxu0 0
    %2796 = vmatprep.mubr.bf16.mxu0 0
    %2797 = vmatmul.mubr.bf16.gmra.mxu0 %v2762
    %v2798 = vpop.f32.mrf.mxu0
    %v2799 = vadd.f32 %v2735, %v2798
    %v2800 = vpop.f32.mrf.mxu0
    %v2801 = vpop.f32.mrf.mxu0
    %v2802 = vadd.f32 %v2735, %v2801
    %v2803 = vpop.f32.mrf.mxu0
    %2804 = vdwg.mxu0
    %v2805 = vadd.f32 %v2645, %v2799
    %v2806 = vadd.f32 %v2646, %v2802
    %s2807 = scalar_lea.vmem %s13, 1
    %v2808 = vld [vmem:[%s2807] sm:$0x1]
    %s2809 = scalar_lea.vmem %s14, 1
    %v2810 = vld [vmem:[%s2809] sm:$0x1]
    %v2811 = vsel %vm247, %v2805, 0.0
    %2812 = vadd.xlane.f32.xlu0 %v2811
    %v2813 = vpop.xlane.xlu0 %2812
    %v2814 = vsel %vm247, %v2806, 0.0
    %2815 = vadd.xlane.f32.xlu0 %v2814
    %v2816 = vpop.xlane.xlu0 %2815
    %v2817 = vmul.f32 %v2813, %v1297
    %v2818 = vmul.f32 %v2816, %v1297
    %v2819 = vsub.f32 %v2805, %v2817
    %v2820 = vsub.f32 %v2806, %v2818
    %v2821 = vmul.f32 %v2819, %v2819
    %v2822 = vmul.f32 %v2820, %v2820
    %v2823 = vsel %vm247, %v2821, 0.0
    %2824 = vadd.xlane.f32.xlu0 %v2823
    %v2825 = vpop.xlane.xlu0 %2824
    %v2826 = vsel %vm247, %v2822, 0.0
    %2827 = vadd.xlane.f32.xlu0 %v2826
    %v2828 = vpop.xlane.xlu0 %2827
    %v2829 = vmul.f32 %v2825, %v1297
    %v2830 = vmul.f32 %v2828, %v1297
    %v2831 = vadd.f32 %v2829, 1e-05
    %v2832 = vadd.f32 %v2830, 1e-05
    %v2833 = vrsqrt.pop %v2831
    %v2834 = vrsqrt.pop %v2832
    %v2835 = vmul.f32 %v2819, %v2833
    %v2836 = vmul.f32 %v2820, %v2834
    %v2838 = vlaneseq
    %v2839 = vshrl.u32 %v2838, 7
    %v2840 = vsub.s32 0, %v2839
    %v2841 = vrot.slane %v2808, %v2840
    %v2843 = vmul.f32 %v2835, %v2841
    %v2844 = vmul.f32 %v2836, %v2841
    %v2846 = vlaneseq
    %v2847 = vshrl.u32 %v2846, 7
    %v2848 = vsub.s32 0, %v2847
    %v2849 = vrot.slane %v2810, %v2848
    %v2851 = vadd.f32 %v2843, %v2849
    %v2852 = vadd.f32 %v2844, %v2849
    %v2853 = vld [vmem:[%s15] sm:$0x1]
    %v2854 = vld [vmem:[%s16] sm:$0x1]
    %v2855 = vsel %vm247, %v2851, 0.0
    %2856 = vadd.xlane.f32.xlu0 %v2855
    %v2857 = vpop.xlane.xlu0 %2856
    %v2858 = vsel %vm247, %v2852, 0.0
    %2859 = vadd.xlane.f32.xlu0 %v2858
    %v2860 = vpop.xlane.xlu0 %2859
    %v2861 = vmul.f32 %v2857, %v1297
    %v2862 = vmul.f32 %v2860, %v1297
    %v2863 = vsub.f32 %v2851, %v2861
    %v2864 = vsub.f32 %v2852, %v2862
    %v2865 = vmul.f32 %v2863, %v2863
    %v2866 = vmul.f32 %v2864, %v2864
    %v2867 = vsel %vm247, %v2865, 0.0
    %2868 = vadd.xlane.f32.xlu0 %v2867
    %v2869 = vpop.xlane.xlu0 %2868
    %v2870 = vsel %vm247, %v2866, 0.0
    %2871 = vadd.xlane.f32.xlu0 %v2870
    %v2872 = vpop.xlane.xlu0 %2871
    %v2873 = vmul.f32 %v2869, %v1297
    %v2874 = vmul.f32 %v2872, %v1297
    %v2875 = vadd.f32 %v2873, 1e-05
    %v2876 = vadd.f32 %v2874, 1e-05
    %v2877 = vrsqrt.pop %v2875
    %v2878 = vrsqrt.pop %v2876
    %v2879 = vmul.f32 %v2863, %v2877
    %v2880 = vmul.f32 %v2864, %v2878
    %v2882 = vlaneseq
    %v2883 = vshrl.u32 %v2882, 7
    %v2884 = vsub.s32 0, %v2883
    %v2885 = vrot.slane %v2853, %v2884
    %v2887 = vmul.f32 %v2879, %v2885
    %v2888 = vmul.f32 %v2880, %v2885
    %v2890 = vlaneseq
    %v2891 = vshrl.u32 %v2890, 7
    %v2892 = vsub.s32 0, %v2891
    %v2893 = vrot.slane %v2854, %v2892
    %v2895 = vadd.f32 %v2887, %v2893
    %v2896 = vadd.f32 %v2888, %v2893
    %v2897 = vpack.c.bf16 %v2896, %v2895
    %v2898 = vld [vmem:[%s17] sm:$0xf]
    %v2899 = vld [vmem:[%s17 + $0x4] sm:$0xf]
    %v2900 = vld [vmem:[%s17 + $0x8] sm:$0xf]
    %v2901 = vld [vmem:[%s17 + $0xc] sm:$0xf]
    %v2902 = vld [vmem:[%s18] sm:$0x1]
    %v2904 = vlaneseq
    %v2905 = vshrl.u32 %v2904, 7
    %v2906 = vsub.s32 0, %v2905
    %v2907 = vrot.slane %v2902, %v2906
    %v2913 = vunpack.c.l.b16 %v2898
    %v2914 = vunpack.c.l.b16 %v2899
    %v2915 = vunpack.c.l.b16 %v2900
    %v2916 = vunpack.c.l.b16 %v2901
    %v2917 = vpack.c.b16 %v2914, %v2913
    %v2918 = vpack.c.b16 %v2916, %v2915
    %v2922 = vsel %vm247, %v2897, 0
    %2924 = vmatprep.subr.bf16.mxu0 0
    %2925 = vmatpush1.bf16.msra.mxu0 0
    %2926 = vmatprep.subr.bf16.mxu0 0
    %2927 = vmatpush1.bf16.msra.mxu0 0
    %2928 = vmatprep.subr.bf16.mxu0 0
    %2929 = vmatpush1.bf16.msra.mxu0 0
    %2930 = vmatprep.subr.bf16.mxu0 0
    %2931 = vmatpush1.bf16.msra.mxu0 0
    %2932 = vmatprep.subr.bf16.mxu0 0
    %2933 = vmatpush1.bf16.msra.mxu0 0
    %2934 = vmatprep.subr.bf16.mxu0 0
    %2935 = vmatpush1.bf16.msra.mxu0 0
    %2936 = vmatprep.subr.bf16.mxu0 0
    %2937 = vmatpush1.bf16.msra.mxu0 %v2918
    %2938 = vmatprep.subr.bf16.mxu0 0
    %2939 = vmatpush1.bf16.msra.mxu0 %v2917
    %2940 = vmatprep.subr.bf16.mxu0 0
    %2941 = vmatpush2.bf16.msra.mxu0 0
    %2942 = vmatprep.subr.bf16.mxu0 0
    %2943 = vmatpush2.bf16.msra.mxu0 0
    %2944 = vmatprep.subr.bf16.mxu0 0
    %2945 = vmatpush2.bf16.msra.mxu0 0
    %2946 = vmatprep.subr.bf16.mxu0 0
    %2947 = vmatpush2.bf16.msra.mxu0 0
    %2948 = vmatprep.subr.bf16.mxu0 0
    %2949 = vmatpush2.bf16.msra.mxu0 0
    %2950 = vmatprep.subr.bf16.mxu0 0
    %2951 = vmatpush2.bf16.msra.mxu0 0
    %2952 = vmatprep.subr.bf16.mxu0 0
    %2953 = vmatpush2.bf16.msra.mxu0 0
    %2954 = vmatprep.subr.bf16.mxu0 0
    %2955 = vmatpush2.bf16.msra.mxu0 0
    %2956 = vmatprep.mubr.bf16.mxu0 0
    %2957 = vmatmul.mubr.bf16.gmra.mxu0 %v2922
    %v2958 = vpop.f32.mrf.mxu0
    %v2959 = vadd.f32 %v2907, %v2958
    %v2960 = vpop.f32.mrf.mxu0
    %v2961 = vpop.f32.mrf.mxu0
    %v2962 = vadd.f32 %v2907, %v2961
    %v2963 = vpop.f32.mrf.mxu0
    %2964 = vdwg.mxu0
    %2965 = vst.msk [vmem:[%s19] sm:$0xff] %vm312, %v2959
    %2966 = vst.msk [vmem:[%s19 + $0x8] sm:$0xff] %vm312, %v2962
    // Predicated region
    $region106: #{tpu_custom_call.1} parent=1 // pred_check
      _
    $region107: #{tpu_custom_call.1} parent=1 // pred_check_branch
      %2968 = sbr.rel (0) target = $region109
    $region108: #{tpu_custom_call.1} parent=1 // pred_region
      _
    $region109: #{tpu_custom_call.1} parent=1 // pred_fallthru
      _
    // Predicated region
    $region110: #{tpu_custom_call.1} parent=1 // pred_check
      _
    $region111: #{tpu_custom_call.1} parent=1 // pred_check_branch
      %2970 = sbr.rel (0) target = $region113
    $region112: #{tpu_custom_call.1} parent=1 // pred_region
      _
    $region113: #{tpu_custom_call.1} parent=1 // pred_fallthru
      _
    %2971 = vsyncpa [#allocation3], 1
    %2972 = vsyncpa [#allocation5], 1
    %2973 = vsyncpa [#allocation8], 1
    %2974 = vsyncpa [#allocation11], 1

</llo_original>
